<compile_context>
chip_gen: v7x
topology: tpu7x:2x2x1
jax: 0.10.0
libtpu: 0.0.40
codegen_flags: <defaults>
</compile_context>

<pallas_src>
import jax
import jax.numpy as jnp
from jax.experimental import pallas as pl
from jax.experimental.pallas import tpu as pltpu


_NEG_INF = -1e30


def _round_up(x, m):
    return (x + m - 1) // m * m


# ----------------------------- Pallas kernel --------------------------------

def luong_decoder_kernel(emb_ref, h_ref, enc_ref,
                         w_ih_ref, b_ih_ref, w_hh_ref, b_hh_ref,
                         w_c1_ref, w_c2_ref, b_c_ref,
                         w_o_ref, b_o_ref,
                         out_ref, hid_ref,
                         c_sc):
    j = pl.program_id(0)          # vocab tile index -- single pass over vocab
    nv = pl.num_programs(0)
    TV = w_o_ref.shape[-1]
    Hp = hid_ref.shape[-1]
    cdt = w_o_ref.dtype           # MXU compute dtype (bf16)

    # ---- once, at the first vocab tile: GRU cell + attention + concat proj ----
    @pl.when(j == 0)
    def _():
        x = emb_ref[...]                                       # [Bp, Ep]  (cdt)
        h = h_ref[...]                                         # [Bp, Hp]  f32

        # GRU (PyTorch gate order r, z, n); per-gate blocks are Hp-aligned,
        # so these slices are clean 128-lane tiles.
        gi = jnp.dot(x, w_ih_ref[...],
                     preferred_element_type=jnp.float32) + b_ih_ref[...]
        gh = jnp.dot(h.astype(cdt), w_hh_ref[...],
                     preferred_element_type=jnp.float32) + b_hh_ref[...]
        r = jax.nn.sigmoid(gi[:, 0:Hp] + gh[:, 0:Hp])
        z = jax.nn.sigmoid(gi[:, Hp:2 * Hp] + gh[:, Hp:2 * Hp])
        n = jnp.tanh(gi[:, 2 * Hp:3 * Hp] + r * gh[:, 2 * Hp:3 * Hp])
        h_new = (1.0 - z) * n + z * h                          # [Bp, Hp] f32
        hid_ref[...] = h_new

        # Luong 'dot' attention -- both reductions land on the MXU.
        enc = enc_ref[...]                                     # [Bp, S, Hp] (cdt)
        h3 = h_new.astype(cdt)[:, None, :]                     # [Bp, 1, Hp]
        scores = jnp.einsum('bqh,bsh->bqs', h3, enc,
                            preferred_element_type=jnp.float32)       # [Bp,1,S]
        scores = scores - jnp.max(scores, axis=-1, keepdims=True)
        e = jnp.exp(scores)
        attn = e * pl.reciprocal(jnp.sum(e, axis=-1, keepdims=True), approx=True)
        ctx = jnp.einsum('bqs,bsh->bqh', attn.astype(cdt), enc,
                         preferred_element_type=jnp.float32)           # [Bp,1,Hp]
        ctx = ctx.reshape(h_new.shape)                         # [Bp, Hp]

        # concat -> Linear -> tanh, with the concat folded into two matmuls.
        pre = (jnp.dot(h_new.astype(cdt), w_c1_ref[...],
                       preferred_element_type=jnp.float32)
               + jnp.dot(ctx.astype(cdt), w_c2_ref[...],
                         preferred_element_type=jnp.float32)
               + b_c_ref[...])
        c_sc[...] = jnp.tanh(pre).astype(c_sc.dtype)

    # ---- every step: one vocab tile of logits, written into the VMEM-resident
    #      [Bp, Vp] output block (constant out index map -> single HBM writeback)
    logits = jnp.dot(c_sc[...], w_o_ref[...],
                     preferred_element_type=jnp.float32) + b_o_ref[...]  # [Bp, TV]
    col = pl.multiple_of(j * TV, TV)
    out_ref[:, pl.ds(col, TV)] = logits

    # ---- after the last tile: softmax over the whole resident logits block ----
    @pl.when(j == nv - 1)
    def _():
        logit_all = out_ref[...]                               # [Bp, Vp] in VMEM
        m = jnp.max(logit_all, axis=-1, keepdims=True)
        e = jnp.exp(logit_all - m)                             # padded cols -> 0
        out_ref[...] = e * pl.reciprocal(jnp.sum(e, axis=-1, keepdims=True),
                                         approx=True)


# ------------------------ one-time parameter prep ----------------------------

def prepare_decoder_params(params, *, compute_dtype=jnp.bfloat16, vocab_tile=2048):
    """One-time weight repacking, hoisted out of the per-token decode step:
    transpose, split per gate / per concat half, pad to (8,128)-friendly shapes,
    cast MXU operands to the compute dtype."""
    emb_table = params["embedding"]
    E = emb_table.shape[1]
    H = params["b_hh"].shape[0] // 3
    V = params["b_out"].shape[0]
    Ep = _round_up(E, 128)
    Hp = _round_up(H, 128)
    TV = min(vocab_tile, _round_up(V, 128))
    Vp = _round_up(V, TV)

    def pad2(x, rows, cols):
        return jnp.pad(x, ((0, rows - x.shape[0]), (0, cols - x.shape[1])))

    def pack_gates_w(w, in_dim_p):   # [3H, in] (r;z;n) -> [in_p, 3*Hp]
        return jnp.concatenate(
            [pad2(w[g * H:(g + 1) * H, :].T, in_dim_p, Hp) for g in range(3)],
            axis=1)

    def pack_gates_b(b):             # [3H] -> [1, 3*Hp]
        return jnp.concatenate(
            [jnp.pad(b[g * H:(g + 1) * H], (0, Hp - H)) for g in range(3)])[None, :]

    w_concat_t = params["w_concat"].T        # [2H, H]: rows 0..H-1 -> h_new half
    return {
        "H": H, "E": E, "V": V, "Hp": Hp, "Ep": Ep, "Vp": Vp, "TV": TV,
        "compute_dtype": compute_dtype,
        "embedding": pad2(emb_table, emb_table.shape[0], Ep).astype(compute_dtype),
        "w_ih_t": pack_gates_w(params["w_ih"], Ep).astype(compute_dtype),
        "b_ih": pack_gates_b(params["b_ih"]).astype(jnp.float32),
        "w_hh_t": pack_gates_w(params["w_hh"], Hp).astype(compute_dtype),
        "b_hh": pack_gates_b(params["b_hh"]).astype(jnp.float32),
        "w_c1": pad2(w_concat_t[:H, :], Hp, Hp).astype(compute_dtype),
        "w_c2": pad2(w_concat_t[H:, :], Hp, Hp).astype(compute_dtype),
        "b_c": jnp.pad(params["b_concat"], (0, Hp - H))[None, :].astype(jnp.float32),
        "w_o_t": pad2(params["w_out"].T, Hp, Vp).astype(compute_dtype),
        # padded vocab entries get -1e30 bias -> exp underflows to exactly 0
        # (kept f32 so padded lanes can never leak probability mass)
        "b_o": jnp.pad(params["b_out"], (0, Vp - V),
                       constant_values=_NEG_INF)[None, :].astype(jnp.float32),
    }


# ------------------------------- wrapper -------------------------------------

def luong_decoder_forward(input_step, last_hidden, encoder_outputs, prep):
    """input_step: [1, B] int32; last_hidden: [1, B, H]; encoder_outputs: [S, B, H].
    Returns (softmax probs [B, V], new hidden [1, B, H])."""
    cdt = prep["compute_dtype"]
    H, V = prep["H"], prep["V"]
    Hp, Ep, Vp, TV = prep["Hp"], prep["Ep"], prep["Vp"], prep["TV"]

    B = input_step.shape[1]
    S = encoder_outputs.shape[0]
    # Pad batch to 16 sublanes so bf16 operands fill packed (16,128) vregs.
    Bp = max(16, _round_up(B, 16))
    nv = Vp // TV

    # Glue: embedding gather + (identity, eval-mode) dropout + pad to TPU tiles.
    emb = prep["embedding"][input_step[0]]                         # [B, Ep] (cdt)
    emb = jnp.pad(emb, ((0, Bp - B), (0, 0)))
    h0 = jnp.pad(last_hidden[0].astype(jnp.float32),
                 ((0, Bp - B), (0, Hp - H)))                        # [Bp, Hp] f32
    # Batch-major encoder outputs; in a real decode loop do this once per sequence.
    enc = jnp.transpose(encoder_outputs, (1, 0, 2))
    enc = jnp.pad(enc, ((0, Bp - B), (0, 0), (0, Hp - H))).astype(cdt)

    const2 = lambda j: (0, 0)
    const3 = lambda j: (0, 0, 0)
    vtile = lambda j: (0, j)

    out_p, hid_p = pl.pallas_call(
        luong_decoder_kernel,
        out_shape=(jax.ShapeDtypeStruct((Bp, Vp), jnp.float32),
                   jax.ShapeDtypeStruct((Bp, Hp), jnp.float32)),
        grid=(nv,),   # single pass over vocab tiles; w_out streamed once
        in_specs=[
            pl.BlockSpec((Bp, Ep), const2),          # embedded input step
            pl.BlockSpec((Bp, Hp), const2),          # previous hidden (f32)
            pl.BlockSpec((Bp, S, Hp), const3),       # encoder outputs [B,S,H]
            pl.BlockSpec((Ep, 3 * Hp), const2),      # GRU W_ih (per-gate, padded)
            pl.BlockSpec((1, 3 * Hp), const2),       # GRU b_ih
            pl.BlockSpec((Hp, 3 * Hp), const2),      # GRU W_hh (per-gate, padded)
            pl.BlockSpec((1, 3 * Hp), const2),       # GRU b_hh
            pl.BlockSpec((Hp, Hp), const2),          # concat W, h_new half
            pl.BlockSpec((Hp, Hp), const2),          # concat W, context half
            pl.BlockSpec((1, Hp), const2),           # concat bias
            pl.BlockSpec((Hp, TV), vtile),           # out-proj weight tile (streamed)
            pl.BlockSpec((1, TV), vtile),            # out-proj bias tile
        ],
        out_specs=(
            # Constant index map -> the [Bp, Vp] output block stays VMEM-resident
            # across all vocab tiles and is written back to HBM exactly once.
            pl.BlockSpec((Bp, Vp), const2),          # softmax probs (full, resident)
            pl.BlockSpec((Bp, Hp), const2)),         # new hidden
        scratch_shapes=[
            pltpu.VMEM((Bp, Hp), cdt),               # tanh(concat) activation
        ],
        compiler_params=pltpu.CompilerParams(
            # The single vocab axis carries state (resident output + c_sc), so it
            # is sequential; on v7x the vocab tiles could be split across the two
            # TensorCores (core_map + per-core partial logits) -- see TODO above.
            dimension_semantics=("arbitrary",)),
    )(emb, h0, enc,
      prep["w_ih_t"], prep["b_ih"], prep["w_hh_t"], prep["b_hh"],
      prep["w_c1"], prep["w_c2"], prep["b_c"],
      prep["w_o_t"], prep["b_o"])

    return out_p[:B, :V], hid_p[None, :B, :H]


# --------------------------- pure-JAX reference -------------------------------

def reference_forward(input_step, last_hidden, encoder_outputs, params):
    emb = params["embedding"][input_step[0]]
    h = last_hidden[0]
    H = h.shape[-1]
    gi = emb @ params["w_ih"].T + params["b_ih"]
    gh = h @ params["w_hh"].T + params["b_hh"]
    r = jax.nn.sigmoid(gi[:, :H] + gh[:, :H])
    z = jax.nn.sigmoid(gi[:, H:2 * H] + gh[:, H:2 * H])
    n = jnp.tanh(gi[:, 2 * H:] + r * gh[:, 2 * H:])
    h_new = (1.0 - z) * n + z * h
    scores = jnp.sum(h_new[None, :, :] * encoder_outputs, axis=-1).T   # [B, S]
    attn = jax.nn.softmax(scores, axis=1)
    context = jnp.einsum("bs,sbh->bh", attn, encoder_outputs)
    concat_in = jnp.concatenate([h_new, context], axis=1)
    c = jnp.tanh(concat_in @ params["w_concat"].T + params["b_concat"])
    logits = c @ params["w_out"].T + params["b_out"]
    return jax.nn.softmax(logits, axis=1), h_new[None]


# --------------------------------- main ---------------------------------------

def init_params(key, vocab_size, emb_size, hidden_size):
    ks = jax.random.split(key, 9)
    s = 0.1
    return {
        "embedding": s * jax.random.normal(ks[0], (vocab_size, emb_size), jnp.float32),
        "w_ih": s * jax.random.normal(ks[1], (3 * hidden_size, emb_size), jnp.float32),
        "b_ih": s * jax.random.normal(ks[2], (3 * hidden_size,), jnp.float32),
        "w_hh": s * jax.random.normal(ks[3], (3 * hidden_size, hidden_size), jnp.float32),
        "b_hh": s * jax.random.normal(ks[4], (3 * hidden_size,), jnp.float32),
        "w_concat": s * jax.random.normal(ks[5], (hidden_size, 2 * hidden_size), jnp.float32),
        "b_concat": s * jax.random.normal(ks[6], (hidden_size,), jnp.float32),
        "w_out": s * jax.random.normal(ks[7], (vocab_size, hidden_size), jnp.float32),
        "b_out": s * jax.random.normal(ks[8], (vocab_size,), jnp.float32),
    }


if __name__ == "__main__":
    B, E, H, V, S = 2, 32, 32, 64, 8   # batch, embedding, hidden, vocab, encoder seq len

    key = jax.random.PRNGKey(0)
    k_par, k_in, k_h, k_enc = jax.random.split(key, 4)

    params = init_params(k_par, V, E, H)
    input_step = jax.random.randint(k_in, (1, B), 0, V, dtype=jnp.int32)      # [1, B]
    last_hidden = jax.random.normal(k_h, (1, B, H), jnp.float32)              # [1, B, H]
    encoder_outputs = jax.random.normal(k_enc, (S, B, H), jnp.float32)        # [S, B, H]

    prep = prepare_decoder_params(params)   # one-time weight repacking (hoisted)

    out, hidden = luong_decoder_forward(input_step, last_hidden, encoder_outputs, prep)
    jax.block_until_ready((out, hidden))

    ref_out, ref_hidden = reference_forward(input_step, last_hidden, encoder_outputs, params)

    assert out.shape == (B, V) and hidden.shape == (1, B, H)
    # bf16 MXU operands (f32 accumulation) -> compare at bf16-level tolerance.
    assert jnp.allclose(out, ref_out, rtol=3e-2, atol=3e-3), \
        float(jnp.max(jnp.abs(out - ref_out)))
    assert jnp.allclose(hidden, ref_hidden, rtol=3e-2, atol=1e-2), \
        float(jnp.max(jnp.abs(hidden - ref_hidden)))

    print("KERNEL_OK")
</pallas_src>

<mosaic_0001>
module attributes {stable_mosaic.version = 11 : i64} {
  func.func @luong_decoder_kernel(%arg0: i32, %arg1: memref<16x128xbf16, #tpu.memory_space<vmem>>, %arg2: memref<16x128xf32, #tpu.memory_space<vmem>>, %arg3: memref<16x8x128xbf16, #tpu.memory_space<vmem>>, %arg4: memref<128x384xbf16, #tpu.memory_space<vmem>>, %arg5: memref<1x384xf32, #tpu.memory_space<vmem>>, %arg6: memref<128x384xbf16, #tpu.memory_space<vmem>>, %arg7: memref<1x384xf32, #tpu.memory_space<vmem>>, %arg8: memref<128x128xbf16, #tpu.memory_space<vmem>>, %arg9: memref<128x128xbf16, #tpu.memory_space<vmem>>, %arg10: memref<1x128xf32, #tpu.memory_space<vmem>>, %arg11: memref<128x128xbf16, #tpu.memory_space<vmem>>, %arg12: memref<1x128xf32, #tpu.memory_space<vmem>>, %arg13: memref<16x128xf32, #tpu.memory_space<vmem>>, %arg14: memref<16x128xf32, #tpu.memory_space<vmem>>, %arg15: memref<16x128xbf16, #tpu.memory_space<vmem>>) attributes {dimension_semantics = [#tpu.dimension_semantics<arbitrary>], iteration_bounds = array<i64: 1>, scalar_prefetch = 0 : i64, scratch_operands = 1 : i64, tpu.core_type = #tpu.core_type<tc>, window_params = [{pipeline_mode = #tpu.pipeline_mode<synchronous>, transform_indices = @transform_0, window_bounds = array<i64: 16, 128>}, {pipeline_mode = #tpu.pipeline_mode<synchronous>, transform_indices = @transform_1, window_bounds = array<i64: 16, 128>}, {pipeline_mode = #tpu.pipeline_mode<synchronous>, transform_indices = @transform_2, window_bounds = array<i64: 16, 8, 128>}, {pipeline_mode = #tpu.pipeline_mode<synchronous>, transform_indices = @transform_3, window_bounds = array<i64: 128, 384>}, {pipeline_mode = #tpu.pipeline_mode<synchronous>, transform_indices = @transform_4, window_bounds = array<i64: 1, 384>}, {pipeline_mode = #tpu.pipeline_mode<synchronous>, transform_indices = @transform_5, window_bounds = array<i64: 128, 384>}, {pipeline_mode = #tpu.pipeline_mode<synchronous>, transform_indices = @transform_6, window_bounds = array<i64: 1, 384>}, {pipeline_mode = #tpu.pipeline_mode<synchronous>, transform_indices = @transform_7, window_bounds = array<i64: 128, 128>}, {pipeline_mode = #tpu.pipeline_mode<synchronous>, transform_indices = @transform_8, window_bounds = array<i64: 128, 128>}, {pipeline_mode = #tpu.pipeline_mode<synchronous>, transform_indices = @transform_9, window_bounds = array<i64: 1, 128>}, {transform_indices = @transform_10, window_bounds = array<i64: 128, 128>}, {transform_indices = @transform_11, window_bounds = array<i64: 1, 128>}, {pipeline_mode = #tpu.pipeline_mode<synchronous>, transform_indices = @transform_12, window_bounds = array<i64: 16, 128>}, {pipeline_mode = #tpu.pipeline_mode<synchronous>, transform_indices = @transform_13, window_bounds = array<i64: 16, 128>}]} {
    %c0_i32 = arith.constant 0 : i32
    %0 = arith.cmpi eq, %arg0, %c0_i32 : i32
    %1 = arith.extui %0 : i1 to i32
    %c0_i32_0 = arith.constant 0 : i32
    %2 = arith.cmpi ne, %1, %c0_i32_0 : i32
    scf.if %2 {
      %c0_9 = arith.constant 0 : index
      %c0_10 = arith.constant 0 : index
      %16 = vector.load %arg1[%c0_9, %c0_10] : memref<16x128xbf16, #tpu.memory_space<vmem>>, vector<16x128xbf16>
      %c0_11 = arith.constant 0 : index
      %c0_12 = arith.constant 0 : index
      %17 = vector.load %arg2[%c0_11, %c0_12] : memref<16x128xf32, #tpu.memory_space<vmem>>, vector<16x128xf32>
      %c0_13 = arith.constant 0 : index
      %c0_14 = arith.constant 0 : index
      %18 = vector.load %arg4[%c0_13, %c0_14] : memref<128x384xbf16, #tpu.memory_space<vmem>>, vector<128x384xbf16>
      %cst_15 = arith.constant dense<0.000000e+00> : vector<16x384xf32>
      %19 = tpu.matmul %16, %18, %cst_15 {dimension_numbers = #tpu.dot_dimension_numbers<[1], [0], [0], [1], [0, 0, 1, 1], [], []>} : vector<16x128xbf16>, vector<128x384xbf16>, vector<16x384xf32> -> vector<16x384xf32>
      %c0_16 = arith.constant 0 : index
      %c0_17 = arith.constant 0 : index
      %20 = vector.load %arg5[%c0_16, %c0_17] : memref<1x384xf32, #tpu.memory_space<vmem>>, vector<1x384xf32>
      %21 = vector.broadcast %20 : vector<1x384xf32> to vector<16x384xf32>
      %22 = arith.addf %19, %21 : vector<16x384xf32>
      %23 = arith.truncf %17 : vector<16x128xf32> to vector<16x128xbf16>
      %c0_18 = arith.constant 0 : index
      %c0_19 = arith.constant 0 : index
      %24 = vector.load %arg6[%c0_18, %c0_19] : memref<128x384xbf16, #tpu.memory_space<vmem>>, vector<128x384xbf16>
      %cst_20 = arith.constant dense<0.000000e+00> : vector<16x384xf32>
      %25 = tpu.matmul %23, %24, %cst_20 {dimension_numbers = #tpu.dot_dimension_numbers<[1], [0], [0], [1], [0, 0, 1, 1], [], []>} : vector<16x128xbf16>, vector<128x384xbf16>, vector<16x384xf32> -> vector<16x384xf32>
      %c0_21 = arith.constant 0 : index
      %c0_22 = arith.constant 0 : index
      %26 = vector.load %arg7[%c0_21, %c0_22] : memref<1x384xf32, #tpu.memory_space<vmem>>, vector<1x384xf32>
      %27 = vector.broadcast %26 : vector<1x384xf32> to vector<16x384xf32>
      %28 = arith.addf %25, %27 : vector<16x384xf32>
      %29 = vector.extract_strided_slice %22 {offsets = [0, 0], sizes = [16, 128], strides = [1, 1]} : vector<16x384xf32> to vector<16x128xf32>
      %30 = vector.extract_strided_slice %28 {offsets = [0, 0], sizes = [16, 128], strides = [1, 1]} : vector<16x384xf32> to vector<16x128xf32>
      %31 = arith.addf %29, %30 : vector<16x128xf32>
      %32 = arith.negf %31 : vector<16x128xf32>
      %33 = math.exp %32 : vector<16x128xf32>
      %cst_23 = arith.constant 1.000000e+00 : f32
      %34 = vector.broadcast %cst_23 : f32 to vector<16x128xf32>
      %35 = arith.addf %34, %33 : vector<16x128xf32>
      %36 = arith.divf %34, %35 : vector<16x128xf32>
      %37 = vector.extract_strided_slice %22 {offsets = [0, 128], sizes = [16, 128], strides = [1, 1]} : vector<16x384xf32> to vector<16x128xf32>
      %38 = vector.extract_strided_slice %28 {offsets = [0, 128], sizes = [16, 128], strides = [1, 1]} : vector<16x384xf32> to vector<16x128xf32>
      %39 = arith.addf %37, %38 : vector<16x128xf32>
      %40 = arith.negf %39 : vector<16x128xf32>
      %41 = math.exp %40 : vector<16x128xf32>
      %cst_24 = arith.constant 1.000000e+00 : f32
      %42 = vector.broadcast %cst_24 : f32 to vector<16x128xf32>
      %43 = arith.addf %42, %41 : vector<16x128xf32>
      %44 = arith.divf %42, %43 : vector<16x128xf32>
      %45 = vector.extract_strided_slice %22 {offsets = [0, 256], sizes = [16, 128], strides = [1, 1]} : vector<16x384xf32> to vector<16x128xf32>
      %46 = vector.extract_strided_slice %28 {offsets = [0, 256], sizes = [16, 128], strides = [1, 1]} : vector<16x384xf32> to vector<16x128xf32>
      %47 = arith.mulf %36, %46 : vector<16x128xf32>
      %48 = arith.addf %45, %47 : vector<16x128xf32>
      %49 = math.tanh %48 : vector<16x128xf32>
      %cst_25 = arith.constant 1.000000e+00 : f32
      %50 = vector.broadcast %cst_25 : f32 to vector<16x128xf32>
      %51 = arith.subf %50, %44 : vector<16x128xf32>
      %52 = arith.mulf %51, %49 : vector<16x128xf32>
      %53 = arith.mulf %44, %17 : vector<16x128xf32>
      %54 = arith.addf %52, %53 : vector<16x128xf32>
      %c0_26 = arith.constant 0 : index
      %c0_27 = arith.constant 0 : index
      %55 = vector.load %arg14[%c0_26, %c0_27] : memref<16x128xf32, #tpu.memory_space<vmem>>, vector<16x128xf32>
      tpu.vector_store %arg14[%c0_26, %c0_27], %54 {strides = array<i32>} : memref<16x128xf32, #tpu.memory_space<vmem>>, vector<16x128xf32>,
      %c0_28 = arith.constant 0 : index
      %c0_29 = arith.constant 0 : index
      %c0_30 = arith.constant 0 : index
      %56 = vector.load %arg3[%c0_28, %c0_29, %c0_30] : memref<16x8x128xbf16, #tpu.memory_space<vmem>>, vector<16x8x128xbf16>
      %57 = arith.truncf %54 : vector<16x128xf32> to vector<16x128xbf16>
      %58 = vector.shape_cast %57 : vector<16x128xbf16> to vector<16x1x128xbf16>
      "tpu.trace_start"() <{level = 10 : i32, message = "bqh,bsh->bqs"}> : () -> ()
      %cst_31 = arith.constant dense<0.000000e+00> : vector<16x1x8xf32>
      %59 = tpu.matmul %58, %56, %cst_31 {dimension_numbers = #tpu.dot_dimension_numbers<[2], [2], [1], [1], [0, 0, 0, 1, 1, 1], [0], [0]>} : vector<16x1x128xbf16>, vector<16x8x128xbf16>, vector<16x1x8xf32> -> vector<16x1x8xf32>
      "tpu.trace_stop"() : () -> ()
      %cst_32 = arith.constant dense<0xFF800000> : vector<16x1xf32>
      %60 = vector.multi_reduction <maximumf>, %59, %cst_32 [2] : vector<16x1x8xf32> to vector<16x1xf32>
      %61 = vector.shape_cast %60 : vector<16x1xf32> to vector<16x1x1xf32>
      %62 = vector.broadcast %61 : vector<16x1x1xf32> to vector<16x1x8xf32>
      %63 = arith.subf %59, %62 : vector<16x1x8xf32>
      %64 = math.exp %63 : vector<16x1x8xf32>
      %cst_33 = arith.constant dense<0.000000e+00> : vector<16x1xf32>
      %65 = vector.multi_reduction <add>, %64, %cst_33 [2] : vector<16x1x8xf32> to vector<16x1xf32>
      %66 = vector.shape_cast %65 : vector<16x1xf32> to vector<16x1x1xf32>
      %67 = tpu.reciprocal %66 {approx = true} : vector<16x1x1xf32> -> vector<16x1x1xf32>
      %68 = vector.broadcast %67 : vector<16x1x1xf32> to vector<16x1x8xf32>
      %69 = arith.mulf %64, %68 : vector<16x1x8xf32>
      %70 = arith.truncf %69 : vector<16x1x8xf32> to vector<16x1x8xbf16>
      "tpu.trace_start"() <{level = 10 : i32, message = "bqs,bsh->bqh"}> : () -> ()
      %cst_34 = arith.constant dense<0.000000e+00> : vector<16x1x128xf32>
      %71 = tpu.matmul %70, %56, %cst_34 {dimension_numbers = #tpu.dot_dimension_numbers<[2], [1], [1], [2], [0, 0, 0, 1, 1, 2], [0], [0]>} : vector<16x1x8xbf16>, vector<16x8x128xbf16>, vector<16x1x128xf32> -> vector<16x1x128xf32>
      "tpu.trace_stop"() : () -> ()
      %72 = vector.shape_cast %71 : vector<16x1x128xf32> to vector<16x128xf32>
      %73 = arith.truncf %54 : vector<16x128xf32> to vector<16x128xbf16>
      %c0_35 = arith.constant 0 : index
      %c0_36 = arith.constant 0 : index
      %74 = vector.load %arg8[%c0_35, %c0_36] : memref<128x128xbf16, #tpu.memory_space<vmem>>, vector<128x128xbf16>
      %cst_37 = arith.constant dense<0.000000e+00> : vector<16x128xf32>
      %75 = tpu.matmul %73, %74, %cst_37 {dimension_numbers = #tpu.dot_dimension_numbers<[1], [0], [0], [1], [0, 0, 1, 1], [], []>} : vector<16x128xbf16>, vector<128x128xbf16>, vector<16x128xf32> -> vector<16x128xf32>
      %76 = arith.truncf %72 : vector<16x128xf32> to vector<16x128xbf16>
      %c0_38 = arith.constant 0 : index
      %c0_39 = arith.constant 0 : index
      %77 = vector.load %arg9[%c0_38, %c0_39] : memref<128x128xbf16, #tpu.memory_space<vmem>>, vector<128x128xbf16>
      %cst_40 = arith.constant dense<0.000000e+00> : vector<16x128xf32>
      %78 = tpu.matmul %76, %77, %cst_40 {dimension_numbers = #tpu.dot_dimension_numbers<[1], [0], [0], [1], [0, 0, 1, 1], [], []>} : vector<16x128xbf16>, vector<128x128xbf16>, vector<16x128xf32> -> vector<16x128xf32>
      %79 = arith.addf %75, %78 : vector<16x128xf32>
      %c0_41 = arith.constant 0 : index
      %c0_42 = arith.constant 0 : index
      %80 = vector.load %arg10[%c0_41, %c0_42] : memref<1x128xf32, #tpu.memory_space<vmem>>, vector<1x128xf32>
      %81 = vector.broadcast %80 : vector<1x128xf32> to vector<16x128xf32>
      %82 = arith.addf %79, %81 : vector<16x128xf32>
      %83 = math.tanh %82 : vector<16x128xf32>
      %84 = arith.truncf %83 : vector<16x128xf32> to vector<16x128xbf16>
      %c0_43 = arith.constant 0 : index
      %c0_44 = arith.constant 0 : index
      %85 = vector.load %arg15[%c0_43, %c0_44] : memref<16x128xbf16, #tpu.memory_space<vmem>>, vector<16x128xbf16>
      tpu.vector_store %arg15[%c0_43, %c0_44], %84 {strides = array<i32>} : memref<16x128xbf16, #tpu.memory_space<vmem>>, vector<16x128xbf16>,
    } else {
    }
    %c0 = arith.constant 0 : index
    %c0_1 = arith.constant 0 : index
    %3 = vector.load %arg15[%c0, %c0_1] : memref<16x128xbf16, #tpu.memory_space<vmem>>, vector<16x128xbf16>
    %c0_2 = arith.constant 0 : index
    %c0_3 = arith.constant 0 : index
    %4 = vector.load %arg11[%c0_2, %c0_3] : memref<128x128xbf16, #tpu.memory_space<vmem>>, vector<128x128xbf16>
    %cst = arith.constant dense<0.000000e+00> : vector<16x128xf32>
    %5 = tpu.matmul %3, %4, %cst {dimension_numbers = #tpu.dot_dimension_numbers<[1], [0], [0], [1], [0, 0, 1, 1], [], []>} : vector<16x128xbf16>, vector<128x128xbf16>, vector<16x128xf32> -> vector<16x128xf32>
    %c0_4 = arith.constant 0 : index
    %c0_5 = arith.constant 0 : index
    %6 = vector.load %arg12[%c0_4, %c0_5] : memref<1x128xf32, #tpu.memory_space<vmem>>, vector<1x128xf32>
    %7 = vector.broadcast %6 : vector<1x128xf32> to vector<16x128xf32>
    %8 = arith.addf %5, %7 : vector<16x128xf32>
    %c128_i32 = arith.constant 128 : i32
    %9 = arith.muli %arg0, %c128_i32 : i32
    %10 = tpu.assume_multiple %9, 128 : i32
    %c0_6 = arith.constant 0 : index
    %11 = arith.index_cast %10 : i32 to index
    %12 = vector.load %arg13[%c0_6, %11] : memref<16x128xf32, #tpu.memory_space<vmem>>, vector<16x128xf32>
    tpu.vector_store %arg13[%c0_6, %11], %8 {strides = array<i32>} : memref<16x128xf32, #tpu.memory_space<vmem>>, vector<16x128xf32>,
    %c0_i32_7 = arith.constant 0 : i32
    %13 = arith.cmpi eq, %arg0, %c0_i32_7 : i32
    %14 = arith.extui %13 : i1 to i32
    %c0_i32_8 = arith.constant 0 : i32
    %15 = arith.cmpi ne, %14, %c0_i32_8 : i32
    scf.if %15 {
      %c0_9 = arith.constant 0 : index
      %c0_10 = arith.constant 0 : index
      %16 = vector.load %arg13[%c0_9, %c0_10] : memref<16x128xf32, #tpu.memory_space<vmem>>, vector<16x128xf32>
      %cst_11 = arith.constant dense<0xFF800000> : vector<16xf32>
      %17 = vector.multi_reduction <maximumf>, %16, %cst_11 [1] : vector<16x128xf32> to vector<16xf32>
      %18 = vector.shape_cast %17 : vector<16xf32> to vector<16x1xf32>
      %19 = vector.broadcast %18 : vector<16x1xf32> to vector<16x128xf32>
      %20 = arith.subf %16, %19 : vector<16x128xf32>
      %21 = math.exp %20 : vector<16x128xf32>
      %cst_12 = arith.constant dense<0.000000e+00> : vector<16xf32>
      %22 = vector.multi_reduction <add>, %21, %cst_12 [1] : vector<16x128xf32> to vector<16xf32>
      %23 = vector.shape_cast %22 : vector<16xf32> to vector<16x1xf32>
      %24 = tpu.reciprocal %23 {approx = true} : vector<16x1xf32> -> vector<16x1xf32>
      %25 = vector.broadcast %24 : vector<16x1xf32> to vector<16x128xf32>
      %26 = arith.mulf %21, %25 : vector<16x128xf32>
      %c0_13 = arith.constant 0 : index
      %c0_14 = arith.constant 0 : index
      %27 = vector.load %arg13[%c0_13, %c0_14] : memref<16x128xf32, #tpu.memory_space<vmem>>, vector<16x128xf32>
      tpu.vector_store %arg13[%c0_13, %c0_14], %26 {strides = array<i32>} : memref<16x128xf32, #tpu.memory_space<vmem>>, vector<16x128xf32>,
    } else {
    }
    return
  }
  func.func @transform_0(%arg0: i32) -> (i32, i32) {
    %c0_i32 = arith.constant 0 : i32
    %c0_i32_0 = arith.constant 0 : i32
    %c0_i32_1 = arith.constant 0 : i32
    return %c0_i32, %c0_i32_0 : i32, i32
  }
  func.func @transform_1(%arg0: i32) -> (i32, i32) {
    %c0_i32 = arith.constant 0 : i32
    %c0_i32_0 = arith.constant 0 : i32
    %c0_i32_1 = arith.constant 0 : i32
    return %c0_i32, %c0_i32_0 : i32, i32
  }
  func.func @transform_2(%arg0: i32) -> (i32, i32, i32) {
    %c0_i32 = arith.constant 0 : i32
    %c0_i32_0 = arith.constant 0 : i32
    %c0_i32_1 = arith.constant 0 : i32
    %c0_i32_2 = arith.constant 0 : i32
    return %c0_i32, %c0_i32_0, %c0_i32_1 : i32, i32, i32
  }
  func.func @transform_3(%arg0: i32) -> (i32, i32) {
    %c0_i32 = arith.constant 0 : i32
    %c0_i32_0 = arith.constant 0 : i32
    %c0_i32_1 = arith.constant 0 : i32
    return %c0_i32, %c0_i32_0 : i32, i32
  }
  func.func @transform_4(%arg0: i32) -> (i32, i32) {
    %c0_i32 = arith.constant 0 : i32
    %c0_i32_0 = arith.constant 0 : i32
    %c0_i32_1 = arith.constant 0 : i32
    return %c0_i32, %c0_i32_0 : i32, i32
  }
  func.func @transform_5(%arg0: i32) -> (i32, i32) {
    %c0_i32 = arith.constant 0 : i32
    %c0_i32_0 = arith.constant 0 : i32
    %c0_i32_1 = arith.constant 0 : i32
    return %c0_i32, %c0_i32_0 : i32, i32
  }
  func.func @transform_6(%arg0: i32) -> (i32, i32) {
    %c0_i32 = arith.constant 0 : i32
    %c0_i32_0 = arith.constant 0 : i32
    %c0_i32_1 = arith.constant 0 : i32
    return %c0_i32, %c0_i32_0 : i32, i32
  }
  func.func @transform_7(%arg0: i32) -> (i32, i32) {
    %c0_i32 = arith.constant 0 : i32
    %c0_i32_0 = arith.constant 0 : i32
    %c0_i32_1 = arith.constant 0 : i32
    return %c0_i32, %c0_i32_0 : i32, i32
  }
  func.func @transform_8(%arg0: i32) -> (i32, i32) {
    %c0_i32 = arith.constant 0 : i32
    %c0_i32_0 = arith.constant 0 : i32
    %c0_i32_1 = arith.constant 0 : i32
    return %c0_i32, %c0_i32_0 : i32, i32
  }
  func.func @transform_9(%arg0: i32) -> (i32, i32) {
    %c0_i32 = arith.constant 0 : i32
    %c0_i32_0 = arith.constant 0 : i32
    %c0_i32_1 = arith.constant 0 : i32
    return %c0_i32, %c0_i32_0 : i32, i32
  }
  func.func @transform_10(%arg0: i32) -> (i32, i32) {
    %c0_i32 = arith.constant 0 : i32
    %c0_i32_0 = arith.constant 0 : i32
    return %c0_i32, %arg0 : i32, i32
  }
  func.func @transform_11(%arg0: i32) -> (i32, i32) {
    %c0_i32 = arith.constant 0 : i32
    %c0_i32_0 = arith.constant 0 : i32
    return %c0_i32, %arg0 : i32, i32
  }
  func.func @transform_12(%arg0: i32) -> (i32, i32) {
    %c0_i32 = arith.constant 0 : i32
    %c0_i32_0 = arith.constant 0 : i32
    %c0_i32_1 = arith.constant 0 : i32
    return %c0_i32, %c0_i32_0 : i32, i32
  }
  func.func @transform_13(%arg0: i32) -> (i32, i32) {
    %c0_i32 = arith.constant 0 : i32
    %c0_i32_0 = arith.constant 0 : i32
    %c0_i32_1 = arith.constant 0 : i32
    return %c0_i32, %c0_i32_0 : i32, i32
  }
}

</mosaic_0001>

<llo_original>
// kernel: tpu_custom_call.1
$region0: #{tpu_custom_call.1}
  #allocation0 [shape = 'u32[]', space=smem, size = 0x4, offset = 0x4, fixed_abs, tag = 'smem constant byte address 0x4 - core index']
  #allocation1 [shape = 'u32[144,128]{1,0:T(1,128)}', space=vmem, size = 0x12000, scoped, tag = 'internal scratch']
  #allocation2 [shape = 'bf16[16,128]{1,0:T(16,128)(2,1)}', space=vmem, size = 0x1000, scoped, tag = 'scratch operand']
  %s0 = inlined_call_operand.hbm [shape: bf16[16,128], index: 0, kind: input, shape index: {}]
  %s1 = inlined_call_operand.hbm [shape: f32[16,128], index: 1, kind: input, shape index: {}]
  %s2 = inlined_call_operand.hbm [shape: bf16[16,8,128], index: 2, kind: input, shape index: {}]
  %s3 = inlined_call_operand.hbm [shape: bf16[128,384], index: 3, kind: input, shape index: {}]
  %s4 = inlined_call_operand.vmem [shape: f32[1,384], index: 4, kind: input, shape index: {}]
  %s5 = inlined_call_operand.hbm [shape: bf16[128,384], index: 5, kind: input, shape index: {}]
  %s6 = inlined_call_operand.vmem [shape: f32[1,384], index: 6, kind: input, shape index: {}]
  %s7 = inlined_call_operand.hbm [shape: bf16[128,128], index: 7, kind: input, shape index: {}]
  %s8 = inlined_call_operand.hbm [shape: bf16[128,128], index: 8, kind: input, shape index: {}]
  %s9 = inlined_call_operand.vmem [shape: f32[1,128], index: 9, kind: input, shape index: {}]
  %s10 = inlined_call_operand.hbm [shape: bf16[128,128], index: 10, kind: input, shape index: {}]
  %s11 = inlined_call_operand.vmem [shape: f32[1,128], index: 11, kind: input, shape index: {}]
  %s12 = inlined_call_operand.hbm [shape: f32[16,128], index: 12, kind: output, shape index: {0}]
  %s13 = inlined_call_operand.hbm [shape: f32[16,128], index: 13, kind: output, shape index: {1}]
  %14 = xla_tuple %s12, %s13
  %s15 = sld [smem:[#allocation0]]
  $region106: #{tpu_custom_call.1} parent=0
    _
  %s17 = ssub.s32 1, %s15
  %s18 = scalar_select 0, %s17, %s15
  $region1: #{tpu_custom_call.1} parent=0
    #allocation3 [shape = 'u8[4096]{0}', space=vmem, size = 0x1000, scoped, tag = 'input window, operand 0, single buffered']
    #allocation4 [shape = 's32[1]{0}', space=sflag, size = 0x4, scoped, tag = 'scoped memory for tpu_custom_call.1']
    #allocation5 [shape = 's32[1]{0}', space=sflag, size = 0x4, scoped, tag = 'scoped memory for tpu_custom_call.1']
    #allocation6 [shape = 'u8[8192]{0}', space=vmem, size = 0x2000, scoped, tag = 'input window, operand 1, single buffered']
    #allocation7 [shape = 's32[1]{0}', space=sflag, size = 0x4, scoped, tag = 'scoped memory for tpu_custom_call.1']
    #allocation8 [shape = 'u8[32768]{0}', space=vmem, size = 0x8000, scoped, tag = 'input window, operand 2, single buffered']
    #allocation9 [shape = 'u8[98304]{0}', space=vmem, size = 0x18000, scoped, tag = 'input window, operand 3, single buffered']
    #allocation10 [shape = 's32[1]{0}', space=sflag, size = 0x4, scoped, tag = 'scoped memory for tpu_custom_call.1']
    #allocation11 [shape = 'u8[98304]{0}', space=vmem, size = 0x18000, scoped, tag = 'input window, operand 5, single buffered']
    #allocation12 [shape = 'u8[32768]{0}', space=vmem, size = 0x8000, scoped, tag = 'input window, operand 7, single buffered']
    #allocation13 [shape = 's32[1]{0}', space=sflag, size = 0x4, scoped, tag = 'scoped memory for tpu_custom_call.1']
    #allocation14 [shape = 'u8[32768]{0}', space=vmem, size = 0x8000, scoped, tag = 'input window, operand 8, single buffered']
    #allocation15 [shape = 'u8[32768]{0}', space=vmem, size = 0x8000, scoped, tag = 'input window, operand 10, single buffered']
    #allocation16 [shape = 's32[1]{0}', space=sflag, size = 0x4, scoped, tag = 'scoped memory for tpu_custom_call.1']
    #allocation17 [shape = 'u8[8192]{0}', space=vmem, size = 0x2000, scoped, tag = 'output window, operand 0, single buffered']
    #allocation18 [shape = 'u8[8192]{0}', space=vmem, size = 0x2000, scoped, tag = 'output window, operand 1, single buffered']
    #allocation19 [shape = 's32[1]{0}', space=sflag, size = 0x4, scoped, tag = 'scoped memory for tpu_custom_call.1']
    %19 = vsyncpa [#allocation4], 0
    %20 = vsyncpa [#allocation7], 0
    %21 = vsyncpa [#allocation10], 0
    %22 = vsyncpa [#allocation13], 0
    %23 = vsyncpa [#allocation16], 0
    %24 = vsyncpa [#allocation5], 0
    %25 = vsyncpa [#allocation19], 0
    // Predicated region
    $region2: #{tpu_custom_call.1} parent=1 // pred_check
      _
    $region3: #{tpu_custom_call.1} parent=1 // pred_check_branch
      %27 = sbr.rel (0) target = $region5
    $region4: #{tpu_custom_call.1} parent=1 // pred_region
      %s29 = ssub.s32 128, 128
      %30 = vsyncadd [#allocation4], %s29
      %s31 = sshll.u32 [#allocation3], 4
      %s32 = int_to_ptr.vmem [resolvable:$true] %s31
      %37 = dma.hbm_to_vmem [thread:$0]  %s0, 128, %s32, [#allocation4], 64, 64, 4
    $region5: #{tpu_custom_call.1} parent=1 // pred_fallthru
      _
    // Predicated region
    $region6: #{tpu_custom_call.1} parent=1 // pred_check
      _
    $region7: #{tpu_custom_call.1} parent=1 // pred_check_branch
      %39 = sbr.rel (0) target = $region9
    $region8: #{tpu_custom_call.1} parent=1 // pred_region
      %s41 = ssub.s32 256, 256
      %42 = vsyncadd [#allocation7], %s41
      %s43 = sshll.u32 [#allocation6], 4
      %s44 = int_to_ptr.vmem [resolvable:$true] %s43
      %49 = dma.hbm_to_vmem [thread:$0]  %s1, 256, %s44, [#allocation7], 128, 128, 8
    $region9: #{tpu_custom_call.1} parent=1 // pred_fallthru
      _
    // Predicated region
    $region10: #{tpu_custom_call.1} parent=1 // pred_check
      _
    $region11: #{tpu_custom_call.1} parent=1 // pred_check_branch
      %51 = sbr.rel (0) target = $region13
    $region12: #{tpu_custom_call.1} parent=1 // pred_region
      %s53 = ssub.s32 1024, 1024
      %54 = vsyncadd [#allocation7], %s53
      %s55 = sshll.u32 [#allocation8], 4
      %s56 = int_to_ptr.vmem [resolvable:$true] %s55
      %61 = dma.hbm_to_vmem [thread:$0]  %s2, 1024, %s56, [#allocation7], 64, 64, 4
    $region13: #{tpu_custom_call.1} parent=1 // pred_fallthru
      _
    // Predicated region
    $region14: #{tpu_custom_call.1} parent=1 // pred_check
      _
    $region15: #{tpu_custom_call.1} parent=1 // pred_check_branch
      %63 = sbr.rel (0) target = $region17
    $region16: #{tpu_custom_call.1} parent=1 // pred_region
      %s65 = ssub.s32 3072, 3072
      %66 = vsyncadd [#allocation10], %s65
      %s67 = sshll.u32 [#allocation9], 4
      %s68 = int_to_ptr.vmem [resolvable:$true] %s67
      %73 = dma.hbm_to_vmem [thread:$0]  %s3, 3072, %s68, [#allocation10], 192, 192, 12
    $region17: #{tpu_custom_call.1} parent=1 // pred_fallthru
      _
    // Predicated region
    $region18: #{tpu_custom_call.1} parent=1 // pred_check
      _
    $region19: #{tpu_custom_call.1} parent=1 // pred_check_branch
      %75 = sbr.rel (0) target = $region21
    $region20: #{tpu_custom_call.1} parent=1 // pred_region
      _
    $region21: #{tpu_custom_call.1} parent=1 // pred_fallthru
      _
    // Predicated region
    $region22: #{tpu_custom_call.1} parent=1 // pred_check
      _
    $region23: #{tpu_custom_call.1} parent=1 // pred_check_branch
      %77 = sbr.rel (0) target = $region25
    $region24: #{tpu_custom_call.1} parent=1 // pred_region
      %s79 = ssub.s32 3072, 3072
      %80 = vsyncadd [#allocation10], %s79
      %s81 = sshll.u32 [#allocation11], 4
      %s82 = int_to_ptr.vmem [resolvable:$true] %s81
      %87 = dma.hbm_to_vmem [thread:$0]  %s5, 3072, %s82, [#allocation10], 192, 192, 12
    $region25: #{tpu_custom_call.1} parent=1 // pred_fallthru
      _
    // Predicated region
    $region26: #{tpu_custom_call.1} parent=1 // pred_check
      _
    $region27: #{tpu_custom_call.1} parent=1 // pred_check_branch
      %89 = sbr.rel (0) target = $region29
    $region28: #{tpu_custom_call.1} parent=1 // pred_region
      _
    $region29: #{tpu_custom_call.1} parent=1 // pred_fallthru
      _
    // Predicated region
    $region30: #{tpu_custom_call.1} parent=1 // pred_check
      _
    $region31: #{tpu_custom_call.1} parent=1 // pred_check_branch
      %91 = sbr.rel (0) target = $region33
    $region32: #{tpu_custom_call.1} parent=1 // pred_region
      %s93 = ssub.s32 1024, 1024
      %94 = vsyncadd [#allocation13], %s93
      %s95 = sshll.u32 [#allocation12], 4
      %s96 = int_to_ptr.vmem [resolvable:$true] %s95
      %101 = dma.hbm_to_vmem [thread:$0]  %s7, 1024, %s96, [#allocation13], 64, 64, 4
    $region33: #{tpu_custom_call.1} parent=1 // pred_fallthru
      _
    // Predicated region
    $region34: #{tpu_custom_call.1} parent=1 // pred_check
      _
    $region35: #{tpu_custom_call.1} parent=1 // pred_check_branch
      %103 = sbr.rel (0) target = $region37
    $region36: #{tpu_custom_call.1} parent=1 // pred_region
      %s105 = ssub.s32 1024, 1024
      %106 = vsyncadd [#allocation13], %s105
      %s107 = sshll.u32 [#allocation14], 4
      %s108 = int_to_ptr.vmem [resolvable:$true] %s107
      %113 = dma.hbm_to_vmem [thread:$0]  %s8, 1024, %s108, [#allocation13], 64, 64, 4
    $region37: #{tpu_custom_call.1} parent=1 // pred_fallthru
      _
    // Predicated region
    $region38: #{tpu_custom_call.1} parent=1 // pred_check
      _
    $region39: #{tpu_custom_call.1} parent=1 // pred_check_branch
      %115 = sbr.rel (0) target = $region41
    $region40: #{tpu_custom_call.1} parent=1 // pred_region
      _
    $region41: #{tpu_custom_call.1} parent=1 // pred_fallthru
      _
    // Predicated region
    $region42: #{tpu_custom_call.1} parent=1 // pred_check
      _
    $region43: #{tpu_custom_call.1} parent=1 // pred_check_branch
      %117 = sbr.rel (0) target = $region45
    $region44: #{tpu_custom_call.1} parent=1 // pred_region
      %s119 = ssub.s32 1024, 1024
      %120 = vsyncadd [#allocation16], %s119
      %s121 = sshll.u32 [#allocation15], 4
      %s122 = int_to_ptr.vmem [resolvable:$true] %s121
      %127 = dma.hbm_to_vmem [thread:$0]  %s10, 1024, %s122, [#allocation16], 64, 64, 4
    $region45: #{tpu_custom_call.1} parent=1 // pred_fallthru
      _
    // Predicated region
    $region46: #{tpu_custom_call.1} parent=1 // pred_check
      _
    $region47: #{tpu_custom_call.1} parent=1 // pred_check_branch
      %129 = sbr.rel (0) target = $region49
    $region48: #{tpu_custom_call.1} parent=1 // pred_region
      _
    $region49: #{tpu_custom_call.1} parent=1 // pred_fallthru
      _
    // Predicated region
    $region50: #{tpu_custom_call.1} parent=1 // pred_check
      _
    $region51: #{tpu_custom_call.1} parent=1 // pred_check_branch
      %131 = sbr.rel (0) target = $region53
    $region52: #{tpu_custom_call.1} parent=1 // pred_region
      %132 = dma.done [#allocation4], 128
    $region53: #{tpu_custom_call.1} parent=1 // pred_fallthru
      _
    // Predicated region
    $region54: #{tpu_custom_call.1} parent=1 // pred_check
      _
    $region55: #{tpu_custom_call.1} parent=1 // pred_check_branch
      %134 = sbr.rel (0) target = $region57
    $region56: #{tpu_custom_call.1} parent=1 // pred_region
      %135 = dma.done [#allocation7], 256
    $region57: #{tpu_custom_call.1} parent=1 // pred_fallthru
      _
    // Predicated region
    $region58: #{tpu_custom_call.1} parent=1 // pred_check
      _
    $region59: #{tpu_custom_call.1} parent=1 // pred_check_branch
      %137 = sbr.rel (0) target = $region61
    $region60: #{tpu_custom_call.1} parent=1 // pred_region
      %138 = dma.done [#allocation7], 1024
    $region61: #{tpu_custom_call.1} parent=1 // pred_fallthru
      _
    // Predicated region
    $region62: #{tpu_custom_call.1} parent=1 // pred_check
      _
    $region63: #{tpu_custom_call.1} parent=1 // pred_check_branch
      %140 = sbr.rel (0) target = $region65
    $region64: #{tpu_custom_call.1} parent=1 // pred_region
      %141 = dma.done [#allocation10], 3072
    $region65: #{tpu_custom_call.1} parent=1 // pred_fallthru
      _
    // Predicated region
    $region66: #{tpu_custom_call.1} parent=1 // pred_check
      _
    $region67: #{tpu_custom_call.1} parent=1 // pred_check_branch
      %143 = sbr.rel (0) target = $region69
    $region68: #{tpu_custom_call.1} parent=1 // pred_region
      %144 = dma.done [#allocation10], 3072
    $region69: #{tpu_custom_call.1} parent=1 // pred_fallthru
      _
    // Predicated region
    $region70: #{tpu_custom_call.1} parent=1 // pred_check
      _
    $region71: #{tpu_custom_call.1} parent=1 // pred_check_branch
      %146 = sbr.rel (0) target = $region73
    $region72: #{tpu_custom_call.1} parent=1 // pred_region
      %147 = dma.done [#allocation13], 1024
    $region73: #{tpu_custom_call.1} parent=1 // pred_fallthru
      _
    // Predicated region
    $region74: #{tpu_custom_call.1} parent=1 // pred_check
      _
    $region75: #{tpu_custom_call.1} parent=1 // pred_check_branch
      %149 = sbr.rel (0) target = $region77
    $region76: #{tpu_custom_call.1} parent=1 // pred_region
      %150 = dma.done [#allocation13], 1024
    $region77: #{tpu_custom_call.1} parent=1 // pred_fallthru
      _
    // Predicated region
    $region78: #{tpu_custom_call.1} parent=1 // pred_check
      _
    $region79: #{tpu_custom_call.1} parent=1 // pred_check_branch
      %152 = sbr.rel (0) target = $region81
    $region80: #{tpu_custom_call.1} parent=1 // pred_region
      %153 = dma.done [#allocation16], 1024
    $region81: #{tpu_custom_call.1} parent=1 // pred_fallthru
      _
    %p155 = scmp.eq.s32.totalorder 0, 0
    // Predicated region
    $region82: #{tpu_custom_call.1} parent=1 // pred_check
      %p156 = pneg %p155
    $region83: #{tpu_custom_call.1} parent=1 // pred_check_branch
      %158 = sbr.rel (%p156) target = $region85
    $region84: #{tpu_custom_call.1} parent=1 // pred_region
      %v159 = vld [vmem:[#allocation3] sm:$0xf]
      %v160 = vld [vmem:[#allocation3 + $0x4] sm:$0xf]
      %v161 = vld [vmem:[#allocation6] sm:$0xff]
      %v162 = vld [vmem:[#allocation6 + $0x8] sm:$0xff]
      %v163 = vld [vmem:[#allocation9] sm:$0xff]
      %v164 = vld [vmem:[#allocation9 + $0x8] sm:$0xf]
      %v165 = vld [vmem:[#allocation9 + $0xc] sm:$0xff]
      %v166 = vld [vmem:[#allocation9 + $0x14] sm:$0xf]
      %v167 = vld [vmem:[#allocation9 + $0x18] sm:$0xff]
      %v168 = vld [vmem:[#allocation9 + $0x20] sm:$0xf]
      %v169 = vld [vmem:[#allocation9 + $0x24] sm:$0xff]
      %v170 = vld [vmem:[#allocation9 + $0x2c] sm:$0xf]
      %v171 = vld [vmem:[#allocation9 + $0x30] sm:$0xff]
      %v172 = vld [vmem:[#allocation9 + $0x38] sm:$0xf]
      %v173 = vld [vmem:[#allocation9 + $0x3c] sm:$0xff]
      %v174 = vld [vmem:[#allocation9 + $0x44] sm:$0xf]
      %v175 = vld [vmem:[#allocation9 + $0x48] sm:$0xff]
      %v176 = vld [vmem:[#allocation9 + $0x50] sm:$0xf]
      %v177 = vld [vmem:[#allocation9 + $0x54] sm:$0xff]
      %v178 = vld [vmem:[#allocation9 + $0x5c] sm:$0xf]
      %v179 = vld [vmem:[#allocation9 + $0x60] sm:$0xff]
      %v180 = vld [vmem:[#allocation9 + $0x68] sm:$0xf]
      %v181 = vld [vmem:[#allocation9 + $0x6c] sm:$0xff]
      %v182 = vld [vmem:[#allocation9 + $0x74] sm:$0xf]
      %v183 = vld [vmem:[#allocation9 + $0x78] sm:$0xff]
      %v184 = vld [vmem:[#allocation9 + $0x80] sm:$0xf]
      %v185 = vld [vmem:[#allocation9 + $0x84] sm:$0xff]
      %v186 = vld [vmem:[#allocation9 + $0x8c] sm:$0xf]
      %v187 = vld [vmem:[#allocation9 + $0x90] sm:$0xff]
      %v188 = vld [vmem:[#allocation9 + $0x98] sm:$0xf]
      %v189 = vld [vmem:[#allocation9 + $0x9c] sm:$0xff]
      %v190 = vld [vmem:[#allocation9 + $0xa4] sm:$0xf]
      %v191 = vld [vmem:[#allocation9 + $0xa8] sm:$0xff]
      %v192 = vld [vmem:[#allocation9 + $0xb0] sm:$0xf]
      %v193 = vld [vmem:[#allocation9 + $0xb4] sm:$0xff]
      %v194 = vld [vmem:[#allocation9 + $0xbc] sm:$0xf]
      %v195 = vld [vmem:[%s4] sm:$0x7]
      %v197 = vlaneseq
      %v198 = vshrl.u32 %v197, 7
      %v199 = vsub.s32 0, %v198
      %v200 = vrot.slane %v195, %v199
      %v201 = vlaneseq
      %v202 = vshrl.u32 %v201, 7
      %v203 = vsub.s32 1, %v202
      %v204 = vrot.slane %v195, %v203
      %v205 = vlaneseq
      %v206 = vshrl.u32 %v205, 7
      %v207 = vsub.s32 2, %v206
      %v208 = vrot.slane %v195, %v207
      %v214 = vunpack.c.l.b16 %v159
      %v215 = vunpack.c.l.b16 %v160
      %v216 = vpack.c.b16 %v215, %v214
      %v250 = vunpack.c.l.b16 %v163
      %v251 = vunpack.c.h.b16 %v163
      %v252 = vunpack.c.l.b16 %v164
      %v253 = vunpack.c.l.b16 %v165
      %v254 = vunpack.c.h.b16 %v165
      %v255 = vunpack.c.l.b16 %v166
      %v256 = vunpack.c.l.b16 %v167
      %v257 = vunpack.c.h.b16 %v167
      %v258 = vunpack.c.l.b16 %v168
      %v259 = vunpack.c.l.b16 %v169
      %v260 = vunpack.c.h.b16 %v169
      %v261 = vunpack.c.l.b16 %v170
      %v262 = vunpack.c.l.b16 %v171
      %v263 = vunpack.c.h.b16 %v171
      %v264 = vunpack.c.l.b16 %v172
      %v265 = vunpack.c.l.b16 %v173
      %v266 = vunpack.c.h.b16 %v173
      %v267 = vunpack.c.l.b16 %v174
      %v268 = vunpack.c.l.b16 %v175
      %v269 = vunpack.c.h.b16 %v175
      %v270 = vunpack.c.l.b16 %v176
      %v271 = vunpack.c.l.b16 %v177
      %v272 = vunpack.c.h.b16 %v177
      %v273 = vunpack.c.l.b16 %v178
      %v274 = vunpack.c.l.b16 %v179
      %v275 = vunpack.c.h.b16 %v179
      %v276 = vunpack.c.l.b16 %v180
      %v277 = vunpack.c.l.b16 %v181
      %v278 = vunpack.c.h.b16 %v181
      %v279 = vunpack.c.l.b16 %v182
      %v280 = vunpack.c.l.b16 %v183
      %v281 = vunpack.c.h.b16 %v183
      %v282 = vunpack.c.l.b16 %v184
      %v283 = vunpack.c.l.b16 %v185
      %v284 = vunpack.c.h.b16 %v185
      %v285 = vunpack.c.l.b16 %v186
      %v286 = vunpack.c.l.b16 %v187
      %v287 = vunpack.c.h.b16 %v187
      %v288 = vunpack.c.l.b16 %v188
      %v289 = vunpack.c.l.b16 %v189
      %v290 = vunpack.c.h.b16 %v189
      %v291 = vunpack.c.l.b16 %v190
      %v292 = vunpack.c.l.b16 %v191
      %v293 = vunpack.c.h.b16 %v191
      %v294 = vunpack.c.l.b16 %v192
      %v295 = vunpack.c.l.b16 %v193
      %v296 = vunpack.c.h.b16 %v193
      %v297 = vunpack.c.l.b16 %v194
      %v298 = vpack.c.b16 %v253, %v250
      %v299 = vpack.c.b16 %v254, %v251
      %v300 = vpack.c.b16 %v255, %v252
      %v301 = vpack.c.b16 %v259, %v256
      %v302 = vpack.c.b16 %v260, %v257
      %v303 = vpack.c.b16 %v261, %v258
      %v304 = vpack.c.b16 %v265, %v262
      %v305 = vpack.c.b16 %v266, %v263
      %v306 = vpack.c.b16 %v267, %v264
      %v307 = vpack.c.b16 %v271, %v268
      %v308 = vpack.c.b16 %v272, %v269
      %v309 = vpack.c.b16 %v273, %v270
      %v310 = vpack.c.b16 %v277, %v274
      %v311 = vpack.c.b16 %v278, %v275
      %v312 = vpack.c.b16 %v279, %v276
      %v313 = vpack.c.b16 %v283, %v280
      %v314 = vpack.c.b16 %v284, %v281
      %v315 = vpack.c.b16 %v285, %v282
      %v316 = vpack.c.b16 %v289, %v286
      %v317 = vpack.c.b16 %v290, %v287
      %v318 = vpack.c.b16 %v291, %v288
      %v319 = vpack.c.b16 %v295, %v292
      %v320 = vpack.c.b16 %v296, %v293
      %v321 = vpack.c.b16 %v297, %v294
      %346 = vmatprep.subr.bf16.mxu0 %v299
      %347 = vmatpush1.bf16.msra.mxu0 %v298
      %348 = vmatprep.subr.bf16.mxu0 %v302
      %349 = vmatpush1.bf16.msra.mxu0 %v301
      %350 = vmatprep.subr.bf16.mxu0 %v305
      %351 = vmatpush1.bf16.msra.mxu0 %v304
      %352 = vmatprep.subr.bf16.mxu0 %v308
      %353 = vmatpush1.bf16.msra.mxu0 %v307
      %354 = vmatprep.subr.bf16.mxu0 %v311
      %355 = vmatpush1.bf16.msra.mxu0 %v310
      %356 = vmatprep.subr.bf16.mxu0 %v314
      %357 = vmatpush1.bf16.msra.mxu0 %v313
      %358 = vmatprep.subr.bf16.mxu0 %v317
      %359 = vmatpush1.bf16.msra.mxu0 %v316
      %360 = vmatprep.subr.bf16.mxu0 %v320
      %361 = vmatpush1.bf16.msra.mxu0 %v319
      %362 = vmatprep.subr.bf16.mxu0 0
      %363 = vmatpush1.bf16.msra.mxu0 0
      %364 = vmatprep.subr.bf16.mxu0 0
      %365 = vmatpush1.bf16.msra.mxu0 0
      %366 = vmatprep.subr.bf16.mxu0 0
      %367 = vmatpush1.bf16.msra.mxu0 0
      %368 = vmatprep.subr.bf16.mxu0 0
      %369 = vmatpush1.bf16.msra.mxu0 0
      %370 = vmatprep.subr.bf16.mxu0 0
      %371 = vmatpush1.bf16.msra.mxu0 0
      %372 = vmatprep.subr.bf16.mxu0 0
      %373 = vmatpush1.bf16.msra.mxu0 0
      %374 = vmatprep.subr.bf16.mxu0 0
      %375 = vmatpush1.bf16.msra.mxu0 0
      %376 = vmatprep.subr.bf16.mxu0 0
      %377 = vmatpush1.bf16.msra.mxu0 0
      %378 = vmatprep.mubr.bf16.mxu0 0
      %379 = vmatmul.mubr.bf16.gmra.mrb[0].mxu0 %v216
      %v380 = vpop.f32.mrb[0].mxu0
      %v381 = vadd.f32 %v200, %v380
      %v382 = vpop.f32.mrb[0].mxu0
      %v383 = vadd.f32 %v204, %v382
      %v384 = vpop.f32.mrb[0].mxu0
      %v385 = vadd.f32 %v200, %v384
      %v386 = vpop.f32.mrb[0].mxu0
      %v387 = vadd.f32 %v204, %v386
      %388 = vdwg.mxu0
      %389 = vmatprep.subr.bf16.mxu0 0
      %390 = vmatpush1.bf16.msra.mxu0 %v300
      %391 = vmatprep.subr.bf16.mxu0 0
      %392 = vmatpush1.bf16.msra.mxu0 %v303
      %393 = vmatprep.subr.bf16.mxu0 0
      %394 = vmatpush1.bf16.msra.mxu0 %v306
      %395 = vmatprep.subr.bf16.mxu0 0
      %396 = vmatpush1.bf16.msra.mxu0 %v309
      %397 = vmatprep.subr.bf16.mxu0 0
      %398 = vmatpush1.bf16.msra.mxu0 %v312
      %399 = vmatprep.subr.bf16.mxu0 0
      %400 = vmatpush1.bf16.msra.mxu0 %v315
      %401 = vmatprep.subr.bf16.mxu0 0
      %402 = vmatpush1.bf16.msra.mxu0 %v318
      %403 = vmatprep.subr.bf16.mxu0 0
      %404 = vmatpush1.bf16.msra.mxu0 %v321
      %405 = vmatprep.subr.bf16.mxu0 0
      %406 = vmatpush1.bf16.msra.mxu0 0
      %407 = vmatprep.subr.bf16.mxu0 0
      %408 = vmatpush1.bf16.msra.mxu0 0
      %409 = vmatprep.subr.bf16.mxu0 0
      %410 = vmatpush1.bf16.msra.mxu0 0
      %411 = vmatprep.subr.bf16.mxu0 0
      %412 = vmatpush1.bf16.msra.mxu0 0
      %413 = vmatprep.subr.bf16.mxu0 0
      %414 = vmatpush1.bf16.msra.mxu0 0
      %415 = vmatprep.subr.bf16.mxu0 0
      %416 = vmatpush1.bf16.msra.mxu0 0
      %417 = vmatprep.subr.bf16.mxu0 0
      %418 = vmatpush1.bf16.msra.mxu0 0
      %419 = vmatprep.subr.bf16.mxu0 0
      %420 = vmatpush1.bf16.msra.mxu0 0
      %421 = vmatprep.mubr.bf16.mxu0 0
      %422 = vmatmul.mubr.bf16.gmra.mrb[0].mxu0 %v216
      %v423 = vpop.f32.mrb[0].mxu0
      %v424 = vadd.f32 %v208, %v423
      %v425 = vpop.f32.mrb[0].mxu0
      %v426 = vpop.f32.mrb[0].mxu0
      %v427 = vadd.f32 %v208, %v426
      %v428 = vpop.f32.mrb[0].mxu0
      %429 = vdwg.mxu0
      %v430 = vpack.c.bf16 %v162, %v161
      %v431 = vld [vmem:[#allocation11] sm:$0xff]
      %v432 = vld [vmem:[#allocation11 + $0x8] sm:$0xf]
      %v433 = vld [vmem:[#allocation11 + $0xc] sm:$0xff]
      %v434 = vld [vmem:[#allocation11 + $0x14] sm:$0xf]
      %v435 = vld [vmem:[#allocation11 + $0x18] sm:$0xff]
      %v436 = vld [vmem:[#allocation11 + $0x20] sm:$0xf]
      %v437 = vld [vmem:[#allocation11 + $0x24] sm:$0xff]
      %v438 = vld [vmem:[#allocation11 + $0x2c] sm:$0xf]
      %v439 = vld [vmem:[#allocation11 + $0x30] sm:$0xff]
      %v440 = vld [vmem:[#allocation11 + $0x38] sm:$0xf]
      %v441 = vld [vmem:[#allocation11 + $0x3c] sm:$0xff]
      %v442 = vld [vmem:[#allocation11 + $0x44] sm:$0xf]
      %v443 = vld [vmem:[#allocation11 + $0x48] sm:$0xff]
      %v444 = vld [vmem:[#allocation11 + $0x50] sm:$0xf]
      %v445 = vld [vmem:[#allocation11 + $0x54] sm:$0xff]
      %v446 = vld [vmem:[#allocation11 + $0x5c] sm:$0xf]
      %v447 = vld [vmem:[#allocation11 + $0x60] sm:$0xff]
      %v448 = vld [vmem:[#allocation11 + $0x68] sm:$0xf]
      %v449 = vld [vmem:[#allocation11 + $0x6c] sm:$0xff]
      %v450 = vld [vmem:[#allocation11 + $0x74] sm:$0xf]
      %v451 = vld [vmem:[#allocation11 + $0x78] sm:$0xff]
      %v452 = vld [vmem:[#allocation11 + $0x80] sm:$0xf]
      %v453 = vld [vmem:[#allocation11 + $0x84] sm:$0xff]
      %v454 = vld [vmem:[#allocation11 + $0x8c] sm:$0xf]
      %v455 = vld [vmem:[#allocation11 + $0x90] sm:$0xff]
      %v456 = vld [vmem:[#allocation11 + $0x98] sm:$0xf]
      %v457 = vld [vmem:[#allocation11 + $0x9c] sm:$0xff]
      %v458 = vld [vmem:[#allocation11 + $0xa4] sm:$0xf]
      %v459 = vld [vmem:[#allocation11 + $0xa8] sm:$0xff]
      %v460 = vld [vmem:[#allocation11 + $0xb0] sm:$0xf]
      %v461 = vld [vmem:[#allocation11 + $0xb4] sm:$0xff]
      %v462 = vld [vmem:[#allocation11 + $0xbc] sm:$0xf]
      %v463 = vld [vmem:[%s6] sm:$0x7]
      %v465 = vlaneseq
      %v466 = vshrl.u32 %v465, 7
      %v467 = vsub.s32 0, %v466
      %v468 = vrot.slane %v463, %v467
      %v469 = vlaneseq
      %v470 = vshrl.u32 %v469, 7
      %v471 = vsub.s32 1, %v470
      %v472 = vrot.slane %v463, %v471
      %v473 = vlaneseq
      %v474 = vshrl.u32 %v473, 7
      %v475 = vsub.s32 2, %v474
      %v476 = vrot.slane %v463, %v475
      %v512 = vunpack.c.l.b16 %v431
      %v513 = vunpack.c.h.b16 %v431
      %v514 = vunpack.c.l.b16 %v432
      %v515 = vunpack.c.l.b16 %v433
      %v516 = vunpack.c.h.b16 %v433
      %v517 = vunpack.c.l.b16 %v434
      %v518 = vunpack.c.l.b16 %v435
      %v519 = vunpack.c.h.b16 %v435
      %v520 = vunpack.c.l.b16 %v436
      %v521 = vunpack.c.l.b16 %v437
      %v522 = vunpack.c.h.b16 %v437
      %v523 = vunpack.c.l.b16 %v438
      %v524 = vunpack.c.l.b16 %v439
      %v525 = vunpack.c.h.b16 %v439
      %v526 = vunpack.c.l.b16 %v440
      %v527 = vunpack.c.l.b16 %v441
      %v528 = vunpack.c.h.b16 %v441
      %v529 = vunpack.c.l.b16 %v442
      %v530 = vunpack.c.l.b16 %v443
      %v531 = vunpack.c.h.b16 %v443
      %v532 = vunpack.c.l.b16 %v444
      %v533 = vunpack.c.l.b16 %v445
      %v534 = vunpack.c.h.b16 %v445
      %v535 = vunpack.c.l.b16 %v446
      %v536 = vunpack.c.l.b16 %v447
      %v537 = vunpack.c.h.b16 %v447
      %v538 = vunpack.c.l.b16 %v448
      %v539 = vunpack.c.l.b16 %v449
      %v540 = vunpack.c.h.b16 %v449
      %v541 = vunpack.c.l.b16 %v450
      %v542 = vunpack.c.l.b16 %v451
      %v543 = vunpack.c.h.b16 %v451
      %v544 = vunpack.c.l.b16 %v452
      %v545 = vunpack.c.l.b16 %v453
      %v546 = vunpack.c.h.b16 %v453
      %v547 = vunpack.c.l.b16 %v454
      %v548 = vunpack.c.l.b16 %v455
      %v549 = vunpack.c.h.b16 %v455
      %v550 = vunpack.c.l.b16 %v456
      %v551 = vunpack.c.l.b16 %v457
      %v552 = vunpack.c.h.b16 %v457
      %v553 = vunpack.c.l.b16 %v458
      %v554 = vunpack.c.l.b16 %v459
      %v555 = vunpack.c.h.b16 %v459
      %v556 = vunpack.c.l.b16 %v460
      %v557 = vunpack.c.l.b16 %v461
      %v558 = vunpack.c.h.b16 %v461
      %v559 = vunpack.c.l.b16 %v462
      %v560 = vpack.c.b16 %v515, %v512
      %v561 = vpack.c.b16 %v516, %v513
      %v562 = vpack.c.b16 %v517, %v514
      %v563 = vpack.c.b16 %v521, %v518
      %v564 = vpack.c.b16 %v522, %v519
      %v565 = vpack.c.b16 %v523, %v520
      %v566 = vpack.c.b16 %v527, %v524
      %v567 = vpack.c.b16 %v528, %v525
      %v568 = vpack.c.b16 %v529, %v526
      %v569 = vpack.c.b16 %v533, %v530
      %v570 = vpack.c.b16 %v534, %v531
      %v571 = vpack.c.b16 %v535, %v532
      %v572 = vpack.c.b16 %v539, %v536
      %v573 = vpack.c.b16 %v540, %v537
      %v574 = vpack.c.b16 %v541, %v538
      %v575 = vpack.c.b16 %v545, %v542
      %v576 = vpack.c.b16 %v546, %v543
      %v577 = vpack.c.b16 %v547, %v544
      %v578 = vpack.c.b16 %v551, %v548
      %v579 = vpack.c.b16 %v552, %v549
      %v580 = vpack.c.b16 %v553, %v550
      %v581 = vpack.c.b16 %v557, %v554
      %v582 = vpack.c.b16 %v558, %v555
      %v583 = vpack.c.b16 %v559, %v556
      %608 = vmatprep.subr.bf16.mxu0 %v561
      %609 = vmatpush1.bf16.msra.mxu0 %v560
      %610 = vmatprep.subr.bf16.mxu0 %v564
      %611 = vmatpush1.bf16.msra.mxu0 %v563
      %612 = vmatprep.subr.bf16.mxu0 %v567
      %613 = vmatpush1.bf16.msra.mxu0 %v566
      %614 = vmatprep.subr.bf16.mxu0 %v570
      %615 = vmatpush1.bf16.msra.mxu0 %v569
      %616 = vmatprep.subr.bf16.mxu0 %v573
      %617 = vmatpush1.bf16.msra.mxu0 %v572
      %618 = vmatprep.subr.bf16.mxu0 %v576
      %619 = vmatpush1.bf16.msra.mxu0 %v575
      %620 = vmatprep.subr.bf16.mxu0 %v579
      %621 = vmatpush1.bf16.msra.mxu0 %v578
      %622 = vmatprep.subr.bf16.mxu0 %v582
      %623 = vmatpush1.bf16.msra.mxu0 %v581
      %624 = vmatprep.subr.bf16.mxu0 0
      %625 = vmatpush1.bf16.msra.mxu0 0
      %626 = vmatprep.subr.bf16.mxu0 0
      %627 = vmatpush1.bf16.msra.mxu0 0
      %628 = vmatprep.subr.bf16.mxu0 0
      %629 = vmatpush1.bf16.msra.mxu0 0
      %630 = vmatprep.subr.bf16.mxu0 0
      %631 = vmatpush1.bf16.msra.mxu0 0
      %632 = vmatprep.subr.bf16.mxu0 0
      %633 = vmatpush1.bf16.msra.mxu0 0
      %634 = vmatprep.subr.bf16.mxu0 0
      %635 = vmatpush1.bf16.msra.mxu0 0
      %636 = vmatprep.subr.bf16.mxu0 0
      %637 = vmatpush1.bf16.msra.mxu0 0
      %638 = vmatprep.subr.bf16.mxu0 0
      %639 = vmatpush1.bf16.msra.mxu0 0
      %640 = vmatprep.mubr.bf16.mxu0 0
      %641 = vmatmul.mubr.bf16.gmra.mrb[0].mxu0 %v430
      %v642 = vpop.f32.mrb[0].mxu0
      %v643 = vadd.f32 %v468, %v642
      %v644 = vpop.f32.mrb[0].mxu0
      %v645 = vadd.f32 %v472, %v644
      %v646 = vpop.f32.mrb[0].mxu0
      %v647 = vadd.f32 %v468, %v646
      %v648 = vpop.f32.mrb[0].mxu0
      %v649 = vadd.f32 %v472, %v648
      %650 = vdwg.mxu0
      %651 = vmatprep.subr.bf16.mxu0 0
      %652 = vmatpush1.bf16.msra.mxu0 %v562
      %653 = vmatprep.subr.bf16.mxu0 0
      %654 = vmatpush1.bf16.msra.mxu0 %v565
      %655 = vmatprep.subr.bf16.mxu0 0
      %656 = vmatpush1.bf16.msra.mxu0 %v568
      %657 = vmatprep.subr.bf16.mxu0 0
      %658 = vmatpush1.bf16.msra.mxu0 %v571
      %659 = vmatprep.subr.bf16.mxu0 0
      %660 = vmatpush1.bf16.msra.mxu0 %v574
      %661 = vmatprep.subr.bf16.mxu0 0
      %662 = vmatpush1.bf16.msra.mxu0 %v577
      %663 = vmatprep.subr.bf16.mxu0 0
      %664 = vmatpush1.bf16.msra.mxu0 %v580
      %665 = vmatprep.subr.bf16.mxu0 0
      %666 = vmatpush1.bf16.msra.mxu0 %v583
      %667 = vmatprep.subr.bf16.mxu0 0
      %668 = vmatpush1.bf16.msra.mxu0 0
      %669 = vmatprep.subr.bf16.mxu0 0
      %670 = vmatpush1.bf16.msra.mxu0 0
      %671 = vmatprep.subr.bf16.mxu0 0
      %672 = vmatpush1.bf16.msra.mxu0 0
      %673 = vmatprep.subr.bf16.mxu0 0
      %674 = vmatpush1.bf16.msra.mxu0 0
      %675 = vmatprep.subr.bf16.mxu0 0
      %676 = vmatpush1.bf16.msra.mxu0 0
      %677 = vmatprep.subr.bf16.mxu0 0
      %678 = vmatpush1.bf16.msra.mxu0 0
      %679 = vmatprep.subr.bf16.mxu0 0
      %680 = vmatpush1.bf16.msra.mxu0 0
      %681 = vmatprep.subr.bf16.mxu0 0
      %682 = vmatpush1.bf16.msra.mxu0 0
      %683 = vmatprep.mubr.bf16.mxu0 0
      %684 = vmatmul.mubr.bf16.gmra.mrb[0].mxu0 %v430
      %v685 = vpop.f32.mrb[0].mxu0
      %v686 = vadd.f32 %v476, %v685
      %v687 = vpop.f32.mrb[0].mxu0
      %v688 = vpop.f32.mrb[0].mxu0
      %v689 = vadd.f32 %v476, %v688
      %v690 = vpop.f32.mrb[0].mxu0
      %691 = vdwg.mxu0
      %v692 = vadd.f32 %v381, %v643
      %v693 = vadd.f32 %v385, %v647
      %v694 = vxor.u32 %v692, 2147483648
      %v695 = vxor.u32 %v693, 2147483648
      %v696 = vmul.f32 %v694, 1.442695
      %v697 = vpow.pop %v696
      %v698 = vmul.f32 %v695, 1.442695
      %v699 = vpow.pop %v698
      %v700 = vadd.f32 %v697, 1.0
      %v701 = vadd.f32 %v699, 1.0
      %v702 = vrcp.pop %v700
      %v703 = vmul.f32 1.0, %v702
      %v704 = vrcp.pop %v701
      %v705 = vmul.f32 1.0, %v704
      %v706 = vadd.f32 %v383, %v645
      %v707 = vadd.f32 %v387, %v649
      %v708 = vxor.u32 %v706, 2147483648
      %v709 = vxor.u32 %v707, 2147483648
      %v710 = vmul.f32 %v708, 1.442695
      %v711 = vpow.pop %v710
      %v712 = vmul.f32 %v709, 1.442695
      %v713 = vpow.pop %v712
      %v714 = vadd.f32 %v711, 1.0
      %v715 = vadd.f32 %v713, 1.0
      %v716 = vrcp.pop %v714
      %v717 = vmul.f32 1.0, %v716
      %v718 = vrcp.pop %v715
      %v719 = vmul.f32 1.0, %v718
      %v720 = vmul.f32 %v703, %v686
      %v721 = vmul.f32 %v705, %v689
      %v722 = vadd.f32 %v424, %v720
      %v723 = vadd.f32 %v427, %v721
      %v724 = vtanh.pop %v722
      %v725 = vtanh.pop %v723
      %v726 = vsub.f32 1.0, %v717
      %v727 = vsub.f32 1.0, %v719
      %v728 = vmul.f32 %v726, %v724
      %v729 = vmul.f32 %v727, %v725
      %v730 = vmul.f32 %v717, %v161
      %v731 = vmul.f32 %v719, %v162
      %v732 = vadd.f32 %v728, %v730
      %v733 = vadd.f32 %v729, %v731
      %734 = vst [vmem:[#allocation18] sm:$0xff] %v732
      %735 = vst [vmem:[#allocation18 + $0x8] sm:$0xff] %v733
      %v736 = vld [vmem:[#allocation8] sm:$0xf]
      %v737 = vld [vmem:[#allocation8 + $0x4] sm:$0xf]
      %v738 = vld [vmem:[#allocation8 + $0x8] sm:$0xf]
      %v739 = vld [vmem:[#allocation8 + $0xc] sm:$0xf]
      %v740 = vld [vmem:[#allocation8 + $0x10] sm:$0xf]
      %v741 = vld [vmem:[#allocation8 + $0x14] sm:$0xf]
      %v742 = vld [vmem:[#allocation8 + $0x18] sm:$0xf]
      %v743 = vld [vmem:[#allocation8 + $0x1c] sm:$0xf]
      %v744 = vld [vmem:[#allocation8 + $0x20] sm:$0xf]
      %v745 = vld [vmem:[#allocation8 + $0x24] sm:$0xf]
      %v746 = vld [vmem:[#allocation8 + $0x28] sm:$0xf]
      %v747 = vld [vmem:[#allocation8 + $0x2c] sm:$0xf]
      %v748 = vld [vmem:[#allocation8 + $0x30] sm:$0xf]
      %v749 = vld [vmem:[#allocation8 + $0x34] sm:$0xf]
      %v750 = vld [vmem:[#allocation8 + $0x38] sm:$0xf]
      %v751 = vld [vmem:[#allocation8 + $0x3c] sm:$0xf]
      %v752 = vpack.c.bf16 %v733, %v732
      %v754 = vcombine.high %v752, %v752
      %v756 = vunpack.c.l.s4 1966171168
      %v757 = vunpack.c.0.s8 %v756
      %v758 = vlaneseq
      %v759 = vshrl.u32 %v758, 7
      %v760 = vsub.s32 %v757, %v759
      %v761 = vrot.slane %v752, %v760
      %v763 = vunpack.c.l.s4 1966171168
      %v764 = vunpack.c.0.s8 %v763
      %v765 = vlaneseq
      %v766 = vshrl.u32 %v765, 7
      %v767 = vsub.s32 %v764, %v766
      %v768 = vrot.slane %v754, %v767
      %v769 = vcombine.high %v761, %v761
      %v770 = vcombine.high %v768, %v768
      %v772 = vunpack.c.l.s4 1966171168
      %v773 = vunpack.c.0.s8 %v772
      %v774 = vlaneseq
      %v775 = vshrl.u32 %v774, 7
      %v776 = vsub.s32 %v773, %v775
      %v777 = vrot.slane %v761, %v776
      %v779 = vunpack.c.l.s4 1966171168
      %v780 = vunpack.c.0.s8 %v779
      %v781 = vlaneseq
      %v782 = vshrl.u32 %v781, 7
      %v783 = vsub.s32 %v780, %v782
      %v784 = vrot.slane %v768, %v783
      %v786 = vunpack.c.l.s4 1966171168
      %v787 = vunpack.c.0.s8 %v786
      %v788 = vlaneseq
      %v789 = vshrl.u32 %v788, 7
      %v790 = vsub.s32 %v787, %v789
      %v791 = vrot.slane %v769, %v790
      %v793 = vunpack.c.l.s4 1966171168
      %v794 = vunpack.c.0.s8 %v793
      %v795 = vlaneseq
      %v796 = vshrl.u32 %v795, 7
      %v797 = vsub.s32 %v794, %v796
      %v798 = vrot.slane %v770, %v797
      %v799 = vcombine.high %v777, %v777
      %v800 = vcombine.high %v784, %v784
      %v801 = vcombine.high %v791, %v791
      %v802 = vcombine.high %v798, %v798
      %v803 = vunpack.i.l.s16 %v777
      %v804 = vunpack.i.h.s16 %v777
      %v805 = vunpack.i.l.s16 %v791
      %v806 = vunpack.i.h.s16 %v791
      %v807 = vunpack.i.l.s16 %v799
      %v808 = vunpack.i.h.s16 %v799
      %v809 = vunpack.i.l.s16 %v801
      %v810 = vunpack.i.h.s16 %v801
      %v811 = vunpack.i.l.s16 %v784
      %v812 = vunpack.i.h.s16 %v784
      %v813 = vunpack.i.l.s16 %v798
      %v814 = vunpack.i.h.s16 %v798
      %v815 = vunpack.i.l.s16 %v800
      %v816 = vunpack.i.h.s16 %v800
      %v817 = vunpack.i.l.s16 %v802
      %v818 = vunpack.i.h.s16 %v802
      %v819 = vpack.i.b16 %v803, %v803
      %v820 = vlaneseq
      %v821 = vshrl.u32 %v820, 7
      %v822 = vsub.s32 0, %v821
      %v823 = vrot.slane %v819, %v822
      %825 = vmatprep.subr.bf16.mxu0 0
      %826 = vmatpush1.bf16.xpose.msra.mxu0 %v736
      %827 = vmatprep.subr.bf16.mxu0 0
      %828 = vmatpush1.bf16.xpose.msra.mxu0 0
      %829 = vmatprep.subr.bf16.mxu0 0
      %830 = vmatpush1.bf16.xpose.msra.mxu0 0
      %831 = vmatprep.subr.bf16.mxu0 0
      %832 = vmatpush1.bf16.xpose.msra.mxu0 0
      %833 = vmatprep.subr.bf16.mxu0 0
      %834 = vmatpush1.bf16.xpose.msra.mxu0 0
      %835 = vmatprep.subr.bf16.mxu0 0
      %836 = vmatpush1.bf16.xpose.msra.mxu0 0
      %837 = vmatprep.subr.bf16.mxu0 0
      %838 = vmatpush1.bf16.xpose.msra.mxu0 0
      %839 = vmatprep.subr.bf16.mxu0 0
      %840 = vmatpush1.bf16.xpose.msra.mxu0 0
      %841 = vmatprep.subr.bf16.mxu0 0
      %842 = vmatpush1.bf16.xpose.msra.mxu0 0
      %843 = vmatprep.subr.bf16.mxu0 0
      %844 = vmatpush1.bf16.xpose.msra.mxu0 0
      %845 = vmatprep.subr.bf16.mxu0 0
      %846 = vmatpush1.bf16.xpose.msra.mxu0 0
      %847 = vmatprep.subr.bf16.mxu0 0
      %848 = vmatpush1.bf16.xpose.msra.mxu0 0
      %849 = vmatprep.subr.bf16.mxu0 0
      %850 = vmatpush1.bf16.xpose.msra.mxu0 0
      %851 = vmatprep.subr.bf16.mxu0 0
      %852 = vmatpush1.bf16.xpose.msra.mxu0 0
      %853 = vmatprep.subr.bf16.mxu0 0
      %854 = vmatpush1.bf16.xpose.msra.mxu0 0
      %855 = vmatprep.subr.bf16.mxu0 0
      %856 = vmatpush1.bf16.xpose.msra.mxu0 0
      %857 = vmatprep.mubr.bf16.mxu0 0
      %858 = vmatmul.mubr.bf16.gmra.mrb[0].mxu0 %v823
      %v859 = vpop.f32.mrb[0].mxu0
      %v860 = vadd.f32 0.0, %v859
      %v861 = vpop.f32.mrb[0].mxu0
      %v862 = vpop.f32.mrb[0].mxu0
      %v863 = vpop.f32.mrb[0].mxu0
      %864 = vdwg.mxu0
      %v865 = vpack.i.b16 %v804, %v804
      %v866 = vlaneseq
      %v867 = vshrl.u32 %v866, 7
      %v868 = vsub.s32 0, %v867
      %v869 = vrot.slane %v865, %v868
      %871 = vmatprep.subr.bf16.mxu0 0
      %872 = vmatpush1.bf16.xpose.msra.mxu0 %v737
      %873 = vmatprep.subr.bf16.mxu0 0
      %874 = vmatpush1.bf16.xpose.msra.mxu0 0
      %875 = vmatprep.subr.bf16.mxu0 0
      %876 = vmatpush1.bf16.xpose.msra.mxu0 0
      %877 = vmatprep.subr.bf16.mxu0 0
      %878 = vmatpush1.bf16.xpose.msra.mxu0 0
      %879 = vmatprep.subr.bf16.mxu0 0
      %880 = vmatpush1.bf16.xpose.msra.mxu0 0
      %881 = vmatprep.subr.bf16.mxu0 0
      %882 = vmatpush1.bf16.xpose.msra.mxu0 0
      %883 = vmatprep.subr.bf16.mxu0 0
      %884 = vmatpush1.bf16.xpose.msra.mxu0 0
      %885 = vmatprep.subr.bf16.mxu0 0
      %886 = vmatpush1.bf16.xpose.msra.mxu0 0
      %887 = vmatprep.subr.bf16.mxu0 0
      %888 = vmatpush1.bf16.xpose.msra.mxu0 0
      %889 = vmatprep.subr.bf16.mxu0 0
      %890 = vmatpush1.bf16.xpose.msra.mxu0 0
      %891 = vmatprep.subr.bf16.mxu0 0
      %892 = vmatpush1.bf16.xpose.msra.mxu0 0
      %893 = vmatprep.subr.bf16.mxu0 0
      %894 = vmatpush1.bf16.xpose.msra.mxu0 0
      %895 = vmatprep.subr.bf16.mxu0 0
      %896 = vmatpush1.bf16.xpose.msra.mxu0 0
      %897 = vmatprep.subr.bf16.mxu0 0
      %898 = vmatpush1.bf16.xpose.msra.mxu0 0
      %899 = vmatprep.subr.bf16.mxu0 0
      %900 = vmatpush1.bf16.xpose.msra.mxu0 0
      %901 = vmatprep.subr.bf16.mxu0 0
      %902 = vmatpush1.bf16.xpose.msra.mxu0 0
      %903 = vmatprep.mubr.bf16.mxu0 0
      %904 = vmatmul.mubr.bf16.gmra.mrb[0].mxu0 %v869
      %v905 = vpop.f32.mrb[0].mxu0
      %v906 = vadd.f32 0.0, %v905
      %v907 = vpop.f32.mrb[0].mxu0
      %v908 = vpop.f32.mrb[0].mxu0
      %v909 = vpop.f32.mrb[0].mxu0
      %910 = vdwg.mxu0
      %v911 = vpack.i.b16 %v805, %v805
      %v912 = vlaneseq
      %v913 = vshrl.u32 %v912, 7
      %v914 = vsub.s32 0, %v913
      %v915 = vrot.slane %v911, %v914
      %917 = vmatprep.subr.bf16.mxu0 0
      %918 = vmatpush1.bf16.xpose.msra.mxu0 %v738
      %919 = vmatprep.subr.bf16.mxu0 0
      %920 = vmatpush1.bf16.xpose.msra.mxu0 0
      %921 = vmatprep.subr.bf16.mxu0 0
      %922 = vmatpush1.bf16.xpose.msra.mxu0 0
      %923 = vmatprep.subr.bf16.mxu0 0
      %924 = vmatpush1.bf16.xpose.msra.mxu0 0
      %925 = vmatprep.subr.bf16.mxu0 0
      %926 = vmatpush1.bf16.xpose.msra.mxu0 0
      %927 = vmatprep.subr.bf16.mxu0 0
      %928 = vmatpush1.bf16.xpose.msra.mxu0 0
      %929 = vmatprep.subr.bf16.mxu0 0
      %930 = vmatpush1.bf16.xpose.msra.mxu0 0
      %931 = vmatprep.subr.bf16.mxu0 0
      %932 = vmatpush1.bf16.xpose.msra.mxu0 0
      %933 = vmatprep.subr.bf16.mxu0 0
      %934 = vmatpush1.bf16.xpose.msra.mxu0 0
      %935 = vmatprep.subr.bf16.mxu0 0
      %936 = vmatpush1.bf16.xpose.msra.mxu0 0
      %937 = vmatprep.subr.bf16.mxu0 0
      %938 = vmatpush1.bf16.xpose.msra.mxu0 0
      %939 = vmatprep.subr.bf16.mxu0 0
      %940 = vmatpush1.bf16.xpose.msra.mxu0 0
      %941 = vmatprep.subr.bf16.mxu0 0
      %942 = vmatpush1.bf16.xpose.msra.mxu0 0
      %943 = vmatprep.subr.bf16.mxu0 0
      %944 = vmatpush1.bf16.xpose.msra.mxu0 0
      %945 = vmatprep.subr.bf16.mxu0 0
      %946 = vmatpush1.bf16.xpose.msra.mxu0 0
      %947 = vmatprep.subr.bf16.mxu0 0
      %948 = vmatpush1.bf16.xpose.msra.mxu0 0
      %949 = vmatprep.mubr.bf16.mxu0 0
      %950 = vmatmul.mubr.bf16.gmra.mrb[0].mxu0 %v915
      %v951 = vpop.f32.mrb[0].mxu0
      %v952 = vadd.f32 0.0, %v951
      %v953 = vpop.f32.mrb[0].mxu0
      %v954 = vpop.f32.mrb[0].mxu0
      %v955 = vpop.f32.mrb[0].mxu0
      %956 = vdwg.mxu0
      %v957 = vpack.i.b16 %v806, %v806
      %v958 = vlaneseq
      %v959 = vshrl.u32 %v958, 7
      %v960 = vsub.s32 0, %v959
      %v961 = vrot.slane %v957, %v960
      %963 = vmatprep.subr.bf16.mxu0 0
      %964 = vmatpush1.bf16.xpose.msra.mxu0 %v739
      %965 = vmatprep.subr.bf16.mxu0 0
      %966 = vmatpush1.bf16.xpose.msra.mxu0 0
      %967 = vmatprep.subr.bf16.mxu0 0
      %968 = vmatpush1.bf16.xpose.msra.mxu0 0
      %969 = vmatprep.subr.bf16.mxu0 0
      %970 = vmatpush1.bf16.xpose.msra.mxu0 0
      %971 = vmatprep.subr.bf16.mxu0 0
      %972 = vmatpush1.bf16.xpose.msra.mxu0 0
      %973 = vmatprep.subr.bf16.mxu0 0
      %974 = vmatpush1.bf16.xpose.msra.mxu0 0
      %975 = vmatprep.subr.bf16.mxu0 0
      %976 = vmatpush1.bf16.xpose.msra.mxu0 0
      %977 = vmatprep.subr.bf16.mxu0 0
      %978 = vmatpush1.bf16.xpose.msra.mxu0 0
      %979 = vmatprep.subr.bf16.mxu0 0
      %980 = vmatpush1.bf16.xpose.msra.mxu0 0
      %981 = vmatprep.subr.bf16.mxu0 0
      %982 = vmatpush1.bf16.xpose.msra.mxu0 0
      %983 = vmatprep.subr.bf16.mxu0 0
      %984 = vmatpush1.bf16.xpose.msra.mxu0 0
      %985 = vmatprep.subr.bf16.mxu0 0
      %986 = vmatpush1.bf16.xpose.msra.mxu0 0
      %987 = vmatprep.subr.bf16.mxu0 0
      %988 = vmatpush1.bf16.xpose.msra.mxu0 0
      %989 = vmatprep.subr.bf16.mxu0 0
      %990 = vmatpush1.bf16.xpose.msra.mxu0 0
      %991 = vmatprep.subr.bf16.mxu0 0
      %992 = vmatpush1.bf16.xpose.msra.mxu0 0
      %993 = vmatprep.subr.bf16.mxu0 0
      %994 = vmatpush1.bf16.xpose.msra.mxu0 0
      %995 = vmatprep.mubr.bf16.mxu0 0
      %996 = vmatmul.mubr.bf16.gmra.mrb[0].mxu0 %v961
      %v997 = vpop.f32.mrb[0].mxu0
      %v998 = vadd.f32 0.0, %v997
      %v999 = vpop.f32.mrb[0].mxu0
      %v1000 = vpop.f32.mrb[0].mxu0
      %v1001 = vpop.f32.mrb[0].mxu0
      %1002 = vdwg.mxu0
      %v1003 = vpack.i.b16 %v807, %v807
      %v1004 = vlaneseq
      %v1005 = vshrl.u32 %v1004, 7
      %v1006 = vsub.s32 0, %v1005
      %v1007 = vrot.slane %v1003, %v1006
      %1009 = vmatprep.subr.bf16.mxu0 0
      %1010 = vmatpush1.bf16.xpose.msra.mxu0 %v740
      %1011 = vmatprep.subr.bf16.mxu0 0
      %1012 = vmatpush1.bf16.xpose.msra.mxu0 0
      %1013 = vmatprep.subr.bf16.mxu0 0
      %1014 = vmatpush1.bf16.xpose.msra.mxu0 0
      %1015 = vmatprep.subr.bf16.mxu0 0
      %1016 = vmatpush1.bf16.xpose.msra.mxu0 0
      %1017 = vmatprep.subr.bf16.mxu0 0
      %1018 = vmatpush1.bf16.xpose.msra.mxu0 0
      %1019 = vmatprep.subr.bf16.mxu0 0
      %1020 = vmatpush1.bf16.xpose.msra.mxu0 0
      %1021 = vmatprep.subr.bf16.mxu0 0
      %1022 = vmatpush1.bf16.xpose.msra.mxu0 0
      %1023 = vmatprep.subr.bf16.mxu0 0
      %1024 = vmatpush1.bf16.xpose.msra.mxu0 0
      %1025 = vmatprep.subr.bf16.mxu0 0
      %1026 = vmatpush1.bf16.xpose.msra.mxu0 0
      %1027 = vmatprep.subr.bf16.mxu0 0
      %1028 = vmatpush1.bf16.xpose.msra.mxu0 0
      %1029 = vmatprep.subr.bf16.mxu0 0
      %1030 = vmatpush1.bf16.xpose.msra.mxu0 0
      %1031 = vmatprep.subr.bf16.mxu0 0
      %1032 = vmatpush1.bf16.xpose.msra.mxu0 0
      %1033 = vmatprep.subr.bf16.mxu0 0
      %1034 = vmatpush1.bf16.xpose.msra.mxu0 0
      %1035 = vmatprep.subr.bf16.mxu0 0
      %1036 = vmatpush1.bf16.xpose.msra.mxu0 0
      %1037 = vmatprep.subr.bf16.mxu0 0
      %1038 = vmatpush1.bf16.xpose.msra.mxu0 0
      %1039 = vmatprep.subr.bf16.mxu0 0
      %1040 = vmatpush1.bf16.xpose.msra.mxu0 0
      %1041 = vmatprep.mubr.bf16.mxu0 0
      %1042 = vmatmul.mubr.bf16.gmra.mrb[0].mxu0 %v1007
      %v1043 = vpop.f32.mrb[0].mxu0
      %v1044 = vadd.f32 0.0, %v1043
      %v1045 = vpop.f32.mrb[0].mxu0
      %v1046 = vpop.f32.mrb[0].mxu0
      %v1047 = vpop.f32.mrb[0].mxu0
      %1048 = vdwg.mxu0
      %v1049 = vpack.i.b16 %v808, %v808
      %v1050 = vlaneseq
      %v1051 = vshrl.u32 %v1050, 7
      %v1052 = vsub.s32 0, %v1051
      %v1053 = vrot.slane %v1049, %v1052
      %1055 = vmatprep.subr.bf16.mxu0 0
      %1056 = vmatpush1.bf16.xpose.msra.mxu0 %v741
      %1057 = vmatprep.subr.bf16.mxu0 0
      %1058 = vmatpush1.bf16.xpose.msra.mxu0 0
      %1059 = vmatprep.subr.bf16.mxu0 0
      %1060 = vmatpush1.bf16.xpose.msra.mxu0 0
      %1061 = vmatprep.subr.bf16.mxu0 0
      %1062 = vmatpush1.bf16.xpose.msra.mxu0 0
      %1063 = vmatprep.subr.bf16.mxu0 0
      %1064 = vmatpush1.bf16.xpose.msra.mxu0 0
      %1065 = vmatprep.subr.bf16.mxu0 0
      %1066 = vmatpush1.bf16.xpose.msra.mxu0 0
      %1067 = vmatprep.subr.bf16.mxu0 0
      %1068 = vmatpush1.bf16.xpose.msra.mxu0 0
      %1069 = vmatprep.subr.bf16.mxu0 0
      %1070 = vmatpush1.bf16.xpose.msra.mxu0 0
      %1071 = vmatprep.subr.bf16.mxu0 0
      %1072 = vmatpush1.bf16.xpose.msra.mxu0 0
      %1073 = vmatprep.subr.bf16.mxu0 0
      %1074 = vmatpush1.bf16.xpose.msra.mxu0 0
      %1075 = vmatprep.subr.bf16.mxu0 0
      %1076 = vmatpush1.bf16.xpose.msra.mxu0 0
      %1077 = vmatprep.subr.bf16.mxu0 0
      %1078 = vmatpush1.bf16.xpose.msra.mxu0 0
      %1079 = vmatprep.subr.bf16.mxu0 0
      %1080 = vmatpush1.bf16.xpose.msra.mxu0 0
      %1081 = vmatprep.subr.bf16.mxu0 0
      %1082 = vmatpush1.bf16.xpose.msra.mxu0 0
      %1083 = vmatprep.subr.bf16.mxu0 0
      %1084 = vmatpush1.bf16.xpose.msra.mxu0 0
      %1085 = vmatprep.subr.bf16.mxu0 0
      %1086 = vmatpush1.bf16.xpose.msra.mxu0 0
      %1087 = vmatprep.mubr.bf16.mxu0 0
      %1088 = vmatmul.mubr.bf16.gmra.mrb[0].mxu0 %v1053
      %v1089 = vpop.f32.mrb[0].mxu0
      %v1090 = vadd.f32 0.0, %v1089
      %v1091 = vpop.f32.mrb[0].mxu0
      %v1092 = vpop.f32.mrb[0].mxu0
      %v1093 = vpop.f32.mrb[0].mxu0
      %1094 = vdwg.mxu0
      %v1095 = vpack.i.b16 %v809, %v809
      %v1096 = vlaneseq
      %v1097 = vshrl.u32 %v1096, 7
      %v1098 = vsub.s32 0, %v1097
      %v1099 = vrot.slane %v1095, %v1098
      %1101 = vmatprep.subr.bf16.mxu0 0
      %1102 = vmatpush1.bf16.xpose.msra.mxu0 %v742
      %1103 = vmatprep.subr.bf16.mxu0 0
      %1104 = vmatpush1.bf16.xpose.msra.mxu0 0
      %1105 = vmatprep.subr.bf16.mxu0 0
      %1106 = vmatpush1.bf16.xpose.msra.mxu0 0
      %1107 = vmatprep.subr.bf16.mxu0 0
      %1108 = vmatpush1.bf16.xpose.msra.mxu0 0
      %1109 = vmatprep.subr.bf16.mxu0 0
      %1110 = vmatpush1.bf16.xpose.msra.mxu0 0
      %1111 = vmatprep.subr.bf16.mxu0 0
      %1112 = vmatpush1.bf16.xpose.msra.mxu0 0
      %1113 = vmatprep.subr.bf16.mxu0 0
      %1114 = vmatpush1.bf16.xpose.msra.mxu0 0
      %1115 = vmatprep.subr.bf16.mxu0 0
      %1116 = vmatpush1.bf16.xpose.msra.mxu0 0
      %1117 = vmatprep.subr.bf16.mxu0 0
      %1118 = vmatpush1.bf16.xpose.msra.mxu0 0
      %1119 = vmatprep.subr.bf16.mxu0 0
      %1120 = vmatpush1.bf16.xpose.msra.mxu0 0
      %1121 = vmatprep.subr.bf16.mxu0 0
      %1122 = vmatpush1.bf16.xpose.msra.mxu0 0
      %1123 = vmatprep.subr.bf16.mxu0 0
      %1124 = vmatpush1.bf16.xpose.msra.mxu0 0
      %1125 = vmatprep.subr.bf16.mxu0 0
      %1126 = vmatpush1.bf16.xpose.msra.mxu0 0
      %1127 = vmatprep.subr.bf16.mxu0 0
      %1128 = vmatpush1.bf16.xpose.msra.mxu0 0
      %1129 = vmatprep.subr.bf16.mxu0 0
      %1130 = vmatpush1.bf16.xpose.msra.mxu0 0
      %1131 = vmatprep.subr.bf16.mxu0 0
      %1132 = vmatpush1.bf16.xpose.msra.mxu0 0
      %1133 = vmatprep.mubr.bf16.mxu0 0
      %1134 = vmatmul.mubr.bf16.gmra.mrb[0].mxu0 %v1099
      %v1135 = vpop.f32.mrb[0].mxu0
      %v1136 = vadd.f32 0.0, %v1135
      %v1137 = vpop.f32.mrb[0].mxu0
      %v1138 = vpop.f32.mrb[0].mxu0
      %v1139 = vpop.f32.mrb[0].mxu0
      %1140 = vdwg.mxu0
      %v1141 = vpack.i.b16 %v810, %v810
      %v1142 = vlaneseq
      %v1143 = vshrl.u32 %v1142, 7
      %v1144 = vsub.s32 0, %v1143
      %v1145 = vrot.slane %v1141, %v1144
      %1147 = vmatprep.subr.bf16.mxu0 0
      %1148 = vmatpush1.bf16.xpose.msra.mxu0 %v743
      %1149 = vmatprep.subr.bf16.mxu0 0
      %1150 = vmatpush1.bf16.xpose.msra.mxu0 0
      %1151 = vmatprep.subr.bf16.mxu0 0
      %1152 = vmatpush1.bf16.xpose.msra.mxu0 0
      %1153 = vmatprep.subr.bf16.mxu0 0
      %1154 = vmatpush1.bf16.xpose.msra.mxu0 0
      %1155 = vmatprep.subr.bf16.mxu0 0
      %1156 = vmatpush1.bf16.xpose.msra.mxu0 0
      %1157 = vmatprep.subr.bf16.mxu0 0
      %1158 = vmatpush1.bf16.xpose.msra.mxu0 0
      %1159 = vmatprep.subr.bf16.mxu0 0
      %1160 = vmatpush1.bf16.xpose.msra.mxu0 0
      %1161 = vmatprep.subr.bf16.mxu0 0
      %1162 = vmatpush1.bf16.xpose.msra.mxu0 0
      %1163 = vmatprep.subr.bf16.mxu0 0
      %1164 = vmatpush1.bf16.xpose.msra.mxu0 0
      %1165 = vmatprep.subr.bf16.mxu0 0
      %1166 = vmatpush1.bf16.xpose.msra.mxu0 0
      %1167 = vmatprep.subr.bf16.mxu0 0
      %1168 = vmatpush1.bf16.xpose.msra.mxu0 0
      %1169 = vmatprep.subr.bf16.mxu0 0
      %1170 = vmatpush1.bf16.xpose.msra.mxu0 0
      %1171 = vmatprep.subr.bf16.mxu0 0
      %1172 = vmatpush1.bf16.xpose.msra.mxu0 0
      %1173 = vmatprep.subr.bf16.mxu0 0
      %1174 = vmatpush1.bf16.xpose.msra.mxu0 0
      %1175 = vmatprep.subr.bf16.mxu0 0
      %1176 = vmatpush1.bf16.xpose.msra.mxu0 0
      %1177 = vmatprep.subr.bf16.mxu0 0
      %1178 = vmatpush1.bf16.xpose.msra.mxu0 0
      %1179 = vmatprep.mubr.bf16.mxu0 0
      %1180 = vmatmul.mubr.bf16.gmra.mrb[0].mxu0 %v1145
      %v1181 = vpop.f32.mrb[0].mxu0
      %v1182 = vadd.f32 0.0, %v1181
      %v1183 = vpop.f32.mrb[0].mxu0
      %v1184 = vpop.f32.mrb[0].mxu0
      %v1185 = vpop.f32.mrb[0].mxu0
      %1186 = vdwg.mxu0
      %v1187 = vpack.i.b16 %v811, %v811
      %v1188 = vlaneseq
      %v1189 = vshrl.u32 %v1188, 7
      %v1190 = vsub.s32 0, %v1189
      %v1191 = vrot.slane %v1187, %v1190
      %1193 = vmatprep.subr.bf16.mxu0 0
      %1194 = vmatpush1.bf16.xpose.msra.mxu0 %v744
      %1195 = vmatprep.subr.bf16.mxu0 0
      %1196 = vmatpush1.bf16.xpose.msra.mxu0 0
      %1197 = vmatprep.subr.bf16.mxu0 0
      %1198 = vmatpush1.bf16.xpose.msra.mxu0 0
      %1199 = vmatprep.subr.bf16.mxu0 0
      %1200 = vmatpush1.bf16.xpose.msra.mxu0 0
      %1201 = vmatprep.subr.bf16.mxu0 0
      %1202 = vmatpush1.bf16.xpose.msra.mxu0 0
      %1203 = vmatprep.subr.bf16.mxu0 0
      %1204 = vmatpush1.bf16.xpose.msra.mxu0 0
      %1205 = vmatprep.subr.bf16.mxu0 0
      %1206 = vmatpush1.bf16.xpose.msra.mxu0 0
      %1207 = vmatprep.subr.bf16.mxu0 0
      %1208 = vmatpush1.bf16.xpose.msra.mxu0 0
      %1209 = vmatprep.subr.bf16.mxu0 0
      %1210 = vmatpush1.bf16.xpose.msra.mxu0 0
      %1211 = vmatprep.subr.bf16.mxu0 0
      %1212 = vmatpush1.bf16.xpose.msra.mxu0 0
      %1213 = vmatprep.subr.bf16.mxu0 0
      %1214 = vmatpush1.bf16.xpose.msra.mxu0 0
      %1215 = vmatprep.subr.bf16.mxu0 0
      %1216 = vmatpush1.bf16.xpose.msra.mxu0 0
      %1217 = vmatprep.subr.bf16.mxu0 0
      %1218 = vmatpush1.bf16.xpose.msra.mxu0 0
      %1219 = vmatprep.subr.bf16.mxu0 0
      %1220 = vmatpush1.bf16.xpose.msra.mxu0 0
      %1221 = vmatprep.subr.bf16.mxu0 0
      %1222 = vmatpush1.bf16.xpose.msra.mxu0 0
      %1223 = vmatprep.subr.bf16.mxu0 0
      %1224 = vmatpush1.bf16.xpose.msra.mxu0 0
      %1225 = vmatprep.mubr.bf16.mxu0 0
      %1226 = vmatmul.mubr.bf16.gmra.mrb[0].mxu0 %v1191
      %v1227 = vpop.f32.mrb[0].mxu0
      %v1228 = vadd.f32 0.0, %v1227
      %v1229 = vpop.f32.mrb[0].mxu0
      %v1230 = vpop.f32.mrb[0].mxu0
      %v1231 = vpop.f32.mrb[0].mxu0
      %1232 = vdwg.mxu0
      %v1233 = vpack.i.b16 %v812, %v812
      %v1234 = vlaneseq
      %v1235 = vshrl.u32 %v1234, 7
      %v1236 = vsub.s32 0, %v1235
      %v1237 = vrot.slane %v1233, %v1236
      %1239 = vmatprep.subr.bf16.mxu0 0
      %1240 = vmatpush1.bf16.xpose.msra.mxu0 %v745
      %1241 = vmatprep.subr.bf16.mxu0 0
      %1242 = vmatpush1.bf16.xpose.msra.mxu0 0
      %1243 = vmatprep.subr.bf16.mxu0 0
      %1244 = vmatpush1.bf16.xpose.msra.mxu0 0
      %1245 = vmatprep.subr.bf16.mxu0 0
      %1246 = vmatpush1.bf16.xpose.msra.mxu0 0
      %1247 = vmatprep.subr.bf16.mxu0 0
      %1248 = vmatpush1.bf16.xpose.msra.mxu0 0
      %1249 = vmatprep.subr.bf16.mxu0 0
      %1250 = vmatpush1.bf16.xpose.msra.mxu0 0
      %1251 = vmatprep.subr.bf16.mxu0 0
      %1252 = vmatpush1.bf16.xpose.msra.mxu0 0
      %1253 = vmatprep.subr.bf16.mxu0 0
      %1254 = vmatpush1.bf16.xpose.msra.mxu0 0
      %1255 = vmatprep.subr.bf16.mxu0 0
      %1256 = vmatpush1.bf16.xpose.msra.mxu0 0
      %1257 = vmatprep.subr.bf16.mxu0 0
      %1258 = vmatpush1.bf16.xpose.msra.mxu0 0
      %1259 = vmatprep.subr.bf16.mxu0 0
      %1260 = vmatpush1.bf16.xpose.msra.mxu0 0
      %1261 = vmatprep.subr.bf16.mxu0 0
      %1262 = vmatpush1.bf16.xpose.msra.mxu0 0
      %1263 = vmatprep.subr.bf16.mxu0 0
      %1264 = vmatpush1.bf16.xpose.msra.mxu0 0
      %1265 = vmatprep.subr.bf16.mxu0 0
      %1266 = vmatpush1.bf16.xpose.msra.mxu0 0
      %1267 = vmatprep.subr.bf16.mxu0 0
      %1268 = vmatpush1.bf16.xpose.msra.mxu0 0
      %1269 = vmatprep.subr.bf16.mxu0 0
      %1270 = vmatpush1.bf16.xpose.msra.mxu0 0
      %1271 = vmatprep.mubr.bf16.mxu0 0
      %1272 = vmatmul.mubr.bf16.gmra.mrb[0].mxu0 %v1237
      %v1273 = vpop.f32.mrb[0].mxu0
      %v1274 = vadd.f32 0.0, %v1273
      %v1275 = vpop.f32.mrb[0].mxu0
      %v1276 = vpop.f32.mrb[0].mxu0
      %v1277 = vpop.f32.mrb[0].mxu0
      %1278 = vdwg.mxu0
      %v1279 = vpack.i.b16 %v813, %v813
      %v1280 = vlaneseq
      %v1281 = vshrl.u32 %v1280, 7
      %v1282 = vsub.s32 0, %v1281
      %v1283 = vrot.slane %v1279, %v1282
      %1285 = vmatprep.subr.bf16.mxu0 0
      %1286 = vmatpush1.bf16.xpose.msra.mxu0 %v746
      %1287 = vmatprep.subr.bf16.mxu0 0
      %1288 = vmatpush1.bf16.xpose.msra.mxu0 0
      %1289 = vmatprep.subr.bf16.mxu0 0
      %1290 = vmatpush1.bf16.xpose.msra.mxu0 0
      %1291 = vmatprep.subr.bf16.mxu0 0
      %1292 = vmatpush1.bf16.xpose.msra.mxu0 0
      %1293 = vmatprep.subr.bf16.mxu0 0
      %1294 = vmatpush1.bf16.xpose.msra.mxu0 0
      %1295 = vmatprep.subr.bf16.mxu0 0
      %1296 = vmatpush1.bf16.xpose.msra.mxu0 0
      %1297 = vmatprep.subr.bf16.mxu0 0
      %1298 = vmatpush1.bf16.xpose.msra.mxu0 0
      %1299 = vmatprep.subr.bf16.mxu0 0
      %1300 = vmatpush1.bf16.xpose.msra.mxu0 0
      %1301 = vmatprep.subr.bf16.mxu0 0
      %1302 = vmatpush1.bf16.xpose.msra.mxu0 0
      %1303 = vmatprep.subr.bf16.mxu0 0
      %1304 = vmatpush1.bf16.xpose.msra.mxu0 0
      %1305 = vmatprep.subr.bf16.mxu0 0
      %1306 = vmatpush1.bf16.xpose.msra.mxu0 0
      %1307 = vmatprep.subr.bf16.mxu0 0
      %1308 = vmatpush1.bf16.xpose.msra.mxu0 0
      %1309 = vmatprep.subr.bf16.mxu0 0
      %1310 = vmatpush1.bf16.xpose.msra.mxu0 0
      %1311 = vmatprep.subr.bf16.mxu0 0
      %1312 = vmatpush1.bf16.xpose.msra.mxu0 0
      %1313 = vmatprep.subr.bf16.mxu0 0
      %1314 = vmatpush1.bf16.xpose.msra.mxu0 0
      %1315 = vmatprep.subr.bf16.mxu0 0
      %1316 = vmatpush1.bf16.xpose.msra.mxu0 0
      %1317 = vmatprep.mubr.bf16.mxu0 0
      %1318 = vmatmul.mubr.bf16.gmra.mrb[0].mxu0 %v1283
      %v1319 = vpop.f32.mrb[0].mxu0
      %v1320 = vadd.f32 0.0, %v1319
      %v1321 = vpop.f32.mrb[0].mxu0
      %v1322 = vpop.f32.mrb[0].mxu0
      %v1323 = vpop.f32.mrb[0].mxu0
      %1324 = vdwg.mxu0
      %v1325 = vpack.i.b16 %v814, %v814
      %v1326 = vlaneseq
      %v1327 = vshrl.u32 %v1326, 7
      %v1328 = vsub.s32 0, %v1327
      %v1329 = vrot.slane %v1325, %v1328
      %1331 = vmatprep.subr.bf16.mxu0 0
      %1332 = vmatpush1.bf16.xpose.msra.mxu0 %v747
      %1333 = vmatprep.subr.bf16.mxu0 0
      %1334 = vmatpush1.bf16.xpose.msra.mxu0 0
      %1335 = vmatprep.subr.bf16.mxu0 0
      %1336 = vmatpush1.bf16.xpose.msra.mxu0 0
      %1337 = vmatprep.subr.bf16.mxu0 0
      %1338 = vmatpush1.bf16.xpose.msra.mxu0 0
      %1339 = vmatprep.subr.bf16.mxu0 0
      %1340 = vmatpush1.bf16.xpose.msra.mxu0 0
      %1341 = vmatprep.subr.bf16.mxu0 0
      %1342 = vmatpush1.bf16.xpose.msra.mxu0 0
      %1343 = vmatprep.subr.bf16.mxu0 0
      %1344 = vmatpush1.bf16.xpose.msra.mxu0 0
      %1345 = vmatprep.subr.bf16.mxu0 0
      %1346 = vmatpush1.bf16.xpose.msra.mxu0 0
      %1347 = vmatprep.subr.bf16.mxu0 0
      %1348 = vmatpush1.bf16.xpose.msra.mxu0 0
      %1349 = vmatprep.subr.bf16.mxu0 0
      %1350 = vmatpush1.bf16.xpose.msra.mxu0 0
      %1351 = vmatprep.subr.bf16.mxu0 0
      %1352 = vmatpush1.bf16.xpose.msra.mxu0 0
      %1353 = vmatprep.subr.bf16.mxu0 0
      %1354 = vmatpush1.bf16.xpose.msra.mxu0 0
      %1355 = vmatprep.subr.bf16.mxu0 0
      %1356 = vmatpush1.bf16.xpose.msra.mxu0 0
      %1357 = vmatprep.subr.bf16.mxu0 0
      %1358 = vmatpush1.bf16.xpose.msra.mxu0 0
      %1359 = vmatprep.subr.bf16.mxu0 0
      %1360 = vmatpush1.bf16.xpose.msra.mxu0 0
      %1361 = vmatprep.subr.bf16.mxu0 0
      %1362 = vmatpush1.bf16.xpose.msra.mxu0 0
      %1363 = vmatprep.mubr.bf16.mxu0 0
      %1364 = vmatmul.mubr.bf16.gmra.mrb[0].mxu0 %v1329
      %v1365 = vpop.f32.mrb[0].mxu0
      %v1366 = vadd.f32 0.0, %v1365
      %v1367 = vpop.f32.mrb[0].mxu0
      %v1368 = vpop.f32.mrb[0].mxu0
      %v1369 = vpop.f32.mrb[0].mxu0
      %1370 = vdwg.mxu0
      %v1371 = vpack.i.b16 %v815, %v815
      %v1372 = vlaneseq
      %v1373 = vshrl.u32 %v1372, 7
      %v1374 = vsub.s32 0, %v1373
      %v1375 = vrot.slane %v1371, %v1374
      %1377 = vmatprep.subr.bf16.mxu0 0
      %1378 = vmatpush1.bf16.xpose.msra.mxu0 %v748
      %1379 = vmatprep.subr.bf16.mxu0 0
      %1380 = vmatpush1.bf16.xpose.msra.mxu0 0
      %1381 = vmatprep.subr.bf16.mxu0 0
      %1382 = vmatpush1.bf16.xpose.msra.mxu0 0
      %1383 = vmatprep.subr.bf16.mxu0 0
      %1384 = vmatpush1.bf16.xpose.msra.mxu0 0
      %1385 = vmatprep.subr.bf16.mxu0 0
      %1386 = vmatpush1.bf16.xpose.msra.mxu0 0
      %1387 = vmatprep.subr.bf16.mxu0 0
      %1388 = vmatpush1.bf16.xpose.msra.mxu0 0
      %1389 = vmatprep.subr.bf16.mxu0 0
      %1390 = vmatpush1.bf16.xpose.msra.mxu0 0
      %1391 = vmatprep.subr.bf16.mxu0 0
      %1392 = vmatpush1.bf16.xpose.msra.mxu0 0
      %1393 = vmatprep.subr.bf16.mxu0 0
      %1394 = vmatpush1.bf16.xpose.msra.mxu0 0
      %1395 = vmatprep.subr.bf16.mxu0 0
      %1396 = vmatpush1.bf16.xpose.msra.mxu0 0
      %1397 = vmatprep.subr.bf16.mxu0 0
      %1398 = vmatpush1.bf16.xpose.msra.mxu0 0
      %1399 = vmatprep.subr.bf16.mxu0 0
      %1400 = vmatpush1.bf16.xpose.msra.mxu0 0
      %1401 = vmatprep.subr.bf16.mxu0 0
      %1402 = vmatpush1.bf16.xpose.msra.mxu0 0
      %1403 = vmatprep.subr.bf16.mxu0 0
      %1404 = vmatpush1.bf16.xpose.msra.mxu0 0
      %1405 = vmatprep.subr.bf16.mxu0 0
      %1406 = vmatpush1.bf16.xpose.msra.mxu0 0
      %1407 = vmatprep.subr.bf16.mxu0 0
      %1408 = vmatpush1.bf16.xpose.msra.mxu0 0
      %1409 = vmatprep.mubr.bf16.mxu0 0
      %1410 = vmatmul.mubr.bf16.gmra.mrb[0].mxu0 %v1375
      %v1411 = vpop.f32.mrb[0].mxu0
      %v1412 = vadd.f32 0.0, %v1411
      %v1413 = vpop.f32.mrb[0].mxu0
      %v1414 = vpop.f32.mrb[0].mxu0
      %v1415 = vpop.f32.mrb[0].mxu0
      %1416 = vdwg.mxu0
      %v1417 = vpack.i.b16 %v816, %v816
      %v1418 = vlaneseq
      %v1419 = vshrl.u32 %v1418, 7
      %v1420 = vsub.s32 0, %v1419
      %v1421 = vrot.slane %v1417, %v1420
      %1423 = vmatprep.subr.bf16.mxu0 0
      %1424 = vmatpush1.bf16.xpose.msra.mxu0 %v749
      %1425 = vmatprep.subr.bf16.mxu0 0
      %1426 = vmatpush1.bf16.xpose.msra.mxu0 0
      %1427 = vmatprep.subr.bf16.mxu0 0
      %1428 = vmatpush1.bf16.xpose.msra.mxu0 0
      %1429 = vmatprep.subr.bf16.mxu0 0
      %1430 = vmatpush1.bf16.xpose.msra.mxu0 0
      %1431 = vmatprep.subr.bf16.mxu0 0
      %1432 = vmatpush1.bf16.xpose.msra.mxu0 0
      %1433 = vmatprep.subr.bf16.mxu0 0
      %1434 = vmatpush1.bf16.xpose.msra.mxu0 0
      %1435 = vmatprep.subr.bf16.mxu0 0
      %1436 = vmatpush1.bf16.xpose.msra.mxu0 0
      %1437 = vmatprep.subr.bf16.mxu0 0
      %1438 = vmatpush1.bf16.xpose.msra.mxu0 0
      %1439 = vmatprep.subr.bf16.mxu0 0
      %1440 = vmatpush1.bf16.xpose.msra.mxu0 0
      %1441 = vmatprep.subr.bf16.mxu0 0
      %1442 = vmatpush1.bf16.xpose.msra.mxu0 0
      %1443 = vmatprep.subr.bf16.mxu0 0
      %1444 = vmatpush1.bf16.xpose.msra.mxu0 0
      %1445 = vmatprep.subr.bf16.mxu0 0
      %1446 = vmatpush1.bf16.xpose.msra.mxu0 0
      %1447 = vmatprep.subr.bf16.mxu0 0
      %1448 = vmatpush1.bf16.xpose.msra.mxu0 0
      %1449 = vmatprep.subr.bf16.mxu0 0
      %1450 = vmatpush1.bf16.xpose.msra.mxu0 0
      %1451 = vmatprep.subr.bf16.mxu0 0
      %1452 = vmatpush1.bf16.xpose.msra.mxu0 0
      %1453 = vmatprep.subr.bf16.mxu0 0
      %1454 = vmatpush1.bf16.xpose.msra.mxu0 0
      %1455 = vmatprep.mubr.bf16.mxu0 0
      %1456 = vmatmul.mubr.bf16.gmra.mrb[0].mxu0 %v1421
      %v1457 = vpop.f32.mrb[0].mxu0
      %v1458 = vadd.f32 0.0, %v1457
      %v1459 = vpop.f32.mrb[0].mxu0
      %v1460 = vpop.f32.mrb[0].mxu0
      %v1461 = vpop.f32.mrb[0].mxu0
      %1462 = vdwg.mxu0
      %v1463 = vpack.i.b16 %v817, %v817
      %v1464 = vlaneseq
      %v1465 = vshrl.u32 %v1464, 7
      %v1466 = vsub.s32 0, %v1465
      %v1467 = vrot.slane %v1463, %v1466
      %1469 = vmatprep.subr.bf16.mxu0 0
      %1470 = vmatpush1.bf16.xpose.msra.mxu0 %v750
      %1471 = vmatprep.subr.bf16.mxu0 0
      %1472 = vmatpush1.bf16.xpose.msra.mxu0 0
      %1473 = vmatprep.subr.bf16.mxu0 0
      %1474 = vmatpush1.bf16.xpose.msra.mxu0 0
      %1475 = vmatprep.subr.bf16.mxu0 0
      %1476 = vmatpush1.bf16.xpose.msra.mxu0 0
      %1477 = vmatprep.subr.bf16.mxu0 0
      %1478 = vmatpush1.bf16.xpose.msra.mxu0 0
      %1479 = vmatprep.subr.bf16.mxu0 0
      %1480 = vmatpush1.bf16.xpose.msra.mxu0 0
      %1481 = vmatprep.subr.bf16.mxu0 0
      %1482 = vmatpush1.bf16.xpose.msra.mxu0 0
      %1483 = vmatprep.subr.bf16.mxu0 0
      %1484 = vmatpush1.bf16.xpose.msra.mxu0 0
      %1485 = vmatprep.subr.bf16.mxu0 0
      %1486 = vmatpush1.bf16.xpose.msra.mxu0 0
      %1487 = vmatprep.subr.bf16.mxu0 0
      %1488 = vmatpush1.bf16.xpose.msra.mxu0 0
      %1489 = vmatprep.subr.bf16.mxu0 0
      %1490 = vmatpush1.bf16.xpose.msra.mxu0 0
      %1491 = vmatprep.subr.bf16.mxu0 0
      %1492 = vmatpush1.bf16.xpose.msra.mxu0 0
      %1493 = vmatprep.subr.bf16.mxu0 0
      %1494 = vmatpush1.bf16.xpose.msra.mxu0 0
      %1495 = vmatprep.subr.bf16.mxu0 0
      %1496 = vmatpush1.bf16.xpose.msra.mxu0 0
      %1497 = vmatprep.subr.bf16.mxu0 0
      %1498 = vmatpush1.bf16.xpose.msra.mxu0 0
      %1499 = vmatprep.subr.bf16.mxu0 0
      %1500 = vmatpush1.bf16.xpose.msra.mxu0 0
      %1501 = vmatprep.mubr.bf16.mxu0 0
      %1502 = vmatmul.mubr.bf16.gmra.mrb[0].mxu0 %v1467
      %v1503 = vpop.f32.mrb[0].mxu0
      %v1504 = vadd.f32 0.0, %v1503
      %v1505 = vpop.f32.mrb[0].mxu0
      %v1506 = vpop.f32.mrb[0].mxu0
      %v1507 = vpop.f32.mrb[0].mxu0
      %1508 = vdwg.mxu0
      %v1509 = vpack.i.b16 %v818, %v818
      %v1510 = vlaneseq
      %v1511 = vshrl.u32 %v1510, 7
      %v1512 = vsub.s32 0, %v1511
      %v1513 = vrot.slane %v1509, %v1512
      %1515 = vmatprep.subr.bf16.mxu0 0
      %1516 = vmatpush1.bf16.xpose.msra.mxu0 %v751
      %1517 = vmatprep.subr.bf16.mxu0 0
      %1518 = vmatpush1.bf16.xpose.msra.mxu0 0
      %1519 = vmatprep.subr.bf16.mxu0 0
      %1520 = vmatpush1.bf16.xpose.msra.mxu0 0
      %1521 = vmatprep.subr.bf16.mxu0 0
      %1522 = vmatpush1.bf16.xpose.msra.mxu0 0
      %1523 = vmatprep.subr.bf16.mxu0 0
      %1524 = vmatpush1.bf16.xpose.msra.mxu0 0
      %1525 = vmatprep.subr.bf16.mxu0 0
      %1526 = vmatpush1.bf16.xpose.msra.mxu0 0
      %1527 = vmatprep.subr.bf16.mxu0 0
      %1528 = vmatpush1.bf16.xpose.msra.mxu0 0
      %1529 = vmatprep.subr.bf16.mxu0 0
      %1530 = vmatpush1.bf16.xpose.msra.mxu0 0
      %1531 = vmatprep.subr.bf16.mxu0 0
      %1532 = vmatpush1.bf16.xpose.msra.mxu0 0
      %1533 = vmatprep.subr.bf16.mxu0 0
      %1534 = vmatpush1.bf16.xpose.msra.mxu0 0
      %1535 = vmatprep.subr.bf16.mxu0 0
      %1536 = vmatpush1.bf16.xpose.msra.mxu0 0
      %1537 = vmatprep.subr.bf16.mxu0 0
      %1538 = vmatpush1.bf16.xpose.msra.mxu0 0
      %1539 = vmatprep.subr.bf16.mxu0 0
      %1540 = vmatpush1.bf16.xpose.msra.mxu0 0
      %1541 = vmatprep.subr.bf16.mxu0 0
      %1542 = vmatpush1.bf16.xpose.msra.mxu0 0
      %1543 = vmatprep.subr.bf16.mxu0 0
      %1544 = vmatpush1.bf16.xpose.msra.mxu0 0
      %1545 = vmatprep.subr.bf16.mxu0 0
      %1546 = vmatpush1.bf16.xpose.msra.mxu0 0
      %1547 = vmatprep.mubr.bf16.mxu0 0
      %1548 = vmatmul.mubr.bf16.gmra.mrb[0].mxu0 %v1513
      %v1549 = vpop.f32.mrb[0].mxu0
      %v1550 = vadd.f32 0.0, %v1549
      %v1551 = vpop.f32.mrb[0].mxu0
      %v1552 = vpop.f32.mrb[0].mxu0
      %v1553 = vpop.f32.mrb[0].mxu0
      %1554 = vdwg.mxu0
      %vm1555 = vcmask 57344
      %v1556 = vsel %vm1555, %v860, -inf
      %1557 = vmax.xlane.f32.xlu0 %v1556
      %v1558 = vpop.xlane.xlu0 %1557
      %v1559 = vsel %vm1555, %v906, -inf
      %1560 = vmax.xlane.f32.xlu0 %v1559
      %v1561 = vpop.xlane.xlu0 %1560
      %v1562 = vsel %vm1555, %v952, -inf
      %1563 = vmax.xlane.f32.xlu0 %v1562
      %v1564 = vpop.xlane.xlu0 %1563
      %v1565 = vsel %vm1555, %v998, -inf
      %1566 = vmax.xlane.f32.xlu0 %v1565
      %v1567 = vpop.xlane.xlu0 %1566
      %v1568 = vsel %vm1555, %v1044, -inf
      %1569 = vmax.xlane.f32.xlu0 %v1568
      %v1570 = vpop.xlane.xlu0 %1569
      %v1571 = vsel %vm1555, %v1090, -inf
      %1572 = vmax.xlane.f32.xlu0 %v1571
      %v1573 = vpop.xlane.xlu0 %1572
      %v1574 = vsel %vm1555, %v1136, -inf
      %1575 = vmax.xlane.f32.xlu0 %v1574
      %v1576 = vpop.xlane.xlu0 %1575
      %v1577 = vsel %vm1555, %v1182, -inf
      %1578 = vmax.xlane.f32.xlu0 %v1577
      %v1579 = vpop.xlane.xlu0 %1578
      %v1580 = vsel %vm1555, %v1228, -inf
      %1581 = vmax.xlane.f32.xlu0 %v1580
      %v1582 = vpop.xlane.xlu0 %1581
      %v1583 = vsel %vm1555, %v1274, -inf
      %1584 = vmax.xlane.f32.xlu0 %v1583
      %v1585 = vpop.xlane.xlu0 %1584
      %v1586 = vsel %vm1555, %v1320, -inf
      %1587 = vmax.xlane.f32.xlu0 %v1586
      %v1588 = vpop.xlane.xlu0 %1587
      %v1589 = vsel %vm1555, %v1366, -inf
      %1590 = vmax.xlane.f32.xlu0 %v1589
      %v1591 = vpop.xlane.xlu0 %1590
      %v1592 = vsel %vm1555, %v1412, -inf
      %1593 = vmax.xlane.f32.xlu0 %v1592
      %v1594 = vpop.xlane.xlu0 %1593
      %v1595 = vsel %vm1555, %v1458, -inf
      %1596 = vmax.xlane.f32.xlu0 %v1595
      %v1597 = vpop.xlane.xlu0 %1596
      %v1598 = vsel %vm1555, %v1504, -inf
      %1599 = vmax.xlane.f32.xlu0 %v1598
      %v1600 = vpop.xlane.xlu0 %1599
      %v1601 = vsel %vm1555, %v1550, -inf
      %1602 = vmax.xlane.f32.xlu0 %v1601
      %v1603 = vpop.xlane.xlu0 %1602
      %v1604 = vsub.f32 %v860, %v1558
      %v1605 = vsub.f32 %v906, %v1561
      %v1606 = vsub.f32 %v952, %v1564
      %v1607 = vsub.f32 %v998, %v1567
      %v1608 = vsub.f32 %v1044, %v1570
      %v1609 = vsub.f32 %v1090, %v1573
      %v1610 = vsub.f32 %v1136, %v1576
      %v1611 = vsub.f32 %v1182, %v1579
      %v1612 = vsub.f32 %v1228, %v1582
      %v1613 = vsub.f32 %v1274, %v1585
      %v1614 = vsub.f32 %v1320, %v1588
      %v1615 = vsub.f32 %v1366, %v1591
      %v1616 = vsub.f32 %v1412, %v1594
      %v1617 = vsub.f32 %v1458, %v1597
      %v1618 = vsub.f32 %v1504, %v1600
      %v1619 = vsub.f32 %v1550, %v1603
      %v1620 = vmul.f32 %v1604, 1.442695
      %v1621 = vpow.pop %v1620
      %v1622 = vmul.f32 %v1605, 1.442695
      %v1623 = vpow.pop %v1622
      %v1624 = vmul.f32 %v1606, 1.442695
      %v1625 = vpow.pop %v1624
      %v1626 = vmul.f32 %v1607, 1.442695
      %v1627 = vpow.pop %v1626
      %v1628 = vmul.f32 %v1608, 1.442695
      %v1629 = vpow.pop %v1628
      %v1630 = vmul.f32 %v1609, 1.442695
      %v1631 = vpow.pop %v1630
      %v1632 = vmul.f32 %v1610, 1.442695
      %v1633 = vpow.pop %v1632
      %v1634 = vmul.f32 %v1611, 1.442695
      %v1635 = vpow.pop %v1634
      %v1636 = vmul.f32 %v1612, 1.442695
      %v1637 = vpow.pop %v1636
      %v1638 = vmul.f32 %v1613, 1.442695
      %v1639 = vpow.pop %v1638
      %v1640 = vmul.f32 %v1614, 1.442695
      %v1641 = vpow.pop %v1640
      %v1642 = vmul.f32 %v1615, 1.442695
      %v1643 = vpow.pop %v1642
      %v1644 = vmul.f32 %v1616, 1.442695
      %v1645 = vpow.pop %v1644
      %v1646 = vmul.f32 %v1617, 1.442695
      %v1647 = vpow.pop %v1646
      %v1648 = vmul.f32 %v1618, 1.442695
      %v1649 = vpow.pop %v1648
      %v1650 = vmul.f32 %v1619, 1.442695
      %v1651 = vpow.pop %v1650
      %v1652 = vsel %vm1555, %v1621, 0.0
      %1653 = vadd.xlane.f32.xlu0 %v1652
      %v1654 = vpop.xlane.xlu0 %1653
      %v1655 = vsel %vm1555, %v1623, 0.0
      %1656 = vadd.xlane.f32.xlu0 %v1655
      %v1657 = vpop.xlane.xlu0 %1656
      %v1658 = vsel %vm1555, %v1625, 0.0
      %1659 = vadd.xlane.f32.xlu0 %v1658
      %v1660 = vpop.xlane.xlu0 %1659
      %v1661 = vsel %vm1555, %v1627, 0.0
      %1662 = vadd.xlane.f32.xlu0 %v1661
      %v1663 = vpop.xlane.xlu0 %1662
      %v1664 = vsel %vm1555, %v1629, 0.0
      %1665 = vadd.xlane.f32.xlu0 %v1664
      %v1666 = vpop.xlane.xlu0 %1665
      %v1667 = vsel %vm1555, %v1631, 0.0
      %1668 = vadd.xlane.f32.xlu0 %v1667
      %v1669 = vpop.xlane.xlu0 %1668
      %v1670 = vsel %vm1555, %v1633, 0.0
      %1671 = vadd.xlane.f32.xlu0 %v1670
      %v1672 = vpop.xlane.xlu0 %1671
      %v1673 = vsel %vm1555, %v1635, 0.0
      %1674 = vadd.xlane.f32.xlu0 %v1673
      %v1675 = vpop.xlane.xlu0 %1674
      %v1676 = vsel %vm1555, %v1637, 0.0
      %1677 = vadd.xlane.f32.xlu0 %v1676
      %v1678 = vpop.xlane.xlu0 %1677
      %v1679 = vsel %vm1555, %v1639, 0.0
      %1680 = vadd.xlane.f32.xlu0 %v1679
      %v1681 = vpop.xlane.xlu0 %1680
      %v1682 = vsel %vm1555, %v1641, 0.0
      %1683 = vadd.xlane.f32.xlu0 %v1682
      %v1684 = vpop.xlane.xlu0 %1683
      %v1685 = vsel %vm1555, %v1643, 0.0
      %1686 = vadd.xlane.f32.xlu0 %v1685
      %v1687 = vpop.xlane.xlu0 %1686
      %v1688 = vsel %vm1555, %v1645, 0.0
      %1689 = vadd.xlane.f32.xlu0 %v1688
      %v1690 = vpop.xlane.xlu0 %1689
      %v1691 = vsel %vm1555, %v1647, 0.0
      %1692 = vadd.xlane.f32.xlu0 %v1691
      %v1693 = vpop.xlane.xlu0 %1692
      %v1694 = vsel %vm1555, %v1649, 0.0
      %1695 = vadd.xlane.f32.xlu0 %v1694
      %v1696 = vpop.xlane.xlu0 %1695
      %v1697 = vsel %vm1555, %v1651, 0.0
      %1698 = vadd.xlane.f32.xlu0 %v1697
      %v1699 = vpop.xlane.xlu0 %1698
      %v1700 = vrcp.pop %v1654
      %v1701 = vrcp.pop %v1657
      %v1702 = vrcp.pop %v1660
      %v1703 = vrcp.pop %v1663
      %v1704 = vrcp.pop %v1666
      %v1705 = vrcp.pop %v1669
      %v1706 = vrcp.pop %v1672
      %v1707 = vrcp.pop %v1675
      %v1708 = vrcp.pop %v1678
      %v1709 = vrcp.pop %v1681
      %v1710 = vrcp.pop %v1684
      %v1711 = vrcp.pop %v1687
      %v1712 = vrcp.pop %v1690
      %v1713 = vrcp.pop %v1693
      %v1714 = vrcp.pop %v1696
      %v1715 = vrcp.pop %v1699
      %v1716 = vmul.f32 %v1621, %v1700
      %v1717 = vmul.f32 %v1623, %v1701
      %v1718 = vmul.f32 %v1625, %v1702
      %v1719 = vmul.f32 %v1627, %v1703
      %v1720 = vmul.f32 %v1629, %v1704
      %v1721 = vmul.f32 %v1631, %v1705
      %v1722 = vmul.f32 %v1633, %v1706
      %v1723 = vmul.f32 %v1635, %v1707
      %v1724 = vmul.f32 %v1637, %v1708
      %v1725 = vmul.f32 %v1639, %v1709
      %v1726 = vmul.f32 %v1641, %v1710
      %v1727 = vmul.f32 %v1643, %v1711
      %v1728 = vmul.f32 %v1645, %v1712
      %v1729 = vmul.f32 %v1647, %v1713
      %v1730 = vmul.f32 %v1649, %v1714
      %v1731 = vmul.f32 %v1651, %v1715
      %v1732 = vpack.c.bf16 %v1716, %v1716
      %v1733 = vpack.c.bf16 %v1717, %v1717
      %v1734 = vpack.c.bf16 %v1718, %v1718
      %v1735 = vpack.c.bf16 %v1719, %v1719
      %v1736 = vpack.c.bf16 %v1720, %v1720
      %v1737 = vpack.c.bf16 %v1721, %v1721
      %v1738 = vpack.c.bf16 %v1722, %v1722
      %v1739 = vpack.c.bf16 %v1723, %v1723
      %v1740 = vpack.c.bf16 %v1724, %v1724
      %v1741 = vpack.c.bf16 %v1725, %v1725
      %v1742 = vpack.c.bf16 %v1726, %v1726
      %v1743 = vpack.c.bf16 %v1727, %v1727
      %v1744 = vpack.c.bf16 %v1728, %v1728
      %v1745 = vpack.c.bf16 %v1729, %v1729
      %v1746 = vpack.c.bf16 %v1730, %v1730
      %v1747 = vpack.c.bf16 %v1731, %v1731
      %vm1748 = vcmask 64512
      %v1750 = vsel %vm1748, %v1732, 0
      %vm1752 = vcmask 1043456
      %v1754 = vsel %vm1752, %v736, 0
      %1756 = vmatprep.subr.bf16.mxu0 0
      %1757 = vmatpush1.bf16.msra.mxu0 %v1754
      %1758 = vmatprep.subr.bf16.mxu0 0
      %1759 = vmatpush1.bf16.msra.mxu0 0
      %1760 = vmatprep.subr.bf16.mxu0 0
      %1761 = vmatpush1.bf16.msra.mxu0 0
      %1762 = vmatprep.subr.bf16.mxu0 0
      %1763 = vmatpush1.bf16.msra.mxu0 0
      %1764 = vmatprep.subr.bf16.mxu0 0
      %1765 = vmatpush1.bf16.msra.mxu0 0
      %1766 = vmatprep.subr.bf16.mxu0 0
      %1767 = vmatpush1.bf16.msra.mxu0 0
      %1768 = vmatprep.subr.bf16.mxu0 0
      %1769 = vmatpush1.bf16.msra.mxu0 0
      %1770 = vmatprep.subr.bf16.mxu0 0
      %1771 = vmatpush1.bf16.msra.mxu0 0
      %1772 = vmatprep.subr.bf16.mxu0 0
      %1773 = vmatpush1.bf16.msra.mxu0 0
      %1774 = vmatprep.subr.bf16.mxu0 0
      %1775 = vmatpush1.bf16.msra.mxu0 0
      %1776 = vmatprep.subr.bf16.mxu0 0
      %1777 = vmatpush1.bf16.msra.mxu0 0
      %1778 = vmatprep.subr.bf16.mxu0 0
      %1779 = vmatpush1.bf16.msra.mxu0 0
      %1780 = vmatprep.subr.bf16.mxu0 0
      %1781 = vmatpush1.bf16.msra.mxu0 0
      %1782 = vmatprep.subr.bf16.mxu0 0
      %1783 = vmatpush1.bf16.msra.mxu0 0
      %1784 = vmatprep.subr.bf16.mxu0 0
      %1785 = vmatpush1.bf16.msra.mxu0 0
      %1786 = vmatprep.subr.bf16.mxu0 0
      %1787 = vmatpush1.bf16.msra.mxu0 0
      %1788 = vmatprep.mubr.bf16.mxu0 0
      %1789 = vmatmul.mubr.bf16.gmra.mrb[0].mxu0 %v1750
      %v1790 = vpop.f32.mrb[0].mxu0
      %v1791 = vadd.f32 0.0, %v1790
      %v1792 = vpop.f32.mrb[0].mxu0
      %v1793 = vpop.f32.mrb[0].mxu0
      %v1794 = vpop.f32.mrb[0].mxu0
      %1795 = vdwg.mxu0
      %v1797 = vsel %vm1748, %v1733, 0
      %v1800 = vsel %vm1752, %v737, 0
      %1802 = vmatprep.subr.bf16.mxu0 0
      %1803 = vmatpush1.bf16.msra.mxu0 %v1800
      %1804 = vmatprep.subr.bf16.mxu0 0
      %1805 = vmatpush1.bf16.msra.mxu0 0
      %1806 = vmatprep.subr.bf16.mxu0 0
      %1807 = vmatpush1.bf16.msra.mxu0 0
      %1808 = vmatprep.subr.bf16.mxu0 0
      %1809 = vmatpush1.bf16.msra.mxu0 0
      %1810 = vmatprep.subr.bf16.mxu0 0
      %1811 = vmatpush1.bf16.msra.mxu0 0
      %1812 = vmatprep.subr.bf16.mxu0 0
      %1813 = vmatpush1.bf16.msra.mxu0 0
      %1814 = vmatprep.subr.bf16.mxu0 0
      %1815 = vmatpush1.bf16.msra.mxu0 0
      %1816 = vmatprep.subr.bf16.mxu0 0
      %1817 = vmatpush1.bf16.msra.mxu0 0
      %1818 = vmatprep.subr.bf16.mxu0 0
      %1819 = vmatpush1.bf16.msra.mxu0 0
      %1820 = vmatprep.subr.bf16.mxu0 0
      %1821 = vmatpush1.bf16.msra.mxu0 0
      %1822 = vmatprep.subr.bf16.mxu0 0
      %1823 = vmatpush1.bf16.msra.mxu0 0
      %1824 = vmatprep.subr.bf16.mxu0 0
      %1825 = vmatpush1.bf16.msra.mxu0 0
      %1826 = vmatprep.subr.bf16.mxu0 0
      %1827 = vmatpush1.bf16.msra.mxu0 0
      %1828 = vmatprep.subr.bf16.mxu0 0
      %1829 = vmatpush1.bf16.msra.mxu0 0
      %1830 = vmatprep.subr.bf16.mxu0 0
      %1831 = vmatpush1.bf16.msra.mxu0 0
      %1832 = vmatprep.subr.bf16.mxu0 0
      %1833 = vmatpush1.bf16.msra.mxu0 0
      %1834 = vmatprep.mubr.bf16.mxu0 0
      %1835 = vmatmul.mubr.bf16.gmra.mrb[0].mxu0 %v1797
      %v1836 = vpop.f32.mrb[0].mxu0
      %v1837 = vadd.f32 0.0, %v1836
      %v1838 = vpop.f32.mrb[0].mxu0
      %v1839 = vpop.f32.mrb[0].mxu0
      %v1840 = vpop.f32.mrb[0].mxu0
      %1841 = vdwg.mxu0
      %v1843 = vsel %vm1748, %v1734, 0
      %v1846 = vsel %vm1752, %v738, 0
      %1848 = vmatprep.subr.bf16.mxu0 0
      %1849 = vmatpush1.bf16.msra.mxu0 %v1846
      %1850 = vmatprep.subr.bf16.mxu0 0
      %1851 = vmatpush1.bf16.msra.mxu0 0
      %1852 = vmatprep.subr.bf16.mxu0 0
      %1853 = vmatpush1.bf16.msra.mxu0 0
      %1854 = vmatprep.subr.bf16.mxu0 0
      %1855 = vmatpush1.bf16.msra.mxu0 0
      %1856 = vmatprep.subr.bf16.mxu0 0
      %1857 = vmatpush1.bf16.msra.mxu0 0
      %1858 = vmatprep.subr.bf16.mxu0 0
      %1859 = vmatpush1.bf16.msra.mxu0 0
      %1860 = vmatprep.subr.bf16.mxu0 0
      %1861 = vmatpush1.bf16.msra.mxu0 0
      %1862 = vmatprep.subr.bf16.mxu0 0
      %1863 = vmatpush1.bf16.msra.mxu0 0
      %1864 = vmatprep.subr.bf16.mxu0 0
      %1865 = vmatpush1.bf16.msra.mxu0 0
      %1866 = vmatprep.subr.bf16.mxu0 0
      %1867 = vmatpush1.bf16.msra.mxu0 0
      %1868 = vmatprep.subr.bf16.mxu0 0
      %1869 = vmatpush1.bf16.msra.mxu0 0
      %1870 = vmatprep.subr.bf16.mxu0 0
      %1871 = vmatpush1.bf16.msra.mxu0 0
      %1872 = vmatprep.subr.bf16.mxu0 0
      %1873 = vmatpush1.bf16.msra.mxu0 0
      %1874 = vmatprep.subr.bf16.mxu0 0
      %1875 = vmatpush1.bf16.msra.mxu0 0
      %1876 = vmatprep.subr.bf16.mxu0 0
      %1877 = vmatpush1.bf16.msra.mxu0 0
      %1878 = vmatprep.subr.bf16.mxu0 0
      %1879 = vmatpush1.bf16.msra.mxu0 0
      %1880 = vmatprep.mubr.bf16.mxu0 0
      %1881 = vmatmul.mubr.bf16.gmra.mrb[0].mxu0 %v1843
      %v1882 = vpop.f32.mrb[0].mxu0
      %v1883 = vadd.f32 0.0, %v1882
      %v1884 = vpop.f32.mrb[0].mxu0
      %v1885 = vpop.f32.mrb[0].mxu0
      %v1886 = vpop.f32.mrb[0].mxu0
      %1887 = vdwg.mxu0
      %v1889 = vsel %vm1748, %v1735, 0
      %v1892 = vsel %vm1752, %v739, 0
      %1894 = vmatprep.subr.bf16.mxu0 0
      %1895 = vmatpush1.bf16.msra.mxu0 %v1892
      %1896 = vmatprep.subr.bf16.mxu0 0
      %1897 = vmatpush1.bf16.msra.mxu0 0
      %1898 = vmatprep.subr.bf16.mxu0 0
      %1899 = vmatpush1.bf16.msra.mxu0 0
      %1900 = vmatprep.subr.bf16.mxu0 0
      %1901 = vmatpush1.bf16.msra.mxu0 0
      %1902 = vmatprep.subr.bf16.mxu0 0
      %1903 = vmatpush1.bf16.msra.mxu0 0
      %1904 = vmatprep.subr.bf16.mxu0 0
      %1905 = vmatpush1.bf16.msra.mxu0 0
      %1906 = vmatprep.subr.bf16.mxu0 0
      %1907 = vmatpush1.bf16.msra.mxu0 0
      %1908 = vmatprep.subr.bf16.mxu0 0
      %1909 = vmatpush1.bf16.msra.mxu0 0
      %1910 = vmatprep.subr.bf16.mxu0 0
      %1911 = vmatpush1.bf16.msra.mxu0 0
      %1912 = vmatprep.subr.bf16.mxu0 0
      %1913 = vmatpush1.bf16.msra.mxu0 0
      %1914 = vmatprep.subr.bf16.mxu0 0
      %1915 = vmatpush1.bf16.msra.mxu0 0
      %1916 = vmatprep.subr.bf16.mxu0 0
      %1917 = vmatpush1.bf16.msra.mxu0 0
      %1918 = vmatprep.subr.bf16.mxu0 0
      %1919 = vmatpush1.bf16.msra.mxu0 0
      %1920 = vmatprep.subr.bf16.mxu0 0
      %1921 = vmatpush1.bf16.msra.mxu0 0
      %1922 = vmatprep.subr.bf16.mxu0 0
      %1923 = vmatpush1.bf16.msra.mxu0 0
      %1924 = vmatprep.subr.bf16.mxu0 0
      %1925 = vmatpush1.bf16.msra.mxu0 0
      %1926 = vmatprep.mubr.bf16.mxu0 0
      %1927 = vmatmul.mubr.bf16.gmra.mrb[0].mxu0 %v1889
      %v1928 = vpop.f32.mrb[0].mxu0
      %v1929 = vadd.f32 0.0, %v1928
      %v1930 = vpop.f32.mrb[0].mxu0
      %v1931 = vpop.f32.mrb[0].mxu0
      %v1932 = vpop.f32.mrb[0].mxu0
      %1933 = vdwg.mxu0
      %v1935 = vsel %vm1748, %v1736, 0
      %v1938 = vsel %vm1752, %v740, 0
      %1940 = vmatprep.subr.bf16.mxu0 0
      %1941 = vmatpush1.bf16.msra.mxu0 %v1938
      %1942 = vmatprep.subr.bf16.mxu0 0
      %1943 = vmatpush1.bf16.msra.mxu0 0
      %1944 = vmatprep.subr.bf16.mxu0 0
      %1945 = vmatpush1.bf16.msra.mxu0 0
      %1946 = vmatprep.subr.bf16.mxu0 0
      %1947 = vmatpush1.bf16.msra.mxu0 0
      %1948 = vmatprep.subr.bf16.mxu0 0
      %1949 = vmatpush1.bf16.msra.mxu0 0
      %1950 = vmatprep.subr.bf16.mxu0 0
      %1951 = vmatpush1.bf16.msra.mxu0 0
      %1952 = vmatprep.subr.bf16.mxu0 0
      %1953 = vmatpush1.bf16.msra.mxu0 0
      %1954 = vmatprep.subr.bf16.mxu0 0
      %1955 = vmatpush1.bf16.msra.mxu0 0
      %1956 = vmatprep.subr.bf16.mxu0 0
      %1957 = vmatpush1.bf16.msra.mxu0 0
      %1958 = vmatprep.subr.bf16.mxu0 0
      %1959 = vmatpush1.bf16.msra.mxu0 0
      %1960 = vmatprep.subr.bf16.mxu0 0
      %1961 = vmatpush1.bf16.msra.mxu0 0
      %1962 = vmatprep.subr.bf16.mxu0 0
      %1963 = vmatpush1.bf16.msra.mxu0 0
      %1964 = vmatprep.subr.bf16.mxu0 0
      %1965 = vmatpush1.bf16.msra.mxu0 0
      %1966 = vmatprep.subr.bf16.mxu0 0
      %1967 = vmatpush1.bf16.msra.mxu0 0
      %1968 = vmatprep.subr.bf16.mxu0 0
      %1969 = vmatpush1.bf16.msra.mxu0 0
      %1970 = vmatprep.subr.bf16.mxu0 0
      %1971 = vmatpush1.bf16.msra.mxu0 0
      %1972 = vmatprep.mubr.bf16.mxu0 0
      %1973 = vmatmul.mubr.bf16.gmra.mrb[0].mxu0 %v1935
      %v1974 = vpop.f32.mrb[0].mxu0
      %v1975 = vadd.f32 0.0, %v1974
      %v1976 = vpop.f32.mrb[0].mxu0
      %v1977 = vpop.f32.mrb[0].mxu0
      %v1978 = vpop.f32.mrb[0].mxu0
      %1979 = vdwg.mxu0
      %v1981 = vsel %vm1748, %v1737, 0
      %v1984 = vsel %vm1752, %v741, 0
      %1986 = vmatprep.subr.bf16.mxu0 0
      %1987 = vmatpush1.bf16.msra.mxu0 %v1984
      %1988 = vmatprep.subr.bf16.mxu0 0
      %1989 = vmatpush1.bf16.msra.mxu0 0
      %1990 = vmatprep.subr.bf16.mxu0 0
      %1991 = vmatpush1.bf16.msra.mxu0 0
      %1992 = vmatprep.subr.bf16.mxu0 0
      %1993 = vmatpush1.bf16.msra.mxu0 0
      %1994 = vmatprep.subr.bf16.mxu0 0
      %1995 = vmatpush1.bf16.msra.mxu0 0
      %1996 = vmatprep.subr.bf16.mxu0 0
      %1997 = vmatpush1.bf16.msra.mxu0 0
      %1998 = vmatprep.subr.bf16.mxu0 0
      %1999 = vmatpush1.bf16.msra.mxu0 0
      %2000 = vmatprep.subr.bf16.mxu0 0
      %2001 = vmatpush1.bf16.msra.mxu0 0
      %2002 = vmatprep.subr.bf16.mxu0 0
      %2003 = vmatpush1.bf16.msra.mxu0 0
      %2004 = vmatprep.subr.bf16.mxu0 0
      %2005 = vmatpush1.bf16.msra.mxu0 0
      %2006 = vmatprep.subr.bf16.mxu0 0
      %2007 = vmatpush1.bf16.msra.mxu0 0
      %2008 = vmatprep.subr.bf16.mxu0 0
      %2009 = vmatpush1.bf16.msra.mxu0 0
      %2010 = vmatprep.subr.bf16.mxu0 0
      %2011 = vmatpush1.bf16.msra.mxu0 0
      %2012 = vmatprep.subr.bf16.mxu0 0
      %2013 = vmatpush1.bf16.msra.mxu0 0
      %2014 = vmatprep.subr.bf16.mxu0 0
      %2015 = vmatpush1.bf16.msra.mxu0 0
      %2016 = vmatprep.subr.bf16.mxu0 0
      %2017 = vmatpush1.bf16.msra.mxu0 0
      %2018 = vmatprep.mubr.bf16.mxu0 0
      %2019 = vmatmul.mubr.bf16.gmra.mrb[0].mxu0 %v1981
      %v2020 = vpop.f32.mrb[0].mxu0
      %v2021 = vadd.f32 0.0, %v2020
      %v2022 = vpop.f32.mrb[0].mxu0
      %v2023 = vpop.f32.mrb[0].mxu0
      %v2024 = vpop.f32.mrb[0].mxu0
      %2025 = vdwg.mxu0
      %v2027 = vsel %vm1748, %v1738, 0
      %v2030 = vsel %vm1752, %v742, 0
      %2032 = vmatprep.subr.bf16.mxu0 0
      %2033 = vmatpush1.bf16.msra.mxu0 %v2030
      %2034 = vmatprep.subr.bf16.mxu0 0
      %2035 = vmatpush1.bf16.msra.mxu0 0
      %2036 = vmatprep.subr.bf16.mxu0 0
      %2037 = vmatpush1.bf16.msra.mxu0 0
      %2038 = vmatprep.subr.bf16.mxu0 0
      %2039 = vmatpush1.bf16.msra.mxu0 0
      %2040 = vmatprep.subr.bf16.mxu0 0
      %2041 = vmatpush1.bf16.msra.mxu0 0
      %2042 = vmatprep.subr.bf16.mxu0 0
      %2043 = vmatpush1.bf16.msra.mxu0 0
      %2044 = vmatprep.subr.bf16.mxu0 0
      %2045 = vmatpush1.bf16.msra.mxu0 0
      %2046 = vmatprep.subr.bf16.mxu0 0
      %2047 = vmatpush1.bf16.msra.mxu0 0
      %2048 = vmatprep.subr.bf16.mxu0 0
      %2049 = vmatpush1.bf16.msra.mxu0 0
      %2050 = vmatprep.subr.bf16.mxu0 0
      %2051 = vmatpush1.bf16.msra.mxu0 0
      %2052 = vmatprep.subr.bf16.mxu0 0
      %2053 = vmatpush1.bf16.msra.mxu0 0
      %2054 = vmatprep.subr.bf16.mxu0 0
      %2055 = vmatpush1.bf16.msra.mxu0 0
      %2056 = vmatprep.subr.bf16.mxu0 0
      %2057 = vmatpush1.bf16.msra.mxu0 0
      %2058 = vmatprep.subr.bf16.mxu0 0
      %2059 = vmatpush1.bf16.msra.mxu0 0
      %2060 = vmatprep.subr.bf16.mxu0 0
      %2061 = vmatpush1.bf16.msra.mxu0 0
      %2062 = vmatprep.subr.bf16.mxu0 0
      %2063 = vmatpush1.bf16.msra.mxu0 0
      %2064 = vmatprep.mubr.bf16.mxu0 0
      %2065 = vmatmul.mubr.bf16.gmra.mrb[0].mxu0 %v2027
      %v2066 = vpop.f32.mrb[0].mxu0
      %v2067 = vadd.f32 0.0, %v2066
      %v2068 = vpop.f32.mrb[0].mxu0
      %v2069 = vpop.f32.mrb[0].mxu0
      %v2070 = vpop.f32.mrb[0].mxu0
      %2071 = vdwg.mxu0
      %v2073 = vsel %vm1748, %v1739, 0
      %v2076 = vsel %vm1752, %v743, 0
      %2078 = vmatprep.subr.bf16.mxu0 0
      %2079 = vmatpush1.bf16.msra.mxu0 %v2076
      %2080 = vmatprep.subr.bf16.mxu0 0
      %2081 = vmatpush1.bf16.msra.mxu0 0
      %2082 = vmatprep.subr.bf16.mxu0 0
      %2083 = vmatpush1.bf16.msra.mxu0 0
      %2084 = vmatprep.subr.bf16.mxu0 0
      %2085 = vmatpush1.bf16.msra.mxu0 0
      %2086 = vmatprep.subr.bf16.mxu0 0
      %2087 = vmatpush1.bf16.msra.mxu0 0
      %2088 = vmatprep.subr.bf16.mxu0 0
      %2089 = vmatpush1.bf16.msra.mxu0 0
      %2090 = vmatprep.subr.bf16.mxu0 0
      %2091 = vmatpush1.bf16.msra.mxu0 0
      %2092 = vmatprep.subr.bf16.mxu0 0
      %2093 = vmatpush1.bf16.msra.mxu0 0
      %2094 = vmatprep.subr.bf16.mxu0 0
      %2095 = vmatpush1.bf16.msra.mxu0 0
      %2096 = vmatprep.subr.bf16.mxu0 0
      %2097 = vmatpush1.bf16.msra.mxu0 0
      %2098 = vmatprep.subr.bf16.mxu0 0
      %2099 = vmatpush1.bf16.msra.mxu0 0
      %2100 = vmatprep.subr.bf16.mxu0 0
      %2101 = vmatpush1.bf16.msra.mxu0 0
      %2102 = vmatprep.subr.bf16.mxu0 0
      %2103 = vmatpush1.bf16.msra.mxu0 0
      %2104 = vmatprep.subr.bf16.mxu0 0
      %2105 = vmatpush1.bf16.msra.mxu0 0
      %2106 = vmatprep.subr.bf16.mxu0 0
      %2107 = vmatpush1.bf16.msra.mxu0 0
      %2108 = vmatprep.subr.bf16.mxu0 0
      %2109 = vmatpush1.bf16.msra.mxu0 0
      %2110 = vmatprep.mubr.bf16.mxu0 0
      %2111 = vmatmul.mubr.bf16.gmra.mrb[0].mxu0 %v2073
      %v2112 = vpop.f32.mrb[0].mxu0
      %v2113 = vadd.f32 0.0, %v2112
      %v2114 = vpop.f32.mrb[0].mxu0
      %v2115 = vpop.f32.mrb[0].mxu0
      %v2116 = vpop.f32.mrb[0].mxu0
      %2117 = vdwg.mxu0
      %v2119 = vsel %vm1748, %v1740, 0
      %v2122 = vsel %vm1752, %v744, 0
      %2124 = vmatprep.subr.bf16.mxu0 0
      %2125 = vmatpush1.bf16.msra.mxu0 %v2122
      %2126 = vmatprep.subr.bf16.mxu0 0
      %2127 = vmatpush1.bf16.msra.mxu0 0
      %2128 = vmatprep.subr.bf16.mxu0 0
      %2129 = vmatpush1.bf16.msra.mxu0 0
      %2130 = vmatprep.subr.bf16.mxu0 0
      %2131 = vmatpush1.bf16.msra.mxu0 0
      %2132 = vmatprep.subr.bf16.mxu0 0
      %2133 = vmatpush1.bf16.msra.mxu0 0
      %2134 = vmatprep.subr.bf16.mxu0 0
      %2135 = vmatpush1.bf16.msra.mxu0 0
      %2136 = vmatprep.subr.bf16.mxu0 0
      %2137 = vmatpush1.bf16.msra.mxu0 0
      %2138 = vmatprep.subr.bf16.mxu0 0
      %2139 = vmatpush1.bf16.msra.mxu0 0
      %2140 = vmatprep.subr.bf16.mxu0 0
      %2141 = vmatpush1.bf16.msra.mxu0 0
      %2142 = vmatprep.subr.bf16.mxu0 0
      %2143 = vmatpush1.bf16.msra.mxu0 0
      %2144 = vmatprep.subr.bf16.mxu0 0
      %2145 = vmatpush1.bf16.msra.mxu0 0
      %2146 = vmatprep.subr.bf16.mxu0 0
      %2147 = vmatpush1.bf16.msra.mxu0 0
      %2148 = vmatprep.subr.bf16.mxu0 0
      %2149 = vmatpush1.bf16.msra.mxu0 0
      %2150 = vmatprep.subr.bf16.mxu0 0
      %2151 = vmatpush1.bf16.msra.mxu0 0
      %2152 = vmatprep.subr.bf16.mxu0 0
      %2153 = vmatpush1.bf16.msra.mxu0 0
      %2154 = vmatprep.subr.bf16.mxu0 0
      %2155 = vmatpush1.bf16.msra.mxu0 0
      %2156 = vmatprep.mubr.bf16.mxu0 0
      %2157 = vmatmul.mubr.bf16.gmra.mrb[0].mxu0 %v2119
      %v2158 = vpop.f32.mrb[0].mxu0
      %v2159 = vadd.f32 0.0, %v2158
      %v2160 = vpop.f32.mrb[0].mxu0
      %v2161 = vpop.f32.mrb[0].mxu0
      %v2162 = vpop.f32.mrb[0].mxu0
      %2163 = vdwg.mxu0
      %v2165 = vsel %vm1748, %v1741, 0
      %v2168 = vsel %vm1752, %v745, 0
      %2170 = vmatprep.subr.bf16.mxu0 0
      %2171 = vmatpush1.bf16.msra.mxu0 %v2168
      %2172 = vmatprep.subr.bf16.mxu0 0
      %2173 = vmatpush1.bf16.msra.mxu0 0
      %2174 = vmatprep.subr.bf16.mxu0 0
      %2175 = vmatpush1.bf16.msra.mxu0 0
      %2176 = vmatprep.subr.bf16.mxu0 0
      %2177 = vmatpush1.bf16.msra.mxu0 0
      %2178 = vmatprep.subr.bf16.mxu0 0
      %2179 = vmatpush1.bf16.msra.mxu0 0
      %2180 = vmatprep.subr.bf16.mxu0 0
      %2181 = vmatpush1.bf16.msra.mxu0 0
      %2182 = vmatprep.subr.bf16.mxu0 0
      %2183 = vmatpush1.bf16.msra.mxu0 0
      %2184 = vmatprep.subr.bf16.mxu0 0
      %2185 = vmatpush1.bf16.msra.mxu0 0
      %2186 = vmatprep.subr.bf16.mxu0 0
      %2187 = vmatpush1.bf16.msra.mxu0 0
      %2188 = vmatprep.subr.bf16.mxu0 0
      %2189 = vmatpush1.bf16.msra.mxu0 0
      %2190 = vmatprep.subr.bf16.mxu0 0
      %2191 = vmatpush1.bf16.msra.mxu0 0
      %2192 = vmatprep.subr.bf16.mxu0 0
      %2193 = vmatpush1.bf16.msra.mxu0 0
      %2194 = vmatprep.subr.bf16.mxu0 0
      %2195 = vmatpush1.bf16.msra.mxu0 0
      %2196 = vmatprep.subr.bf16.mxu0 0
      %2197 = vmatpush1.bf16.msra.mxu0 0
      %2198 = vmatprep.subr.bf16.mxu0 0
      %2199 = vmatpush1.bf16.msra.mxu0 0
      %2200 = vmatprep.subr.bf16.mxu0 0
      %2201 = vmatpush1.bf16.msra.mxu0 0
      %2202 = vmatprep.mubr.bf16.mxu0 0
      %2203 = vmatmul.mubr.bf16.gmra.mrb[0].mxu0 %v2165
      %v2204 = vpop.f32.mrb[0].mxu0
      %v2205 = vadd.f32 0.0, %v2204
      %v2206 = vpop.f32.mrb[0].mxu0
      %v2207 = vpop.f32.mrb[0].mxu0
      %v2208 = vpop.f32.mrb[0].mxu0
      %2209 = vdwg.mxu0
      %v2211 = vsel %vm1748, %v1742, 0
      %v2214 = vsel %vm1752, %v746, 0
      %2216 = vmatprep.subr.bf16.mxu0 0
      %2217 = vmatpush1.bf16.msra.mxu0 %v2214
      %2218 = vmatprep.subr.bf16.mxu0 0
      %2219 = vmatpush1.bf16.msra.mxu0 0
      %2220 = vmatprep.subr.bf16.mxu0 0
      %2221 = vmatpush1.bf16.msra.mxu0 0
      %2222 = vmatprep.subr.bf16.mxu0 0
      %2223 = vmatpush1.bf16.msra.mxu0 0
      %2224 = vmatprep.subr.bf16.mxu0 0
      %2225 = vmatpush1.bf16.msra.mxu0 0
      %2226 = vmatprep.subr.bf16.mxu0 0
      %2227 = vmatpush1.bf16.msra.mxu0 0
      %2228 = vmatprep.subr.bf16.mxu0 0
      %2229 = vmatpush1.bf16.msra.mxu0 0
      %2230 = vmatprep.subr.bf16.mxu0 0
      %2231 = vmatpush1.bf16.msra.mxu0 0
      %2232 = vmatprep.subr.bf16.mxu0 0
      %2233 = vmatpush1.bf16.msra.mxu0 0
      %2234 = vmatprep.subr.bf16.mxu0 0
      %2235 = vmatpush1.bf16.msra.mxu0 0
      %2236 = vmatprep.subr.bf16.mxu0 0
      %2237 = vmatpush1.bf16.msra.mxu0 0
      %2238 = vmatprep.subr.bf16.mxu0 0
      %2239 = vmatpush1.bf16.msra.mxu0 0
      %2240 = vmatprep.subr.bf16.mxu0 0
      %2241 = vmatpush1.bf16.msra.mxu0 0
      %2242 = vmatprep.subr.bf16.mxu0 0
      %2243 = vmatpush1.bf16.msra.mxu0 0
      %2244 = vmatprep.subr.bf16.mxu0 0
      %2245 = vmatpush1.bf16.msra.mxu0 0
      %2246 = vmatprep.subr.bf16.mxu0 0
      %2247 = vmatpush1.bf16.msra.mxu0 0
      %2248 = vmatprep.mubr.bf16.mxu0 0
      %2249 = vmatmul.mubr.bf16.gmra.mrb[0].mxu0 %v2211
      %v2250 = vpop.f32.mrb[0].mxu0
      %v2251 = vadd.f32 0.0, %v2250
      %v2252 = vpop.f32.mrb[0].mxu0
      %v2253 = vpop.f32.mrb[0].mxu0
      %v2254 = vpop.f32.mrb[0].mxu0
      %2255 = vdwg.mxu0
      %v2257 = vsel %vm1748, %v1743, 0
      %v2260 = vsel %vm1752, %v747, 0
      %2262 = vmatprep.subr.bf16.mxu0 0
      %2263 = vmatpush1.bf16.msra.mxu0 %v2260
      %2264 = vmatprep.subr.bf16.mxu0 0
      %2265 = vmatpush1.bf16.msra.mxu0 0
      %2266 = vmatprep.subr.bf16.mxu0 0
      %2267 = vmatpush1.bf16.msra.mxu0 0
      %2268 = vmatprep.subr.bf16.mxu0 0
      %2269 = vmatpush1.bf16.msra.mxu0 0
      %2270 = vmatprep.subr.bf16.mxu0 0
      %2271 = vmatpush1.bf16.msra.mxu0 0
      %2272 = vmatprep.subr.bf16.mxu0 0
      %2273 = vmatpush1.bf16.msra.mxu0 0
      %2274 = vmatprep.subr.bf16.mxu0 0
      %2275 = vmatpush1.bf16.msra.mxu0 0
      %2276 = vmatprep.subr.bf16.mxu0 0
      %2277 = vmatpush1.bf16.msra.mxu0 0
      %2278 = vmatprep.subr.bf16.mxu0 0
      %2279 = vmatpush1.bf16.msra.mxu0 0
      %2280 = vmatprep.subr.bf16.mxu0 0
      %2281 = vmatpush1.bf16.msra.mxu0 0
      %2282 = vmatprep.subr.bf16.mxu0 0
      %2283 = vmatpush1.bf16.msra.mxu0 0
      %2284 = vmatprep.subr.bf16.mxu0 0
      %2285 = vmatpush1.bf16.msra.mxu0 0
      %2286 = vmatprep.subr.bf16.mxu0 0
      %2287 = vmatpush1.bf16.msra.mxu0 0
      %2288 = vmatprep.subr.bf16.mxu0 0
      %2289 = vmatpush1.bf16.msra.mxu0 0
      %2290 = vmatprep.subr.bf16.mxu0 0
      %2291 = vmatpush1.bf16.msra.mxu0 0
      %2292 = vmatprep.subr.bf16.mxu0 0
      %2293 = vmatpush1.bf16.msra.mxu0 0
      %2294 = vmatprep.mubr.bf16.mxu0 0
      %2295 = vmatmul.mubr.bf16.gmra.mrb[0].mxu0 %v2257
      %v2296 = vpop.f32.mrb[0].mxu0
      %v2297 = vadd.f32 0.0, %v2296
      %v2298 = vpop.f32.mrb[0].mxu0
      %v2299 = vpop.f32.mrb[0].mxu0
      %v2300 = vpop.f32.mrb[0].mxu0
      %2301 = vdwg.mxu0
      %v2303 = vsel %vm1748, %v1744, 0
      %v2306 = vsel %vm1752, %v748, 0
      %2308 = vmatprep.subr.bf16.mxu0 0
      %2309 = vmatpush1.bf16.msra.mxu0 %v2306
      %2310 = vmatprep.subr.bf16.mxu0 0
      %2311 = vmatpush1.bf16.msra.mxu0 0
      %2312 = vmatprep.subr.bf16.mxu0 0
      %2313 = vmatpush1.bf16.msra.mxu0 0
      %2314 = vmatprep.subr.bf16.mxu0 0
      %2315 = vmatpush1.bf16.msra.mxu0 0
      %2316 = vmatprep.subr.bf16.mxu0 0
      %2317 = vmatpush1.bf16.msra.mxu0 0
      %2318 = vmatprep.subr.bf16.mxu0 0
      %2319 = vmatpush1.bf16.msra.mxu0 0
      %2320 = vmatprep.subr.bf16.mxu0 0
      %2321 = vmatpush1.bf16.msra.mxu0 0
      %2322 = vmatprep.subr.bf16.mxu0 0
      %2323 = vmatpush1.bf16.msra.mxu0 0
      %2324 = vmatprep.subr.bf16.mxu0 0
      %2325 = vmatpush1.bf16.msra.mxu0 0
      %2326 = vmatprep.subr.bf16.mxu0 0
      %2327 = vmatpush1.bf16.msra.mxu0 0
      %2328 = vmatprep.subr.bf16.mxu0 0
      %2329 = vmatpush1.bf16.msra.mxu0 0
      %2330 = vmatprep.subr.bf16.mxu0 0
      %2331 = vmatpush1.bf16.msra.mxu0 0
      %2332 = vmatprep.subr.bf16.mxu0 0
      %2333 = vmatpush1.bf16.msra.mxu0 0
      %2334 = vmatprep.subr.bf16.mxu0 0
      %2335 = vmatpush1.bf16.msra.mxu0 0
      %2336 = vmatprep.subr.bf16.mxu0 0
      %2337 = vmatpush1.bf16.msra.mxu0 0
      %2338 = vmatprep.subr.bf16.mxu0 0
      %2339 = vmatpush1.bf16.msra.mxu0 0
      %2340 = vmatprep.mubr.bf16.mxu0 0
      %2341 = vmatmul.mubr.bf16.gmra.mrb[0].mxu0 %v2303
      %v2342 = vpop.f32.mrb[0].mxu0
      %v2343 = vadd.f32 0.0, %v2342
      %v2344 = vpop.f32.mrb[0].mxu0
      %v2345 = vpop.f32.mrb[0].mxu0
      %v2346 = vpop.f32.mrb[0].mxu0
      %2347 = vdwg.mxu0
      %v2349 = vsel %vm1748, %v1745, 0
      %v2352 = vsel %vm1752, %v749, 0
      %2354 = vmatprep.subr.bf16.mxu0 0
      %2355 = vmatpush1.bf16.msra.mxu0 %v2352
      %2356 = vmatprep.subr.bf16.mxu0 0
      %2357 = vmatpush1.bf16.msra.mxu0 0
      %2358 = vmatprep.subr.bf16.mxu0 0
      %2359 = vmatpush1.bf16.msra.mxu0 0
      %2360 = vmatprep.subr.bf16.mxu0 0
      %2361 = vmatpush1.bf16.msra.mxu0 0
      %2362 = vmatprep.subr.bf16.mxu0 0
      %2363 = vmatpush1.bf16.msra.mxu0 0
      %2364 = vmatprep.subr.bf16.mxu0 0
      %2365 = vmatpush1.bf16.msra.mxu0 0
      %2366 = vmatprep.subr.bf16.mxu0 0
      %2367 = vmatpush1.bf16.msra.mxu0 0
      %2368 = vmatprep.subr.bf16.mxu0 0
      %2369 = vmatpush1.bf16.msra.mxu0 0
      %2370 = vmatprep.subr.bf16.mxu0 0
      %2371 = vmatpush1.bf16.msra.mxu0 0
      %2372 = vmatprep.subr.bf16.mxu0 0
      %2373 = vmatpush1.bf16.msra.mxu0 0
      %2374 = vmatprep.subr.bf16.mxu0 0
      %2375 = vmatpush1.bf16.msra.mxu0 0
      %2376 = vmatprep.subr.bf16.mxu0 0
      %2377 = vmatpush1.bf16.msra.mxu0 0
      %2378 = vmatprep.subr.bf16.mxu0 0
      %2379 = vmatpush1.bf16.msra.mxu0 0
      %2380 = vmatprep.subr.bf16.mxu0 0
      %2381 = vmatpush1.bf16.msra.mxu0 0
      %2382 = vmatprep.subr.bf16.mxu0 0
      %2383 = vmatpush1.bf16.msra.mxu0 0
      %2384 = vmatprep.subr.bf16.mxu0 0
      %2385 = vmatpush1.bf16.msra.mxu0 0
      %2386 = vmatprep.mubr.bf16.mxu0 0
      %2387 = vmatmul.mubr.bf16.gmra.mrb[0].mxu0 %v2349
      %v2388 = vpop.f32.mrb[0].mxu0
      %v2389 = vadd.f32 0.0, %v2388
      %v2390 = vpop.f32.mrb[0].mxu0
      %v2391 = vpop.f32.mrb[0].mxu0
      %v2392 = vpop.f32.mrb[0].mxu0
      %2393 = vdwg.mxu0
      %v2395 = vsel %vm1748, %v1746, 0
      %v2398 = vsel %vm1752, %v750, 0
      %2400 = vmatprep.subr.bf16.mxu0 0
      %2401 = vmatpush1.bf16.msra.mxu0 %v2398
      %2402 = vmatprep.subr.bf16.mxu0 0
      %2403 = vmatpush1.bf16.msra.mxu0 0
      %2404 = vmatprep.subr.bf16.mxu0 0
      %2405 = vmatpush1.bf16.msra.mxu0 0
      %2406 = vmatprep.subr.bf16.mxu0 0
      %2407 = vmatpush1.bf16.msra.mxu0 0
      %2408 = vmatprep.subr.bf16.mxu0 0
      %2409 = vmatpush1.bf16.msra.mxu0 0
      %2410 = vmatprep.subr.bf16.mxu0 0
      %2411 = vmatpush1.bf16.msra.mxu0 0
      %2412 = vmatprep.subr.bf16.mxu0 0
      %2413 = vmatpush1.bf16.msra.mxu0 0
      %2414 = vmatprep.subr.bf16.mxu0 0
      %2415 = vmatpush1.bf16.msra.mxu0 0
      %2416 = vmatprep.subr.bf16.mxu0 0
      %2417 = vmatpush1.bf16.msra.mxu0 0
      %2418 = vmatprep.subr.bf16.mxu0 0
      %2419 = vmatpush1.bf16.msra.mxu0 0
      %2420 = vmatprep.subr.bf16.mxu0 0
      %2421 = vmatpush1.bf16.msra.mxu0 0
      %2422 = vmatprep.subr.bf16.mxu0 0
      %2423 = vmatpush1.bf16.msra.mxu0 0
      %2424 = vmatprep.subr.bf16.mxu0 0
      %2425 = vmatpush1.bf16.msra.mxu0 0
      %2426 = vmatprep.subr.bf16.mxu0 0
      %2427 = vmatpush1.bf16.msra.mxu0 0
      %2428 = vmatprep.subr.bf16.mxu0 0
      %2429 = vmatpush1.bf16.msra.mxu0 0
      %2430 = vmatprep.subr.bf16.mxu0 0
      %2431 = vmatpush1.bf16.msra.mxu0 0
      %2432 = vmatprep.mubr.bf16.mxu0 0
      %2433 = vmatmul.mubr.bf16.gmra.mrb[0].mxu0 %v2395
      %v2434 = vpop.f32.mrb[0].mxu0
      %v2435 = vadd.f32 0.0, %v2434
      %v2436 = vpop.f32.mrb[0].mxu0
      %v2437 = vpop.f32.mrb[0].mxu0
      %v2438 = vpop.f32.mrb[0].mxu0
      %2439 = vdwg.mxu0
      %v2441 = vsel %vm1748, %v1747, 0
      %v2444 = vsel %vm1752, %v751, 0
      %2446 = vmatprep.subr.bf16.mxu0 0
      %2447 = vmatpush1.bf16.msra.mxu0 %v2444
      %2448 = vmatprep.subr.bf16.mxu0 0
      %2449 = vmatpush1.bf16.msra.mxu0 0
      %2450 = vmatprep.subr.bf16.mxu0 0
      %2451 = vmatpush1.bf16.msra.mxu0 0
      %2452 = vmatprep.subr.bf16.mxu0 0
      %2453 = vmatpush1.bf16.msra.mxu0 0
      %2454 = vmatprep.subr.bf16.mxu0 0
      %2455 = vmatpush1.bf16.msra.mxu0 0
      %2456 = vmatprep.subr.bf16.mxu0 0
      %2457 = vmatpush1.bf16.msra.mxu0 0
      %2458 = vmatprep.subr.bf16.mxu0 0
      %2459 = vmatpush1.bf16.msra.mxu0 0
      %2460 = vmatprep.subr.bf16.mxu0 0
      %2461 = vmatpush1.bf16.msra.mxu0 0
      %2462 = vmatprep.subr.bf16.mxu0 0
      %2463 = vmatpush1.bf16.msra.mxu0 0
      %2464 = vmatprep.subr.bf16.mxu0 0
      %2465 = vmatpush1.bf16.msra.mxu0 0
      %2466 = vmatprep.subr.bf16.mxu0 0
      %2467 = vmatpush1.bf16.msra.mxu0 0
      %2468 = vmatprep.subr.bf16.mxu0 0
      %2469 = vmatpush1.bf16.msra.mxu0 0
      %2470 = vmatprep.subr.bf16.mxu0 0
      %2471 = vmatpush1.bf16.msra.mxu0 0
      %2472 = vmatprep.subr.bf16.mxu0 0
      %2473 = vmatpush1.bf16.msra.mxu0 0
      %2474 = vmatprep.subr.bf16.mxu0 0
      %2475 = vmatpush1.bf16.msra.mxu0 0
      %2476 = vmatprep.subr.bf16.mxu0 0
      %2477 = vmatpush1.bf16.msra.mxu0 0
      %2478 = vmatprep.mubr.bf16.mxu0 0
      %2479 = vmatmul.mubr.bf16.gmra.mrb[0].mxu0 %v2441
      %v2480 = vpop.f32.mrb[0].mxu0
      %v2481 = vadd.f32 0.0, %v2480
      %v2482 = vpop.f32.mrb[0].mxu0
      %v2483 = vpop.f32.mrb[0].mxu0
      %v2484 = vpop.f32.mrb[0].mxu0
      %2485 = vdwg.mxu0
      %v2486 = vld [vmem:[#allocation12] sm:$0xf]
      %v2487 = vld [vmem:[#allocation12 + $0x4] sm:$0xf]
      %v2488 = vld [vmem:[#allocation12 + $0x8] sm:$0xf]
      %v2489 = vld [vmem:[#allocation12 + $0xc] sm:$0xf]
      %v2490 = vld [vmem:[#allocation12 + $0x10] sm:$0xf]
      %v2491 = vld [vmem:[#allocation12 + $0x14] sm:$0xf]
      %v2492 = vld [vmem:[#allocation12 + $0x18] sm:$0xf]
      %v2493 = vld [vmem:[#allocation12 + $0x1c] sm:$0xf]
      %v2494 = vld [vmem:[#allocation12 + $0x20] sm:$0xf]
      %v2495 = vld [vmem:[#allocation12 + $0x24] sm:$0xf]
      %v2496 = vld [vmem:[#allocation12 + $0x28] sm:$0xf]
      %v2497 = vld [vmem:[#allocation12 + $0x2c] sm:$0xf]
      %v2498 = vld [vmem:[#allocation12 + $0x30] sm:$0xf]
      %v2499 = vld [vmem:[#allocation12 + $0x34] sm:$0xf]
      %v2500 = vld [vmem:[#allocation12 + $0x38] sm:$0xf]
      %v2501 = vld [vmem:[#allocation12 + $0x3c] sm:$0xf]
      %v2502 = vpack.c.bf16 %v1791, %v1791
      %v2503 = vpack.c.bf16 %v1837, %v1837
      %v2504 = vpack.c.bf16 %v1883, %v1883
      %v2505 = vpack.c.bf16 %v1929, %v1929
      %v2506 = vpack.c.bf16 %v1975, %v1975
      %v2507 = vpack.c.bf16 %v2021, %v2021
      %v2508 = vpack.c.bf16 %v2067, %v2067
      %v2509 = vpack.c.bf16 %v2113, %v2113
      %v2510 = vpack.c.bf16 %v2159, %v2159
      %v2511 = vpack.c.bf16 %v2205, %v2205
      %v2512 = vpack.c.bf16 %v2251, %v2251
      %v2513 = vpack.c.bf16 %v2297, %v2297
      %v2514 = vpack.c.bf16 %v2343, %v2343
      %v2515 = vpack.c.bf16 %v2389, %v2389
      %v2516 = vpack.c.bf16 %v2435, %v2435
      %v2517 = vpack.c.bf16 %v2481, %v2481
      %v2518 = vld [vmem:[#allocation14] sm:$0xf]
      %v2519 = vld [vmem:[#allocation14 + $0x4] sm:$0xf]
      %v2520 = vld [vmem:[#allocation14 + $0x8] sm:$0xf]
      %v2521 = vld [vmem:[#allocation14 + $0xc] sm:$0xf]
      %v2522 = vld [vmem:[#allocation14 + $0x10] sm:$0xf]
      %v2523 = vld [vmem:[#allocation14 + $0x14] sm:$0xf]
      %v2524 = vld [vmem:[#allocation14 + $0x18] sm:$0xf]
      %v2525 = vld [vmem:[#allocation14 + $0x1c] sm:$0xf]
      %v2526 = vld [vmem:[#allocation14 + $0x20] sm:$0xf]
      %v2527 = vld [vmem:[#allocation14 + $0x24] sm:$0xf]
      %v2528 = vld [vmem:[#allocation14 + $0x28] sm:$0xf]
      %v2529 = vld [vmem:[#allocation14 + $0x2c] sm:$0xf]
      %v2530 = vld [vmem:[#allocation14 + $0x30] sm:$0xf]
      %v2531 = vld [vmem:[#allocation14 + $0x34] sm:$0xf]
      %v2532 = vld [vmem:[#allocation14 + $0x38] sm:$0xf]
      %v2533 = vld [vmem:[#allocation14 + $0x3c] sm:$0xf]
      %v2550 = vunpack.c.l.b16 %v2502
      %v2551 = vunpack.c.l.b16 %v2503
      %v2552 = vunpack.c.l.b16 %v2504
      %v2553 = vunpack.c.l.b16 %v2505
      %v2554 = vunpack.c.l.b16 %v2506
      %v2555 = vunpack.c.l.b16 %v2507
      %v2556 = vunpack.c.l.b16 %v2508
      %v2557 = vunpack.c.l.b16 %v2509
      %v2558 = vunpack.c.l.b16 %v2510
      %v2559 = vunpack.c.l.b16 %v2511
      %v2560 = vunpack.c.l.b16 %v2512
      %v2561 = vunpack.c.l.b16 %v2513
      %v2562 = vunpack.c.l.b16 %v2514
      %v2563 = vunpack.c.l.b16 %v2515
      %v2564 = vunpack.c.l.b16 %v2516
      %v2565 = vunpack.c.l.b16 %v2517
      %v2566 = vrot.slane %v2551, 7
      %vm2567 = vcmask 1041409
      %v2568 = vsel %vm2567, %v2566, %v2550
      %v2569 = vrot.slane %v2552, 6
      %vm2570 = vcmask 1042434
      %v2571 = vsel %vm2570, %v2569, %v2568
      %v2572 = vrot.slane %v2553, 5
      %vm2573 = vcmask 1043459
      %v2574 = vsel %vm2573, %v2572, %v2571
      %v2575 = vrot.slane %v2554, 4
      %vm2576 = vcmask 1044484
      %v2577 = vsel %vm2576, %v2575, %v2574
      %v2578 = vrot.slane %v2555, 3
      %vm2579 = vcmask 1045509
      %v2580 = vsel %vm2579, %v2578, %v2577
      %v2581 = vrot.slane %v2556, 2
      %vm2582 = vcmask 1046534
      %v2583 = vsel %vm2582, %v2581, %v2580
      %v2584 = vrot.slane %v2557, 1
      %vm2585 = vcmask 1047559
      %v2586 = vsel %vm2585, %v2584, %v2583
      %v2587 = vrot.slane %v2559, 7
      %v2588 = vsel %vm2567, %v2587, %v2558
      %v2589 = vrot.slane %v2560, 6
      %v2590 = vsel %vm2570, %v2589, %v2588
      %v2591 = vrot.slane %v2561, 5
      %v2592 = vsel %vm2573, %v2591, %v2590
      %v2593 = vrot.slane %v2562, 4
      %v2594 = vsel %vm2576, %v2593, %v2592
      %v2595 = vrot.slane %v2563, 3
      %v2596 = vsel %vm2579, %v2595, %v2594
      %v2597 = vrot.slane %v2564, 2
      %v2598 = vsel %vm2582, %v2597, %v2596
      %v2599 = vrot.slane %v2565, 1
      %v2600 = vsel %vm2585, %v2599, %v2598
      %v2601 = vpack.c.b16 %v2600, %v2586
      %v2619 = vunpack.c.l.b16 %v2518
      %v2620 = vunpack.c.l.b16 %v2519
      %v2621 = vunpack.c.l.b16 %v2520
      %v2622 = vunpack.c.l.b16 %v2521
      %v2623 = vunpack.c.l.b16 %v2522
      %v2624 = vunpack.c.l.b16 %v2523
      %v2625 = vunpack.c.l.b16 %v2524
      %v2626 = vunpack.c.l.b16 %v2525
      %v2627 = vunpack.c.l.b16 %v2526
      %v2628 = vunpack.c.l.b16 %v2527
      %v2629 = vunpack.c.l.b16 %v2528
      %v2630 = vunpack.c.l.b16 %v2529
      %v2631 = vunpack.c.l.b16 %v2530
      %v2632 = vunpack.c.l.b16 %v2531
      %v2633 = vunpack.c.l.b16 %v2532
      %v2634 = vunpack.c.l.b16 %v2533
      %v2635 = vpack.c.b16 %v2620, %v2619
      %v2636 = vpack.c.b16 %v2622, %v2621
      %v2637 = vpack.c.b16 %v2624, %v2623
      %v2638 = vpack.c.b16 %v2626, %v2625
      %v2639 = vpack.c.b16 %v2628, %v2627
      %v2640 = vpack.c.b16 %v2630, %v2629
      %v2641 = vpack.c.b16 %v2632, %v2631
      %v2642 = vpack.c.b16 %v2634, %v2633
      %2651 = vmatprep.subr.bf16.mxu0 0
      %2652 = vmatpush1.bf16.msra.mxu0 %v2635
      %2653 = vmatprep.subr.bf16.mxu0 0
      %2654 = vmatpush1.bf16.msra.mxu0 %v2636
      %2655 = vmatprep.subr.bf16.mxu0 0
      %2656 = vmatpush1.bf16.msra.mxu0 %v2637
      %2657 = vmatprep.subr.bf16.mxu0 0
      %2658 = vmatpush1.bf16.msra.mxu0 %v2638
      %2659 = vmatprep.subr.bf16.mxu0 0
      %2660 = vmatpush1.bf16.msra.mxu0 %v2639
      %2661 = vmatprep.subr.bf16.mxu0 0
      %2662 = vmatpush1.bf16.msra.mxu0 %v2640
      %2663 = vmatprep.subr.bf16.mxu0 0
      %2664 = vmatpush1.bf16.msra.mxu0 %v2641
      %2665 = vmatprep.subr.bf16.mxu0 0
      %2666 = vmatpush1.bf16.msra.mxu0 %v2642
      %2667 = vmatprep.subr.bf16.mxu0 0
      %2668 = vmatpush1.bf16.msra.mxu0 0
      %2669 = vmatprep.subr.bf16.mxu0 0
      %2670 = vmatpush1.bf16.msra.mxu0 0
      %2671 = vmatprep.subr.bf16.mxu0 0
      %2672 = vmatpush1.bf16.msra.mxu0 0
      %2673 = vmatprep.subr.bf16.mxu0 0
      %2674 = vmatpush1.bf16.msra.mxu0 0
      %2675 = vmatprep.subr.bf16.mxu0 0
      %2676 = vmatpush1.bf16.msra.mxu0 0
      %2677 = vmatprep.subr.bf16.mxu0 0
      %2678 = vmatpush1.bf16.msra.mxu0 0
      %2679 = vmatprep.subr.bf16.mxu0 0
      %2680 = vmatpush1.bf16.msra.mxu0 0
      %2681 = vmatprep.subr.bf16.mxu0 0
      %2682 = vmatpush1.bf16.msra.mxu0 0
      %2683 = vmatprep.mubr.bf16.mxu0 0
      %2684 = vmatmul.mubr.bf16.gmra.mrb[0].mxu0 %v2601
      %v2685 = vpop.f32.mrb[0].mxu0
      %v2686 = vadd.f32 0.0, %v2685
      %v2687 = vpop.f32.mrb[0].mxu0
      %v2688 = vpop.f32.mrb[0].mxu0
      %v2689 = vadd.f32 0.0, %v2688
      %v2690 = vpop.f32.mrb[0].mxu0
      %2691 = vdwg.mxu0
      %v2708 = vunpack.c.l.b16 %v2486
      %v2709 = vunpack.c.l.b16 %v2487
      %v2710 = vunpack.c.l.b16 %v2488
      %v2711 = vunpack.c.l.b16 %v2489
      %v2712 = vunpack.c.l.b16 %v2490
      %v2713 = vunpack.c.l.b16 %v2491
      %v2714 = vunpack.c.l.b16 %v2492
      %v2715 = vunpack.c.l.b16 %v2493
      %v2716 = vunpack.c.l.b16 %v2494
      %v2717 = vunpack.c.l.b16 %v2495
      %v2718 = vunpack.c.l.b16 %v2496
      %v2719 = vunpack.c.l.b16 %v2497
      %v2720 = vunpack.c.l.b16 %v2498
      %v2721 = vunpack.c.l.b16 %v2499
      %v2722 = vunpack.c.l.b16 %v2500
      %v2723 = vunpack.c.l.b16 %v2501
      %v2724 = vpack.c.b16 %v2709, %v2708
      %v2725 = vpack.c.b16 %v2711, %v2710
      %v2726 = vpack.c.b16 %v2713, %v2712
      %v2727 = vpack.c.b16 %v2715, %v2714
      %v2728 = vpack.c.b16 %v2717, %v2716
      %v2729 = vpack.c.b16 %v2719, %v2718
      %v2730 = vpack.c.b16 %v2721, %v2720
      %v2731 = vpack.c.b16 %v2723, %v2722
      %2740 = vmatprep.subr.bf16.mxu0 0
      %2741 = vmatpush1.bf16.msra.mxu0 %v2724
      %2742 = vmatprep.subr.bf16.mxu0 0
      %2743 = vmatpush1.bf16.msra.mxu0 %v2725
      %2744 = vmatprep.subr.bf16.mxu0 0
      %2745 = vmatpush1.bf16.msra.mxu0 %v2726
      %2746 = vmatprep.subr.bf16.mxu0 0
      %2747 = vmatpush1.bf16.msra.mxu0 %v2727
      %2748 = vmatprep.subr.bf16.mxu0 0
      %2749 = vmatpush1.bf16.msra.mxu0 %v2728
      %2750 = vmatprep.subr.bf16.mxu0 0
      %2751 = vmatpush1.bf16.msra.mxu0 %v2729
      %2752 = vmatprep.subr.bf16.mxu0 0
      %2753 = vmatpush1.bf16.msra.mxu0 %v2730
      %2754 = vmatprep.subr.bf16.mxu0 0
      %2755 = vmatpush1.bf16.msra.mxu0 %v2731
      %2756 = vmatprep.subr.bf16.mxu0 0
      %2757 = vmatpush1.bf16.msra.mxu0 0
      %2758 = vmatprep.subr.bf16.mxu0 0
      %2759 = vmatpush1.bf16.msra.mxu0 0
      %2760 = vmatprep.subr.bf16.mxu0 0
      %2761 = vmatpush1.bf16.msra.mxu0 0
      %2762 = vmatprep.subr.bf16.mxu0 0
      %2763 = vmatpush1.bf16.msra.mxu0 0
      %2764 = vmatprep.subr.bf16.mxu0 0
      %2765 = vmatpush1.bf16.msra.mxu0 0
      %2766 = vmatprep.subr.bf16.mxu0 0
      %2767 = vmatpush1.bf16.msra.mxu0 0
      %2768 = vmatprep.subr.bf16.mxu0 0
      %2769 = vmatpush1.bf16.msra.mxu0 0
      %2770 = vmatprep.subr.bf16.mxu0 0
      %2771 = vmatpush1.bf16.msra.mxu0 0
      %2772 = vmatprep.mubr.bf16.mxu0 0
      %2773 = vmatmul.mubr.bf16.gmra.mrb[0].mxu0 %v752
      %v2774 = vpop.f32.mrb[0].mxu0
      %v2775 = vadd.f32 %v2686, %v2774
      %v2776 = vpop.f32.mrb[0].mxu0
      %v2777 = vpop.f32.mrb[0].mxu0
      %v2778 = vadd.f32 %v2689, %v2777
      %v2779 = vpop.f32.mrb[0].mxu0
      %2780 = vdwg.mxu0
      %v2781 = vld [vmem:[%s9] sm:$0x1]
      %v2783 = vlaneseq
      %v2784 = vshrl.u32 %v2783, 7
      %v2785 = vsub.s32 0, %v2784
      %v2786 = vrot.slane %v2781, %v2785
      %v2788 = vadd.f32 %v2775, %v2786
      %v2789 = vadd.f32 %v2778, %v2786
      %v2790 = vtanh.pop %v2788
      %v2791 = vtanh.pop %v2789
      %v2792 = vpack.c.bf16 %v2791, %v2790
      %2793 = vst [vmem:[#allocation2] sm:$0xff] %v2792
    $region85: #{tpu_custom_call.1} parent=1 // pred_fallthru
      _
    %v2794 = vld [vmem:[#allocation2] sm:$0xff]
    %v2795 = vld [vmem:[#allocation15] sm:$0xf]
    %v2796 = vld [vmem:[#allocation15 + $0x4] sm:$0xf]
    %v2797 = vld [vmem:[#allocation15 + $0x8] sm:$0xf]
    %v2798 = vld [vmem:[#allocation15 + $0xc] sm:$0xf]
    %v2799 = vld [vmem:[#allocation15 + $0x10] sm:$0xf]
    %v2800 = vld [vmem:[#allocation15 + $0x14] sm:$0xf]
    %v2801 = vld [vmem:[#allocation15 + $0x18] sm:$0xf]
    %v2802 = vld [vmem:[#allocation15 + $0x1c] sm:$0xf]
    %v2803 = vld [vmem:[#allocation15 + $0x20] sm:$0xf]
    %v2804 = vld [vmem:[#allocation15 + $0x24] sm:$0xf]
    %v2805 = vld [vmem:[#allocation15 + $0x28] sm:$0xf]
    %v2806 = vld [vmem:[#allocation15 + $0x2c] sm:$0xf]
    %v2807 = vld [vmem:[#allocation15 + $0x30] sm:$0xf]
    %v2808 = vld [vmem:[#allocation15 + $0x34] sm:$0xf]
    %v2809 = vld [vmem:[#allocation15 + $0x38] sm:$0xf]
    %v2810 = vld [vmem:[#allocation15 + $0x3c] sm:$0xf]
    %v2811 = vld [vmem:[%s11] sm:$0x1]
    %v2813 = vlaneseq
    %v2814 = vshrl.u32 %v2813, 7
    %v2815 = vsub.s32 0, %v2814
    %v2816 = vrot.slane %v2811, %v2815
    %v2834 = vunpack.c.l.b16 %v2795
    %v2835 = vunpack.c.l.b16 %v2796
    %v2836 = vunpack.c.l.b16 %v2797
    %v2837 = vunpack.c.l.b16 %v2798
    %v2838 = vunpack.c.l.b16 %v2799
    %v2839 = vunpack.c.l.b16 %v2800
    %v2840 = vunpack.c.l.b16 %v2801
    %v2841 = vunpack.c.l.b16 %v2802
    %v2842 = vunpack.c.l.b16 %v2803
    %v2843 = vunpack.c.l.b16 %v2804
    %v2844 = vunpack.c.l.b16 %v2805
    %v2845 = vunpack.c.l.b16 %v2806
    %v2846 = vunpack.c.l.b16 %v2807
    %v2847 = vunpack.c.l.b16 %v2808
    %v2848 = vunpack.c.l.b16 %v2809
    %v2849 = vunpack.c.l.b16 %v2810
    %v2850 = vpack.c.b16 %v2835, %v2834
    %v2851 = vpack.c.b16 %v2837, %v2836
    %v2852 = vpack.c.b16 %v2839, %v2838
    %v2853 = vpack.c.b16 %v2841, %v2840
    %v2854 = vpack.c.b16 %v2843, %v2842
    %v2855 = vpack.c.b16 %v2845, %v2844
    %v2856 = vpack.c.b16 %v2847, %v2846
    %v2857 = vpack.c.b16 %v2849, %v2848
    %2866 = vmatprep.subr.bf16.mxu0 0
    %2867 = vmatpush1.bf16.msra.mxu0 %v2850
    %2868 = vmatprep.subr.bf16.mxu0 0
    %2869 = vmatpush1.bf16.msra.mxu0 %v2851
    %2870 = vmatprep.subr.bf16.mxu0 0
    %2871 = vmatpush1.bf16.msra.mxu0 %v2852
    %2872 = vmatprep.subr.bf16.mxu0 0
    %2873 = vmatpush1.bf16.msra.mxu0 %v2853
    %2874 = vmatprep.subr.bf16.mxu0 0
    %2875 = vmatpush1.bf16.msra.mxu0 %v2854
    %2876 = vmatprep.subr.bf16.mxu0 0
    %2877 = vmatpush1.bf16.msra.mxu0 %v2855
    %2878 = vmatprep.subr.bf16.mxu0 0
    %2879 = vmatpush1.bf16.msra.mxu0 %v2856
    %2880 = vmatprep.subr.bf16.mxu0 0
    %2881 = vmatpush1.bf16.msra.mxu0 %v2857
    %2882 = vmatprep.subr.bf16.mxu0 0
    %2883 = vmatpush1.bf16.msra.mxu0 0
    %2884 = vmatprep.subr.bf16.mxu0 0
    %2885 = vmatpush1.bf16.msra.mxu0 0
    %2886 = vmatprep.subr.bf16.mxu0 0
    %2887 = vmatpush1.bf16.msra.mxu0 0
    %2888 = vmatprep.subr.bf16.mxu0 0
    %2889 = vmatpush1.bf16.msra.mxu0 0
    %2890 = vmatprep.subr.bf16.mxu0 0
    %2891 = vmatpush1.bf16.msra.mxu0 0
    %2892 = vmatprep.subr.bf16.mxu0 0
    %2893 = vmatpush1.bf16.msra.mxu0 0
    %2894 = vmatprep.subr.bf16.mxu0 0
    %2895 = vmatpush1.bf16.msra.mxu0 0
    %2896 = vmatprep.subr.bf16.mxu0 0
    %2897 = vmatpush1.bf16.msra.mxu0 0
    %2898 = vmatprep.mubr.bf16.mxu0 0
    %2899 = vmatmul.mubr.bf16.gmra.mrb[0].mxu0 %v2794
    %v2900 = vpop.f32.mrb[0].mxu0
    %v2901 = vadd.f32 %v2816, %v2900
    %v2902 = vpop.f32.mrb[0].mxu0
    %v2903 = vpop.f32.mrb[0].mxu0
    %v2904 = vadd.f32 %v2816, %v2903
    %v2905 = vpop.f32.mrb[0].mxu0
    %2906 = vdwg.mxu0
    %s2907 = smul.u32 0, 128
    %s2908 = sshra.s32 %s2907, 7
    %s2909 = sand.u32 %s2907, 127
    %s2910 = scalar_lea.vmem [#allocation17], %s2908
    %2911 = vst [vmem:[%s2910] sm:$0xff] %v2901
    %2912 = vst [vmem:[%s2910 + $0x8] sm:$0xff] %v2904
    // Predicated region
    $region86: #{tpu_custom_call.1} parent=1 // pred_check
      %p2913 = pneg %p155
    $region87: #{tpu_custom_call.1} parent=1 // pred_check_branch
      %2915 = sbr.rel (%p2913) target = $region89
    $region88: #{tpu_custom_call.1} parent=1 // pred_region
      %v2916 = vld [vmem:[#allocation17] sm:$0xff]
      %v2917 = vld [vmem:[#allocation17 + $0x8] sm:$0xff]
      %2918 = vmax.xlane.f32.xlu0 %v2916
      %v2919 = vpop.xlane.xlu0 %2918
      %2920 = vmax.xlane.f32.xlu0 %v2917
      %v2921 = vpop.xlane.xlu0 %2920
      %v2922 = vsub.f32 %v2916, %v2919
      %v2923 = vsub.f32 %v2917, %v2921
      %v2924 = vmul.f32 %v2922, 1.442695
      %v2925 = vpow.pop %v2924
      %v2926 = vmul.f32 %v2923, 1.442695
      %v2927 = vpow.pop %v2926
      %2928 = vadd.xlane.f32.xlu0 %v2925
      %v2929 = vpop.xlane.xlu0 %2928
      %2930 = vadd.xlane.f32.xlu0 %v2927
      %v2931 = vpop.xlane.xlu0 %2930
      %v2932 = vrcp.pop %v2929
      %v2933 = vrcp.pop %v2931
      %v2934 = vmul.f32 %v2925, %v2932
      %v2935 = vmul.f32 %v2927, %v2933
      %2936 = vst [vmem:[#allocation17] sm:$0xff] %v2934
      %2937 = vst [vmem:[#allocation17 + $0x8] sm:$0xff] %v2935
    $region89: #{tpu_custom_call.1} parent=1 // pred_fallthru
      _
    // Predicated region
    $region90: #{tpu_custom_call.1} parent=1 // pred_check
      _
    $region91: #{tpu_custom_call.1} parent=1 // pred_check_branch
      %2939 = sbr.rel (0) target = $region93
    $region92: #{tpu_custom_call.1} parent=1 // pred_region
      %s2941 = ssub.s32 256, 256
      %2942 = vsyncadd [#allocation5], %s2941
      %s2943 = sshll.u32 [#allocation17], 4
      %s2944 = int_to_ptr.vmem [resolvable:$true] %s2943
      %2949 = dma.vmem_to_hbm [thread:$0]  %s2944, 256, %s12, [#allocation5], 128, 128, 8
    $region93: #{tpu_custom_call.1} parent=1 // pred_fallthru
      _
    // Predicated region
    $region94: #{tpu_custom_call.1} parent=1 // pred_check
      _
    $region95: #{tpu_custom_call.1} parent=1 // pred_check_branch
      %2951 = sbr.rel (0) target = $region97
    $region96: #{tpu_custom_call.1} parent=1 // pred_region
      %s2953 = ssub.s32 256, 256
      %2954 = vsyncadd [#allocation19], %s2953
      %s2955 = sshll.u32 [#allocation18], 4
      %s2956 = int_to_ptr.vmem [resolvable:$true] %s2955
      %2961 = dma.vmem_to_hbm [thread:$0]  %s2956, 256, %s13, [#allocation19], 128, 128, 8
    $region97: #{tpu_custom_call.1} parent=1 // pred_fallthru
      _
    // Predicated region
    $region98: #{tpu_custom_call.1} parent=1 // pred_check
      _
    $region99: #{tpu_custom_call.1} parent=1 // pred_check_branch
      %2963 = sbr.rel (0) target = $region101
    $region100: #{tpu_custom_call.1} parent=1 // pred_region
      %2964 = dma.done [#allocation5], 256
    $region101: #{tpu_custom_call.1} parent=1 // pred_fallthru
      _
    // Predicated region
    $region102: #{tpu_custom_call.1} parent=1 // pred_check
      _
    $region103: #{tpu_custom_call.1} parent=1 // pred_check_branch
      %2966 = sbr.rel (0) target = $region105
    $region104: #{tpu_custom_call.1} parent=1 // pred_region
      %2967 = dma.done [#allocation19], 256
    $region105: #{tpu_custom_call.1} parent=1 // pred_fallthru
      _
    %2968 = vsyncpa [#allocation4], 1
    %2969 = vsyncpa [#allocation7], 1
    %2970 = vsyncpa [#allocation10], 1
    %2971 = vsyncpa [#allocation13], 1
    %2972 = vsyncpa [#allocation16], 1
    %2973 = vsyncpa [#allocation5], 1
    %2974 = vsyncpa [#allocation19], 1

</llo_original>
